<compile_context>
chip_gen: v5e
topology: v5e:2x2
jax: 0.10.0
libtpu: 0.0.40
codegen_flags: <defaults>
</compile_context>

<pallas_src>
import functools
import math

import jax
import jax.numpy as jnp
from jax.experimental import pallas as pl
from jax.experimental.pallas import tpu as pltpu

_VMEM_LIMIT = 32 * 1024 * 1024  # generous headroom, safe on v5e/v6e/v7x


def _round_up(x, m):
    return ((x + m - 1) // m) * m


def _pad2(x, rows, cols):
    pr, pc = rows - x.shape[0], cols - x.shape[1]
    if pr or pc:
        x = jnp.pad(x, ((0, pr), (0, pc)))
    return x


def _pick_tile(dim, cap=512):
    """Largest tile <= cap that divides dim (dim is padded to a 128/256 multiple)."""
    if dim <= cap:
        return dim
    for t in (512, 256, 128):
        if t <= cap and dim % t == 0:
            return t
    return 128


def _params(dims):
    return pltpu.CompilerParams(dimension_semantics=dims,
                                vmem_limit_bytes=_VMEM_LIMIT)


# --------------------------------------------------------------------------
# Kernel 1: scaled aggregation   out = diag(s_dst) @ A @ [diag(s_src) @] X [+ b]
#   A stored int8 (0/1), upcast to bf16 in VMEM; X is bf16; f32 accumulator.
# --------------------------------------------------------------------------
def _agg_kernel(*args, scale_x, has_bias):
    idx = 0
    a_ref = args[idx]; idx += 1
    x_ref = args[idx]; idx += 1
    s_src_ref = None
    if scale_x:
        s_src_ref = args[idx]; idx += 1
    s_dst_ref = args[idx]; idx += 1
    b_ref = None
    if has_bias:
        b_ref = args[idx]; idx += 1
    o_ref = args[idx]; idx += 1
    acc_ref = args[idx]

    k = pl.program_id(2)

    @pl.when(k == 0)
    def _():
        acc_ref[...] = jnp.zeros_like(acc_ref)

    # int8 (0/1) -> f32 -> bf16 (exact); two-step cast keeps lowering simple.
    a = a_ref[...].astype(jnp.float32).astype(jnp.bfloat16)
    if scale_x:
        # Fold out-degree scaling into the X operand (VPU work is free in the
        # mem-bound A-stream regime).
        x = (x_ref[...] * s_src_ref[...]).astype(jnp.bfloat16)
    else:
        x = x_ref[...]  # already pre-scaled bf16 from the producer kernel
    acc_ref[...] += jnp.dot(a, x, preferred_element_type=jnp.float32)

    @pl.when(k == pl.num_programs(2) - 1)
    def _():
        r = acc_ref[...] * s_dst_ref[...]        # fold in-degree scaling
        if has_bias:
            r = r + b_ref[...]
        o_ref[...] = r.astype(o_ref.dtype)


def scaled_aggregate(adj_i8, x, s_dst, s_src=None, bias=None,
                     out_dtype=jnp.bfloat16):
    n_dst, n_src = adj_i8.shape
    f = x.shape[1]
    tn = _pick_tile(n_dst)
    tf = _pick_tile(f)
    scale_x = s_src is not None
    has_bias = bias is not None

    in_specs = [pl.BlockSpec((tn, tn), lambda i, j, k: (i, k)),   # A tile (int8)
                pl.BlockSpec((tn, tf), lambda i, j, k: (k, j))]   # X tile (bf16)
    args = [adj_i8, x]
    if scale_x:
        in_specs.append(pl.BlockSpec((tn, 1), lambda i, j, k: (k, 0)))
        args.append(s_src)
    in_specs.append(pl.BlockSpec((tn, 1), lambda i, j, k: (i, 0)))
    args.append(s_dst)
    if has_bias:
        in_specs.append(pl.BlockSpec((1, tf), lambda i, j, k: (0, j)))
        args.append(bias)

    return pl.pallas_call(
        functools.partial(_agg_kernel, scale_x=scale_x, has_bias=has_bias),
        out_shape=jax.ShapeDtypeStruct((n_dst, f), out_dtype),
        grid_spec=pltpu.PrefetchScalarGridSpec(
            num_scalar_prefetch=0,
            grid=(n_dst // tn, f // tf, n_src // tn),
            in_specs=in_specs,
            out_specs=pl.BlockSpec((tn, tf), lambda i, j, k: (i, j)),
            scratch_shapes=[pltpu.VMEM((tn, tf), jnp.float32)],
        ),
        compiler_params=_params(("parallel", "parallel", "arbitrary")),
    )(*args)


# --------------------------------------------------------------------------
# Kernel 2: fused projection
#   out = X1 @ W1 [+ X2 @ W2] [+ bias] [+ extra]  [* row_scale]
#   optionally also emits masked per-feature sum / sum-of-squares (BN stats)
#   accumulated across the whole grid in a resident (1, F_out) output.
#   bf16 operands, f32 accumulation; when the K axis fits one tile the
#   accumulator scratch is dropped entirely.
# --------------------------------------------------------------------------
def _proj_kernel(*args, two_lhs, has_bias, has_extra, has_rscale,
                 with_stats, single_k):
    idx = 0
    x1_ref = args[idx]; idx += 1
    w1_ref = args[idx]; idx += 1
    x2_ref = w2_ref = b_ref = e_ref = rs_ref = m_ref = None
    if two_lhs:
        x2_ref = args[idx]; idx += 1
        w2_ref = args[idx]; idx += 1
    if has_bias:
        b_ref = args[idx]; idx += 1
    if has_extra:
        e_ref = args[idx]; idx += 1
    if has_rscale:
        rs_ref = args[idx]; idx += 1
    if with_stats:
        m_ref = args[idx]; idx += 1
    o_ref = args[idx]; idx += 1
    sum_ref = ssq_ref = None
    if with_stats:
        sum_ref = args[idx]; idx += 1
        ssq_ref = args[idx]; idx += 1
    acc_ref = args[idx] if not single_k else None

    i = pl.program_id(0)
    j = pl.program_id(1)
    k = pl.program_id(2)

    if with_stats:
        @pl.when((i == 0) & (j == 0) & (k == 0))
        def _():
            sum_ref[...] = jnp.zeros_like(sum_ref)
            ssq_ref[...] = jnp.zeros_like(ssq_ref)

    part = jnp.dot(x1_ref[...], w1_ref[...], preferred_element_type=jnp.float32)
    if two_lhs:
        part = part + jnp.dot(x2_ref[...], w2_ref[...],
                              preferred_element_type=jnp.float32)

    if not single_k:
        @pl.when(k == 0)
        def _():
            acc_ref[...] = jnp.zeros_like(acc_ref)
        acc_ref[...] += part

    def _finalize(r):
        if has_bias:
            r = r + b_ref[...]
        if has_extra:
            r = r + e_ref[...].astype(jnp.float32)
        if has_rscale:
            r = r * rs_ref[...]
        o_ref[...] = r.astype(o_ref.dtype)
        if with_stats:
            rm = r * m_ref[...]          # mask padded node rows out of the stats
            sum_ref[...] += jnp.sum(rm, axis=0, keepdims=True)
            ssq_ref[...] += jnp.sum(rm * rm, axis=0, keepdims=True)

    if single_k:
        _finalize(part)
    else:
        @pl.when(k == pl.num_programs(2) - 1)
        def _():
            _finalize(acc_ref[...])


def fused_project(x1, w1, x2=None, w2=None, bias=None, extra=None,
                  row_scale=None, row_mask=None, with_stats=False,
                  out_dtype=jnp.float32):
    n, f_in = x1.shape
    f_out = w1.shape[1]
    tm = _pick_tile(n)
    # Stats output is a grid-resident (1, f_out) accumulator; keep the feature
    # axis un-tiled in that case so no dynamic lane slicing is needed.
    tf = f_out if with_stats else _pick_tile(f_out)
    tkf = _pick_tile(f_in)
    single_k = (tkf == f_in)

    two_lhs = x2 is not None
    has_bias = bias is not None
    has_extra = extra is not None
    has_rscale = row_scale is not None

    in_specs = [pl.BlockSpec((tm, tkf), lambda i, j, k: (i, k)),
                pl.BlockSpec((tkf, tf), lambda i, j, k: (k, j))]
    args = [x1, w1]
    if two_lhs:
        in_specs += [pl.BlockSpec((tm, tkf), lambda i, j, k: (i, k)),
                     pl.BlockSpec((tkf, tf), lambda i, j, k: (k, j))]
        args += [x2, w2]
    if has_bias:
        in_specs.append(pl.BlockSpec((1, tf), lambda i, j, k: (0, j)))
        args.append(bias)
    if has_extra:
        in_specs.append(pl.BlockSpec((tm, tf), lambda i, j, k: (i, j)))
        args.append(extra)
    if has_rscale:
        in_specs.append(pl.BlockSpec((tm, 1), lambda i, j, k: (i, 0)))
        args.append(row_scale)
    if with_stats:
        in_specs.append(pl.BlockSpec((tm, 1), lambda i, j, k: (i, 0)))
        args.append(row_mask)

    if with_stats:
        out_shape = (jax.ShapeDtypeStruct((n, f_out), out_dtype),
                     jax.ShapeDtypeStruct((1, f_out), jnp.float32),
                     jax.ShapeDtypeStruct((1, f_out), jnp.float32))
        out_specs = (pl.BlockSpec((tm, tf), lambda i, j, k: (i, j)),
                     pl.BlockSpec((1, f_out), lambda i, j, k: (0, 0)),
                     pl.BlockSpec((1, f_out), lambda i, j, k: (0, 0)))
        # Stats accumulate across the i axis -> keep the grid sequential.
        dims = ("arbitrary", "arbitrary", "arbitrary")
    else:
        out_shape = jax.ShapeDtypeStruct((n, f_out), out_dtype)
        out_specs = pl.BlockSpec((tm, tf), lambda i, j, k: (i, j))
        dims = ("parallel", "parallel", "arbitrary")

    scratch = [] if single_k else [pltpu.VMEM((tm, tf), jnp.float32)]

    return pl.pallas_call(
        functools.partial(_proj_kernel, two_lhs=two_lhs, has_bias=has_bias,
                          has_extra=has_extra, has_rscale=has_rscale,
                          with_stats=with_stats, single_k=single_k),
        out_shape=out_shape,
        grid_spec=pltpu.PrefetchScalarGridSpec(
            num_scalar_prefetch=0,
            grid=(n // tm, f_out // tf, f_in // tkf),
            in_specs=in_specs,
            out_specs=out_specs,
            scratch_shapes=scratch,
        ),
        compiler_params=_params(dims),
    )(*args)


# --------------------------------------------------------------------------
# Kernels 3/4: BatchNorm (batch statistics) apply + ReLU, and a standalone
# stats kernel (only needed for the project-first / no-linear hidden path).
# --------------------------------------------------------------------------
def _bn_stats_kernel(h_ref, mask_ref, sum_ref, ssq_ref):
    @pl.when(pl.program_id(0) == 0)
    def _():
        sum_ref[...] = jnp.zeros_like(sum_ref)
        ssq_ref[...] = jnp.zeros_like(ssq_ref)

    x = h_ref[...].astype(jnp.float32) * mask_ref[...]
    sum_ref[...] += jnp.sum(x, axis=0, keepdims=True)
    ssq_ref[...] += jnp.sum(x * x, axis=0, keepdims=True)


def bn_stats(h, row_mask):
    n, f = h.shape
    tm = _pick_tile(n)
    return pl.pallas_call(
        _bn_stats_kernel,
        out_shape=(jax.ShapeDtypeStruct((1, f), jnp.float32),
                   jax.ShapeDtypeStruct((1, f), jnp.float32)),
        grid_spec=pltpu.PrefetchScalarGridSpec(
            num_scalar_prefetch=0,
            grid=(n // tm,),
            in_specs=[pl.BlockSpec((tm, f), lambda i: (i, 0)),
                      pl.BlockSpec((tm, 1), lambda i: (i, 0))],
            out_specs=(pl.BlockSpec((1, f), lambda i: (0, 0)),
                       pl.BlockSpec((1, f), lambda i: (0, 0))),
        ),
        compiler_params=_params(("arbitrary",)),
    )(h, row_mask)


def _bn_apply_relu_kernel(h_ref, scale_ref, shift_ref, mask_ref, o_ref):
    y = h_ref[...].astype(jnp.float32) * scale_ref[...] + shift_ref[...]
    y = jnp.maximum(y, 0.0)
    # row_mask keeps padded node rows identically zero so later-layer batch
    # statistics and matmuls stay exact.
    o_ref[...] = (y * mask_ref[...]).astype(o_ref.dtype)


def bn_apply_relu(h_pre, scale, shift, row_mask):
    n, f = h_pre.shape
    tm = _pick_tile(n)
    return pl.pallas_call(
        _bn_apply_relu_kernel,
        out_shape=jax.ShapeDtypeStruct((n, f), jnp.bfloat16),
        grid_spec=pltpu.PrefetchScalarGridSpec(
            num_scalar_prefetch=0,
            grid=(n // tm,),
            in_specs=[pl.BlockSpec((tm, f), lambda i: (i, 0)),
                      pl.BlockSpec((1, f), lambda i: (0, 0)),
                      pl.BlockSpec((1, f), lambda i: (0, 0)),
                      pl.BlockSpec((tm, 1), lambda i: (i, 0))],
            out_specs=pl.BlockSpec((tm, f), lambda i: (i, 0)),
        ),
        compiler_params=_params(("parallel",)),
    )(h_pre, scale, shift, row_mask)


# --------------------------------------------------------------------------
# Layer dispatch + full forward
# --------------------------------------------------------------------------
def _gcn_layer(h, adj_i8, s_out, s_in, wt, wlt, bias, f_in_true, f_out_true,
               row_mask, need_stats):
    out_dtype = jnp.bfloat16 if need_stats else jnp.float32
    if f_in_true > f_out_true:
        # Project first, then aggregate (keeps the NxN matmul at min width).
        # Row scaling by s_out commutes with the feature-dim linear map, so it
        # is applied in the projection finalize -> aggregation needs no s_src.
        y = fused_project(h, wt, row_scale=s_out, out_dtype=jnp.bfloat16)
        if wlt is not None:
            conv = scaled_aggregate(adj_i8, y, s_in, out_dtype=jnp.float32)
            res = fused_project(h, wlt, bias=bias, extra=conv,
                                row_mask=row_mask, with_stats=need_stats,
                                out_dtype=out_dtype)
            if need_stats:
                h_pre, ssum, ssq = res
                return h_pre, (ssum, ssq)
            return res, None
        out = scaled_aggregate(adj_i8, y, s_in, bias=bias, out_dtype=out_dtype)
        if need_stats:
            ssum, ssq = bn_stats(out, row_mask)
            return out, (ssum, ssq)
        return out, None
    else:
        # Aggregate first, then project; fuse conv- and skip-matmuls (same K)
        # and the BatchNorm statistics into the projection finalize.
        z = scaled_aggregate(adj_i8, h, s_in, s_src=s_out, out_dtype=jnp.bfloat16)
        res = fused_project(z, wt,
                            x2=h if wlt is not None else None, w2=wlt,
                            bias=bias, row_mask=row_mask,
                            with_stats=need_stats, out_dtype=out_dtype)
        if need_stats:
            h_pre, ssum, ssq = res
            return h_pre, (ssum, ssq)
        return res, None


@functools.partial(jax.jit, static_argnames=("n_layers", "use_linear",
                                             "n_hidden", "n_classes"))
def qgcn_forward(adj, feat, params, *, n_layers, use_linear, n_hidden, n_classes):
    n = adj.shape[0]
    in_feats = feat.shape[1]

    # Symmetric norm: clamp(min=1) matches the reference, so no zero-deg inf.
    out_deg = jnp.maximum(jnp.sum(adj, axis=0), 1.0)    # per source node
    in_deg = jnp.maximum(jnp.sum(adj, axis=1), 1.0)     # per destination node
    s_out = jax.lax.rsqrt(out_deg).reshape(-1, 1).astype(jnp.float32)
    s_in = jax.lax.rsqrt(in_deg).reshape(-1, 1).astype(jnp.float32)

    n_pad = _round_up(n, 256)
    # int8 adjacency in HBM (0/1 exact, halves the dominant N^2 stream); the
    # kernel upcasts to bf16 so the MXU never sees int8 (v7x-safe).
    adj_p = _pad2(adj, n_pad, n_pad).astype(jnp.int8)
    s_out_p = _pad2(s_out, n_pad, 1)
    s_in_p = _pad2(s_in, n_pad, 1)
    row_mask = (jnp.arange(n_pad) < n).astype(jnp.float32).reshape(-1, 1)

    h = _pad2(feat, n_pad, _round_up(in_feats, 128)).astype(jnp.bfloat16)
    # TODO(synk): input_drop/dropout -> identity (eval semantics).

    for i in range(n_layers):
        f_in = in_feats if i == 0 else n_hidden
        f_out = n_hidden if i < n_layers - 1 else n_classes
        f_in_p = _round_up(f_in, 128)
        f_out_p = _round_up(f_out, 128)
        is_hidden = i < n_layers - 1

        wt = _pad2(params[f"conv{i}_weight"].T, f_in_p, f_out_p).astype(jnp.bfloat16)
        bias = None
        if f"conv{i}_bias" in params:
            bias = _pad2(params[f"conv{i}_bias"].reshape(1, -1).astype(jnp.float32),
                         1, f_out_p)
        wlt = None
        if use_linear:
            wlt = _pad2(params[f"linear{i}_weight"].T,
                        f_in_p, f_out_p).astype(jnp.bfloat16)

        h, stats = _gcn_layer(h, adj_p, s_out_p, s_in_p, wt, wlt, bias,
                              f_in, f_out, row_mask, is_hidden)

        if is_hidden:
            ssum, ssq = stats
            gamma = _pad2(params[f"bn{i}_gamma"].reshape(1, -1).astype(jnp.float32),
                          1, f_out_p)
            beta = _pad2(params[f"bn{i}_beta"].reshape(1, -1).astype(jnp.float32),
                         1, f_out_p)
            # Tiny (1,F) math: fold batch mean/var + gamma/beta into scale/shift.
            n_true = jnp.float32(n)
            mean = ssum / n_true
            var = jnp.maximum(ssq / n_true - mean * mean, 0.0)  # biased (training BN)
            inv_std = jax.lax.rsqrt(var + 1e-5)
            scale = gamma * inv_std
            shift = beta - mean * scale
            h = bn_apply_relu(h, scale, shift, row_mask)

    return h[:n, :n_classes].astype(jnp.float32)


# --------------------------------------------------------------------------
if __name__ == "__main__":
    key = jax.random.PRNGKey(0)
    keys = jax.random.split(key, 16)

    N = 256
    in_feats = 128
    n_hidden = 128
    n_classes = 16
    n_layers = 3
    use_linear = True

    adj = (jax.random.uniform(keys[0], (N, N)) < 0.05).astype(jnp.float32)
    feat = jax.random.normal(keys[1], (N, in_feats), dtype=jnp.float32)

    params = {}
    kidx = 2
    for i in range(n_layers):
        f_in = in_feats if i == 0 else n_hidden
        f_out = n_hidden if i < n_layers - 1 else n_classes
        bound = 1.0 / math.sqrt(f_in)
        params[f"conv{i}_weight"] = jax.random.uniform(
            keys[kidx], (f_out, f_in), minval=-bound, maxval=bound,
            dtype=jnp.float32); kidx += 1
        if i == n_layers - 1:
            params[f"conv{i}_bias"] = jnp.zeros((f_out,), jnp.float32)
        if use_linear:
            params[f"linear{i}_weight"] = jax.random.uniform(
                keys[kidx], (f_out, f_in), minval=-bound, maxval=bound,
                dtype=jnp.float32); kidx += 1
        if i < n_layers - 1:
            params[f"bn{i}_gamma"] = jnp.ones((f_out,), jnp.float32)
            params[f"bn{i}_beta"] = jnp.zeros((f_out,), jnp.float32)

    out = qgcn_forward(adj, feat, params, n_layers=n_layers,
                       use_linear=use_linear, n_hidden=n_hidden,
                       n_classes=n_classes)
    out = jax.block_until_ready(out)

    assert out.shape == (N, n_classes), out.shape
    assert bool(jnp.all(jnp.isfinite(out)))
    print("KERNEL_OK")
</pallas_src>

<mosaic_0001>
module attributes {stable_mosaic.version = 11 : i64} {
  func.func @_proj_kernel(%arg0: i32, %arg1: i32, %arg2: i32, %arg3: memref<256x128xbf16, #tpu.memory_space<vmem>>, %arg4: memref<128x128xbf16, #tpu.memory_space<vmem>>, %arg5: memref<256x128xbf16, #tpu.memory_space<vmem>>, %arg6: memref<128x128xbf16, #tpu.memory_space<vmem>>, %arg7: memref<256x1xf32, #tpu.memory_space<vmem>>, %arg8: memref<256x128xbf16, #tpu.memory_space<vmem>>, %arg9: memref<1x128xf32, #tpu.memory_space<vmem>>, %arg10: memref<1x128xf32, #tpu.memory_space<vmem>>) attributes {dimension_semantics = [#tpu.dimension_semantics<arbitrary>, #tpu.dimension_semantics<arbitrary>, #tpu.dimension_semantics<arbitrary>], iteration_bounds = array<i64: 1, 1, 1>, scalar_prefetch = 0 : i64, scratch_operands = 0 : i64, tpu.core_type = #tpu.core_type<tc>, window_params = [{transform_indices = @transform_0, window_bounds = array<i64: 256, 128>}, {transform_indices = @transform_1, window_bounds = array<i64: 128, 128>}, {transform_indices = @transform_2, window_bounds = array<i64: 256, 128>}, {transform_indices = @transform_3, window_bounds = array<i64: 128, 128>}, {transform_indices = @transform_4, window_bounds = array<i64: 256, 1>}, {transform_indices = @transform_5, window_bounds = array<i64: 256, 128>}, {pipeline_mode = #tpu.pipeline_mode<synchronous>, transform_indices = @transform_6, window_bounds = array<i64: 1, 128>}, {pipeline_mode = #tpu.pipeline_mode<synchronous>, transform_indices = @transform_7, window_bounds = array<i64: 1, 128>}]} {
    %c0_i32 = arith.constant 0 : i32
    %0 = arith.cmpi eq, %arg0, %c0_i32 : i32
    %c0_i32_0 = arith.constant 0 : i32
    %1 = arith.cmpi eq, %arg1, %c0_i32_0 : i32
    %2 = arith.andi %0, %1 : i1
    %c0_i32_1 = arith.constant 0 : i32
    %3 = arith.cmpi eq, %arg2, %c0_i32_1 : i32
    %4 = arith.andi %2, %3 : i1
    %5 = arith.extui %4 : i1 to i32
    %c0_i32_2 = arith.constant 0 : i32
    %6 = arith.cmpi ne, %5, %c0_i32_2 : i32
    scf.if %6 {
      %cst_25 = arith.constant 0.000000e+00 : f32
      %30 = vector.broadcast %cst_25 : f32 to vector<1x128xf32>
      %c0_26 = arith.constant 0 : index
      %c0_27 = arith.constant 0 : index
      %31 = vector.load %arg9[%c0_26, %c0_27] : memref<1x128xf32, #tpu.memory_space<vmem>>, vector<1x128xf32>
      tpu.vector_store %arg9[%c0_26, %c0_27], %30 {strides = array<i32>} : memref<1x128xf32, #tpu.memory_space<vmem>>, vector<1x128xf32>,
      %cst_28 = arith.constant 0.000000e+00 : f32
      %32 = vector.broadcast %cst_28 : f32 to vector<1x128xf32>
      %c0_29 = arith.constant 0 : index
      %c0_30 = arith.constant 0 : index
      %33 = vector.load %arg10[%c0_29, %c0_30] : memref<1x128xf32, #tpu.memory_space<vmem>>, vector<1x128xf32>
      tpu.vector_store %arg10[%c0_29, %c0_30], %32 {strides = array<i32>} : memref<1x128xf32, #tpu.memory_space<vmem>>, vector<1x128xf32>,
    } else {
    }
    %c0 = arith.constant 0 : index
    %c0_3 = arith.constant 0 : index
    %7 = vector.load %arg3[%c0, %c0_3] : memref<256x128xbf16, #tpu.memory_space<vmem>>, vector<256x128xbf16>
    %c0_4 = arith.constant 0 : index
    %c0_5 = arith.constant 0 : index
    %8 = vector.load %arg4[%c0_4, %c0_5] : memref<128x128xbf16, #tpu.memory_space<vmem>>, vector<128x128xbf16>
    %cst = arith.constant dense<0.000000e+00> : vector<256x128xf32>
    %9 = tpu.matmul %7, %8, %cst {dimension_numbers = #tpu.dot_dimension_numbers<[1], [0], [0], [1], [0, 0, 1, 1], [], []>} : vector<256x128xbf16>, vector<128x128xbf16>, vector<256x128xf32> -> vector<256x128xf32>
    %c0_6 = arith.constant 0 : index
    %c0_7 = arith.constant 0 : index
    %10 = vector.load %arg5[%c0_6, %c0_7] : memref<256x128xbf16, #tpu.memory_space<vmem>>, vector<256x128xbf16>
    %c0_8 = arith.constant 0 : index
    %c0_9 = arith.constant 0 : index
    %11 = vector.load %arg6[%c0_8, %c0_9] : memref<128x128xbf16, #tpu.memory_space<vmem>>, vector<128x128xbf16>
    %cst_10 = arith.constant dense<0.000000e+00> : vector<256x128xf32>
    %12 = tpu.matmul %10, %11, %cst_10 {dimension_numbers = #tpu.dot_dimension_numbers<[1], [0], [0], [1], [0, 0, 1, 1], [], []>} : vector<256x128xbf16>, vector<128x128xbf16>, vector<256x128xf32> -> vector<256x128xf32>
    %13 = arith.addf %9, %12 : vector<256x128xf32>
    %14 = arith.truncf %13 : vector<256x128xf32> to vector<256x128xbf16>
    %c0_11 = arith.constant 0 : index
    %c0_12 = arith.constant 0 : index
    %15 = vector.load %arg8[%c0_11, %c0_12] : memref<256x128xbf16, #tpu.memory_space<vmem>>, vector<256x128xbf16>
    tpu.vector_store %arg8[%c0_11, %c0_12], %14 {strides = array<i32>} : memref<256x128xbf16, #tpu.memory_space<vmem>>, vector<256x128xbf16>,
    %c0_13 = arith.constant 0 : index
    %c0_14 = arith.constant 0 : index
    %16 = vector.load %arg7[%c0_13, %c0_14] : memref<256x1xf32, #tpu.memory_space<vmem>>, vector<256x1xf32>
    %17 = vector.broadcast %16 : vector<256x1xf32> to vector<256x128xf32>
    %18 = arith.mulf %13, %17 : vector<256x128xf32>
    %c0_15 = arith.constant 0 : index
    %c0_16 = arith.constant 0 : index
    %19 = vector.load %arg9[%c0_15, %c0_16] : memref<1x128xf32, #tpu.memory_space<vmem>>, vector<1x128xf32>
    %cst_17 = arith.constant dense<0.000000e+00> : vector<128xf32>
    %20 = vector.multi_reduction <add>, %18, %cst_17 [0] : vector<256x128xf32> to vector<128xf32>
    %21 = vector.shape_cast %20 : vector<128xf32> to vector<1x128xf32>
    %22 = arith.addf %19, %21 : vector<1x128xf32>
    %c0_18 = arith.constant 0 : index
    %c0_19 = arith.constant 0 : index
    %23 = vector.load %arg9[%c0_18, %c0_19] : memref<1x128xf32, #tpu.memory_space<vmem>>, vector<1x128xf32>
    tpu.vector_store %arg9[%c0_18, %c0_19], %22 {strides = array<i32>} : memref<1x128xf32, #tpu.memory_space<vmem>>, vector<1x128xf32>,
    %c0_20 = arith.constant 0 : index
    %c0_21 = arith.constant 0 : index
    %24 = vector.load %arg10[%c0_20, %c0_21] : memref<1x128xf32, #tpu.memory_space<vmem>>, vector<1x128xf32>
    %25 = arith.mulf %18, %18 : vector<256x128xf32>
    %cst_22 = arith.constant dense<0.000000e+00> : vector<128xf32>
    %26 = vector.multi_reduction <add>, %25, %cst_22 [0] : vector<256x128xf32> to vector<128xf32>
    %27 = vector.shape_cast %26 : vector<128xf32> to vector<1x128xf32>
    %28 = arith.addf %24, %27 : vector<1x128xf32>
    %c0_23 = arith.constant 0 : index
    %c0_24 = arith.constant 0 : index
    %29 = vector.load %arg10[%c0_23, %c0_24] : memref<1x128xf32, #tpu.memory_space<vmem>>, vector<1x128xf32>
    tpu.vector_store %arg10[%c0_23, %c0_24], %28 {strides = array<i32>} : memref<1x128xf32, #tpu.memory_space<vmem>>, vector<1x128xf32>,
    return
  }
  func.func @transform_0(%arg0: i32, %arg1: i32, %arg2: i32) -> (i32, i32) {
    %c0_i32 = arith.constant 0 : i32
    return %arg0, %arg2 : i32, i32
  }
  func.func @transform_1(%arg0: i32, %arg1: i32, %arg2: i32) -> (i32, i32) {
    %c0_i32 = arith.constant 0 : i32
    return %arg2, %arg1 : i32, i32
  }
  func.func @transform_2(%arg0: i32, %arg1: i32, %arg2: i32) -> (i32, i32) {
    %c0_i32 = arith.constant 0 : i32
    return %arg0, %arg2 : i32, i32
  }
  func.func @transform_3(%arg0: i32, %arg1: i32, %arg2: i32) -> (i32, i32) {
    %c0_i32 = arith.constant 0 : i32
    return %arg2, %arg1 : i32, i32
  }
  func.func @transform_4(%arg0: i32, %arg1: i32, %arg2: i32) -> (i32, i32) {
    %c0_i32 = arith.constant 0 : i32
    %c0_i32_0 = arith.constant 0 : i32
    return %arg0, %c0_i32 : i32, i32
  }
  func.func @transform_5(%arg0: i32, %arg1: i32, %arg2: i32) -> (i32, i32) {
    %c0_i32 = arith.constant 0 : i32
    return %arg0, %arg1 : i32, i32
  }
  func.func @transform_6(%arg0: i32, %arg1: i32, %arg2: i32) -> (i32, i32) {
    %c0_i32 = arith.constant 0 : i32
    %c0_i32_0 = arith.constant 0 : i32
    %c0_i32_1 = arith.constant 0 : i32
    return %c0_i32, %c0_i32_0 : i32, i32
  }
  func.func @transform_7(%arg0: i32, %arg1: i32, %arg2: i32) -> (i32, i32) {
    %c0_i32 = arith.constant 0 : i32
    %c0_i32_0 = arith.constant 0 : i32
    %c0_i32_1 = arith.constant 0 : i32
    return %c0_i32, %c0_i32_0 : i32, i32
  }
}

module attributes {stable_mosaic.version = 11 : i64} {
  func.func @_agg_kernel(%arg0: i32, %arg1: i32, %arg2: i32, %arg3: memref<256x256xi8, #tpu.memory_space<vmem>>, %arg4: memref<256x128xbf16, #tpu.memory_space<vmem>>, %arg5: memref<256x1xf32, #tpu.memory_space<vmem>>, %arg6: memref<256x1xf32, #tpu.memory_space<vmem>>, %arg7: memref<256x128xbf16, #tpu.memory_space<vmem>>, %arg8: memref<256x128xf32, #tpu.memory_space<vmem>>) attributes {dimension_semantics = [#tpu.dimension_semantics<parallel>, #tpu.dimension_semantics<parallel>, #tpu.dimension_semantics<arbitrary>], iteration_bounds = array<i64: 1, 1, 1>, scalar_prefetch = 0 : i64, scratch_operands = 1 : i64, tpu.core_type = #tpu.core_type<tc>, window_params = [{transform_indices = @transform_0, window_bounds = array<i64: 256, 256>}, {transform_indices = @transform_1, window_bounds = array<i64: 256, 128>}, {transform_indices = @transform_2, window_bounds = array<i64: 256, 1>}, {transform_indices = @transform_3, window_bounds = array<i64: 256, 1>}, {transform_indices = @transform_4, window_bounds = array<i64: 256, 128>}]} {
    %c0_i32 = arith.constant 0 : i32
    %0 = arith.cmpi eq, %arg2, %c0_i32 : i32
    %1 = arith.extui %0 : i1 to i32
    %c0_i32_0 = arith.constant 0 : i32
    %2 = arith.cmpi ne, %1, %c0_i32_0 : i32
    scf.if %2 {
      %cst_12 = arith.constant 0.000000e+00 : f32
      %19 = vector.broadcast %cst_12 : f32 to vector<256x128xf32>
      %c0_13 = arith.constant 0 : index
      %c0_14 = arith.constant 0 : index
      %20 = vector.load %arg8[%c0_13, %c0_14] : memref<256x128xf32, #tpu.memory_space<vmem>>, vector<256x128xf32>
      tpu.vector_store %arg8[%c0_13, %c0_14], %19 {strides = array<i32>} : memref<256x128xf32, #tpu.memory_space<vmem>>, vector<256x128xf32>,
    } else {
    }
    %c0 = arith.constant 0 : index
    %c0_1 = arith.constant 0 : index
    %3 = vector.load %arg3[%c0, %c0_1] : memref<256x256xi8, #tpu.memory_space<vmem>>, vector<256x256xi8>
    %4 = arith.sitofp %3 : vector<256x256xi8> to vector<256x256xf32>
    %5 = arith.truncf %4 : vector<256x256xf32> to vector<256x256xbf16>
    %c0_2 = arith.constant 0 : index
    %c0_3 = arith.constant 0 : index
    %6 = vector.load %arg4[%c0_2, %c0_3] : memref<256x128xbf16, #tpu.memory_space<vmem>>, vector<256x128xbf16>
    %c0_4 = arith.constant 0 : index
    %c0_5 = arith.constant 0 : index
    %7 = vector.load %arg5[%c0_4, %c0_5] : memref<256x1xf32, #tpu.memory_space<vmem>>, vector<256x1xf32>
    %8 = arith.extf %6 : vector<256x128xbf16> to vector<256x128xf32>
    %9 = vector.broadcast %7 : vector<256x1xf32> to vector<256x128xf32>
    %10 = arith.mulf %8, %9 : vector<256x128xf32>
    %11 = arith.truncf %10 : vector<256x128xf32> to vector<256x128xbf16>
    %c0_6 = arith.constant 0 : index
    %c0_7 = arith.constant 0 : index
    %12 = vector.load %arg8[%c0_6, %c0_7] : memref<256x128xf32, #tpu.memory_space<vmem>>, vector<256x128xf32>
    %cst = arith.constant dense<0.000000e+00> : vector<256x128xf32>
    %13 = tpu.matmul %5, %11, %cst {dimension_numbers = #tpu.dot_dimension_numbers<[1], [0], [0], [1], [0, 0, 1, 1], [], []>} : vector<256x256xbf16>, vector<256x128xbf16>, vector<256x128xf32> -> vector<256x128xf32>
    %14 = arith.addf %12, %13 : vector<256x128xf32>
    %c0_8 = arith.constant 0 : index
    %c0_9 = arith.constant 0 : index
    %15 = vector.load %arg8[%c0_8, %c0_9] : memref<256x128xf32, #tpu.memory_space<vmem>>, vector<256x128xf32>
    tpu.vector_store %arg8[%c0_8, %c0_9], %14 {strides = array<i32>} : memref<256x128xf32, #tpu.memory_space<vmem>>, vector<256x128xf32>,
    %c0_i32_10 = arith.constant 0 : i32
    %16 = arith.cmpi eq, %arg2, %c0_i32_10 : i32
    %17 = arith.extui %16 : i1 to i32
    %c0_i32_11 = arith.constant 0 : i32
    %18 = arith.cmpi ne, %17, %c0_i32_11 : i32
    scf.if %18 {
      %c0_12 = arith.constant 0 : index
      %c0_13 = arith.constant 0 : index
      %19 = vector.load %arg8[%c0_12, %c0_13] : memref<256x128xf32, #tpu.memory_space<vmem>>, vector<256x128xf32>
      %c0_14 = arith.constant 0 : index
      %c0_15 = arith.constant 0 : index
      %20 = vector.load %arg6[%c0_14, %c0_15] : memref<256x1xf32, #tpu.memory_space<vmem>>, vector<256x1xf32>
      %21 = vector.broadcast %20 : vector<256x1xf32> to vector<256x128xf32>
      %22 = arith.mulf %19, %21 : vector<256x128xf32>
      %23 = arith.truncf %22 : vector<256x128xf32> to vector<256x128xbf16>
      %c0_16 = arith.constant 0 : index
      %c0_17 = arith.constant 0 : index
      %24 = vector.load %arg7[%c0_16, %c0_17] : memref<256x128xbf16, #tpu.memory_space<vmem>>, vector<256x128xbf16>
      tpu.vector_store %arg7[%c0_16, %c0_17], %23 {strides = array<i32>} : memref<256x128xbf16, #tpu.memory_space<vmem>>, vector<256x128xbf16>,
    } else {
    }
    return
  }
  func.func @transform_0(%arg0: i32, %arg1: i32, %arg2: i32) -> (i32, i32) {
    %c0_i32 = arith.constant 0 : i32
    return %arg0, %arg2 : i32, i32
  }
  func.func @transform_1(%arg0: i32, %arg1: i32, %arg2: i32) -> (i32, i32) {
    %c0_i32 = arith.constant 0 : i32
    return %arg2, %arg1 : i32, i32
  }
  func.func @transform_2(%arg0: i32, %arg1: i32, %arg2: i32) -> (i32, i32) {
    %c0_i32 = arith.constant 0 : i32
    %c0_i32_0 = arith.constant 0 : i32
    return %arg2, %c0_i32 : i32, i32
  }
  func.func @transform_3(%arg0: i32, %arg1: i32, %arg2: i32) -> (i32, i32) {
    %c0_i32 = arith.constant 0 : i32
    %c0_i32_0 = arith.constant 0 : i32
    return %arg0, %c0_i32 : i32, i32
  }
  func.func @transform_4(%arg0: i32, %arg1: i32, %arg2: i32) -> (i32, i32) {
    %c0_i32 = arith.constant 0 : i32
    return %arg0, %arg1 : i32, i32
  }
}

module attributes {stable_mosaic.version = 11 : i64} {
  func.func @_bn_apply_relu_kernel(%arg0: i32, %arg1: memref<256x128xbf16, #tpu.memory_space<vmem>>, %arg2: memref<1x128xf32, #tpu.memory_space<vmem>>, %arg3: memref<1x128xf32, #tpu.memory_space<vmem>>, %arg4: memref<256x1xf32, #tpu.memory_space<vmem>>, %arg5: memref<256x128xbf16, #tpu.memory_space<vmem>>) attributes {dimension_semantics = [#tpu.dimension_semantics<parallel>], iteration_bounds = array<i64: 1>, scalar_prefetch = 0 : i64, scratch_operands = 0 : i64, tpu.core_type = #tpu.core_type<tc>, window_params = [{transform_indices = @transform_0, window_bounds = array<i64: 256, 128>}, {pipeline_mode = #tpu.pipeline_mode<synchronous>, transform_indices = @transform_1, window_bounds = array<i64: 1, 128>}, {pipeline_mode = #tpu.pipeline_mode<synchronous>, transform_indices = @transform_2, window_bounds = array<i64: 1, 128>}, {transform_indices = @transform_3, window_bounds = array<i64: 256, 1>}, {transform_indices = @transform_4, window_bounds = array<i64: 256, 128>}]} {
    %c0 = arith.constant 0 : index
    %c0_0 = arith.constant 0 : index
    %0 = vector.load %arg1[%c0, %c0_0] : memref<256x128xbf16, #tpu.memory_space<vmem>>, vector<256x128xbf16>
    %1 = arith.extf %0 : vector<256x128xbf16> to vector<256x128xf32>
    %c0_1 = arith.constant 0 : index
    %c0_2 = arith.constant 0 : index
    %2 = vector.load %arg2[%c0_1, %c0_2] : memref<1x128xf32, #tpu.memory_space<vmem>>, vector<1x128xf32>
    %3 = vector.broadcast %2 : vector<1x128xf32> to vector<256x128xf32>
    %4 = arith.mulf %1, %3 : vector<256x128xf32>
    %c0_3 = arith.constant 0 : index
    %c0_4 = arith.constant 0 : index
    %5 = vector.load %arg3[%c0_3, %c0_4] : memref<1x128xf32, #tpu.memory_space<vmem>>, vector<1x128xf32>
    %6 = vector.broadcast %5 : vector<1x128xf32> to vector<256x128xf32>
    %7 = arith.addf %4, %6 : vector<256x128xf32>
    %cst = arith.constant 0.000000e+00 : f32
    %8 = vector.broadcast %cst : f32 to vector<256x128xf32>
    %9 = arith.maximumf %7, %8 : vector<256x128xf32>
    %c0_5 = arith.constant 0 : index
    %c0_6 = arith.constant 0 : index
    %10 = vector.load %arg4[%c0_5, %c0_6] : memref<256x1xf32, #tpu.memory_space<vmem>>, vector<256x1xf32>
    %11 = vector.broadcast %10 : vector<256x1xf32> to vector<256x128xf32>
    %12 = arith.mulf %9, %11 : vector<256x128xf32>
    %13 = arith.truncf %12 : vector<256x128xf32> to vector<256x128xbf16>
    %c0_7 = arith.constant 0 : index
    %c0_8 = arith.constant 0 : index
    %14 = vector.load %arg5[%c0_7, %c0_8] : memref<256x128xbf16, #tpu.memory_space<vmem>>, vector<256x128xbf16>
    tpu.vector_store %arg5[%c0_7, %c0_8], %13 {strides = array<i32>} : memref<256x128xbf16, #tpu.memory_space<vmem>>, vector<256x128xbf16>,
    return
  }
  func.func @transform_0(%arg0: i32) -> (i32, i32) {
    %c0_i32 = arith.constant 0 : i32
    %c0_i32_0 = arith.constant 0 : i32
    return %arg0, %c0_i32 : i32, i32
  }
  func.func @transform_1(%arg0: i32) -> (i32, i32) {
    %c0_i32 = arith.constant 0 : i32
    %c0_i32_0 = arith.constant 0 : i32
    %c0_i32_1 = arith.constant 0 : i32
    return %c0_i32, %c0_i32_0 : i32, i32
  }
  func.func @transform_2(%arg0: i32) -> (i32, i32) {
    %c0_i32 = arith.constant 0 : i32
    %c0_i32_0 = arith.constant 0 : i32
    %c0_i32_1 = arith.constant 0 : i32
    return %c0_i32, %c0_i32_0 : i32, i32
  }
  func.func @transform_3(%arg0: i32) -> (i32, i32) {
    %c0_i32 = arith.constant 0 : i32
    %c0_i32_0 = arith.constant 0 : i32
    return %arg0, %c0_i32 : i32, i32
  }
  func.func @transform_4(%arg0: i32) -> (i32, i32) {
    %c0_i32 = arith.constant 0 : i32
    %c0_i32_0 = arith.constant 0 : i32
    return %arg0, %c0_i32 : i32, i32
  }
}

module attributes {stable_mosaic.version = 11 : i64} {
  func.func @_proj_kernel(%arg0: i32, %arg1: i32, %arg2: i32, %arg3: memref<256x128xbf16, #tpu.memory_space<vmem>>, %arg4: memref<128x128xbf16, #tpu.memory_space<vmem>>, %arg5: memref<256x1xf32, #tpu.memory_space<vmem>>, %arg6: memref<256x128xbf16, #tpu.memory_space<vmem>>) attributes {dimension_semantics = [#tpu.dimension_semantics<parallel>, #tpu.dimension_semantics<parallel>, #tpu.dimension_semantics<arbitrary>], iteration_bounds = array<i64: 1, 1, 1>, scalar_prefetch = 0 : i64, scratch_operands = 0 : i64, tpu.core_type = #tpu.core_type<tc>, window_params = [{transform_indices = @transform_0, window_bounds = array<i64: 256, 128>}, {transform_indices = @transform_1, window_bounds = array<i64: 128, 128>}, {transform_indices = @transform_2, window_bounds = array<i64: 256, 1>}, {transform_indices = @transform_3, window_bounds = array<i64: 256, 128>}]} {
    %c0 = arith.constant 0 : index
    %c0_0 = arith.constant 0 : index
    %0 = vector.load %arg3[%c0, %c0_0] : memref<256x128xbf16, #tpu.memory_space<vmem>>, vector<256x128xbf16>
    %c0_1 = arith.constant 0 : index
    %c0_2 = arith.constant 0 : index
    %1 = vector.load %arg4[%c0_1, %c0_2] : memref<128x128xbf16, #tpu.memory_space<vmem>>, vector<128x128xbf16>
    %cst = arith.constant dense<0.000000e+00> : vector<256x128xf32>
    %2 = tpu.matmul %0, %1, %cst {dimension_numbers = #tpu.dot_dimension_numbers<[1], [0], [0], [1], [0, 0, 1, 1], [], []>} : vector<256x128xbf16>, vector<128x128xbf16>, vector<256x128xf32> -> vector<256x128xf32>
    %c0_3 = arith.constant 0 : index
    %c0_4 = arith.constant 0 : index
    %3 = vector.load %arg5[%c0_3, %c0_4] : memref<256x1xf32, #tpu.memory_space<vmem>>, vector<256x1xf32>
    %4 = vector.broadcast %3 : vector<256x1xf32> to vector<256x128xf32>
    %5 = arith.mulf %2, %4 : vector<256x128xf32>
    %6 = arith.truncf %5 : vector<256x128xf32> to vector<256x128xbf16>
    %c0_5 = arith.constant 0 : index
    %c0_6 = arith.constant 0 : index
    %7 = vector.load %arg6[%c0_5, %c0_6] : memref<256x128xbf16, #tpu.memory_space<vmem>>, vector<256x128xbf16>
    tpu.vector_store %arg6[%c0_5, %c0_6], %6 {strides = array<i32>} : memref<256x128xbf16, #tpu.memory_space<vmem>>, vector<256x128xbf16>,
    return
  }
  func.func @transform_0(%arg0: i32, %arg1: i32, %arg2: i32) -> (i32, i32) {
    %c0_i32 = arith.constant 0 : i32
    return %arg0, %arg2 : i32, i32
  }
  func.func @transform_1(%arg0: i32, %arg1: i32, %arg2: i32) -> (i32, i32) {
    %c0_i32 = arith.constant 0 : i32
    return %arg2, %arg1 : i32, i32
  }
  func.func @transform_2(%arg0: i32, %arg1: i32, %arg2: i32) -> (i32, i32) {
    %c0_i32 = arith.constant 0 : i32
    %c0_i32_0 = arith.constant 0 : i32
    return %arg0, %c0_i32 : i32, i32
  }
  func.func @transform_3(%arg0: i32, %arg1: i32, %arg2: i32) -> (i32, i32) {
    %c0_i32 = arith.constant 0 : i32
    return %arg0, %arg1 : i32, i32
  }
}

module attributes {stable_mosaic.version = 11 : i64} {
  func.func @_agg_kernel(%arg0: i32, %arg1: i32, %arg2: i32, %arg3: memref<256x256xi8, #tpu.memory_space<vmem>>, %arg4: memref<256x128xbf16, #tpu.memory_space<vmem>>, %arg5: memref<256x1xf32, #tpu.memory_space<vmem>>, %arg6: memref<256x128xf32, #tpu.memory_space<vmem>>, %arg7: memref<256x128xf32, #tpu.memory_space<vmem>>) attributes {dimension_semantics = [#tpu.dimension_semantics<parallel>, #tpu.dimension_semantics<parallel>, #tpu.dimension_semantics<arbitrary>], iteration_bounds = array<i64: 1, 1, 1>, scalar_prefetch = 0 : i64, scratch_operands = 1 : i64, tpu.core_type = #tpu.core_type<tc>, window_params = [{transform_indices = @transform_0, window_bounds = array<i64: 256, 256>}, {transform_indices = @transform_1, window_bounds = array<i64: 256, 128>}, {transform_indices = @transform_2, window_bounds = array<i64: 256, 1>}, {transform_indices = @transform_3, window_bounds = array<i64: 256, 128>}]} {
    %c0_i32 = arith.constant 0 : i32
    %0 = arith.cmpi eq, %arg2, %c0_i32 : i32
    %1 = arith.extui %0 : i1 to i32
    %c0_i32_0 = arith.constant 0 : i32
    %2 = arith.cmpi ne, %1, %c0_i32_0 : i32
    scf.if %2 {
      %cst_10 = arith.constant 0.000000e+00 : f32
      %14 = vector.broadcast %cst_10 : f32 to vector<256x128xf32>
      %c0_11 = arith.constant 0 : index
      %c0_12 = arith.constant 0 : index
      %15 = vector.load %arg7[%c0_11, %c0_12] : memref<256x128xf32, #tpu.memory_space<vmem>>, vector<256x128xf32>
      tpu.vector_store %arg7[%c0_11, %c0_12], %14 {strides = array<i32>} : memref<256x128xf32, #tpu.memory_space<vmem>>, vector<256x128xf32>,
    } else {
    }
    %c0 = arith.constant 0 : index
    %c0_1 = arith.constant 0 : index
    %3 = vector.load %arg3[%c0, %c0_1] : memref<256x256xi8, #tpu.memory_space<vmem>>, vector<256x256xi8>
    %4 = arith.sitofp %3 : vector<256x256xi8> to vector<256x256xf32>
    %5 = arith.truncf %4 : vector<256x256xf32> to vector<256x256xbf16>
    %c0_2 = arith.constant 0 : index
    %c0_3 = arith.constant 0 : index
    %6 = vector.load %arg4[%c0_2, %c0_3] : memref<256x128xbf16, #tpu.memory_space<vmem>>, vector<256x128xbf16>
    %c0_4 = arith.constant 0 : index
    %c0_5 = arith.constant 0 : index
    %7 = vector.load %arg7[%c0_4, %c0_5] : memref<256x128xf32, #tpu.memory_space<vmem>>, vector<256x128xf32>
    %cst = arith.constant dense<0.000000e+00> : vector<256x128xf32>
    %8 = tpu.matmul %5, %6, %cst {dimension_numbers = #tpu.dot_dimension_numbers<[1], [0], [0], [1], [0, 0, 1, 1], [], []>} : vector<256x256xbf16>, vector<256x128xbf16>, vector<256x128xf32> -> vector<256x128xf32>
    %9 = arith.addf %7, %8 : vector<256x128xf32>
    %c0_6 = arith.constant 0 : index
    %c0_7 = arith.constant 0 : index
    %10 = vector.load %arg7[%c0_6, %c0_7] : memref<256x128xf32, #tpu.memory_space<vmem>>, vector<256x128xf32>
    tpu.vector_store %arg7[%c0_6, %c0_7], %9 {strides = array<i32>} : memref<256x128xf32, #tpu.memory_space<vmem>>, vector<256x128xf32>,
    %c0_i32_8 = arith.constant 0 : i32
    %11 = arith.cmpi eq, %arg2, %c0_i32_8 : i32
    %12 = arith.extui %11 : i1 to i32
    %c0_i32_9 = arith.constant 0 : i32
    %13 = arith.cmpi ne, %12, %c0_i32_9 : i32
    scf.if %13 {
      %c0_10 = arith.constant 0 : index
      %c0_11 = arith.constant 0 : index
      %14 = vector.load %arg7[%c0_10, %c0_11] : memref<256x128xf32, #tpu.memory_space<vmem>>, vector<256x128xf32>
      %c0_12 = arith.constant 0 : index
      %c0_13 = arith.constant 0 : index
      %15 = vector.load %arg5[%c0_12, %c0_13] : memref<256x1xf32, #tpu.memory_space<vmem>>, vector<256x1xf32>
      %16 = vector.broadcast %15 : vector<256x1xf32> to vector<256x128xf32>
      %17 = arith.mulf %14, %16 : vector<256x128xf32>
      %c0_14 = arith.constant 0 : index
      %c0_15 = arith.constant 0 : index
      %18 = vector.load %arg6[%c0_14, %c0_15] : memref<256x128xf32, #tpu.memory_space<vmem>>, vector<256x128xf32>
      tpu.vector_store %arg6[%c0_14, %c0_15], %17 {strides = array<i32>} : memref<256x128xf32, #tpu.memory_space<vmem>>, vector<256x128xf32>,
    } else {
    }
    return
  }
  func.func @transform_0(%arg0: i32, %arg1: i32, %arg2: i32) -> (i32, i32) {
    %c0_i32 = arith.constant 0 : i32
    return %arg0, %arg2 : i32, i32
  }
  func.func @transform_1(%arg0: i32, %arg1: i32, %arg2: i32) -> (i32, i32) {
    %c0_i32 = arith.constant 0 : i32
    return %arg2, %arg1 : i32, i32
  }
  func.func @transform_2(%arg0: i32, %arg1: i32, %arg2: i32) -> (i32, i32) {
    %c0_i32 = arith.constant 0 : i32
    %c0_i32_0 = arith.constant 0 : i32
    return %arg0, %c0_i32 : i32, i32
  }
  func.func @transform_3(%arg0: i32, %arg1: i32, %arg2: i32) -> (i32, i32) {
    %c0_i32 = arith.constant 0 : i32
    return %arg0, %arg1 : i32, i32
  }
}

module attributes {stable_mosaic.version = 11 : i64} {
  func.func @_proj_kernel(%arg0: i32, %arg1: i32, %arg2: i32, %arg3: memref<256x128xbf16, #tpu.memory_space<vmem>>, %arg4: memref<128x128xbf16, #tpu.memory_space<vmem>>, %arg5: memref<1x128xf32, #tpu.memory_space<vmem>>, %arg6: memref<256x128xf32, #tpu.memory_space<vmem>>, %arg7: memref<256x128xf32, #tpu.memory_space<vmem>>) attributes {dimension_semantics = [#tpu.dimension_semantics<parallel>, #tpu.dimension_semantics<parallel>, #tpu.dimension_semantics<arbitrary>], iteration_bounds = array<i64: 1, 1, 1>, scalar_prefetch = 0 : i64, scratch_operands = 0 : i64, tpu.core_type = #tpu.core_type<tc>, window_params = [{transform_indices = @transform_0, window_bounds = array<i64: 256, 128>}, {transform_indices = @transform_1, window_bounds = array<i64: 128, 128>}, {transform_indices = @transform_2, window_bounds = array<i64: 1, 128>}, {transform_indices = @transform_3, window_bounds = array<i64: 256, 128>}, {transform_indices = @transform_4, window_bounds = array<i64: 256, 128>}]} {
    %c0 = arith.constant 0 : index
    %c0_0 = arith.constant 0 : index
    %0 = vector.load %arg3[%c0, %c0_0] : memref<256x128xbf16, #tpu.memory_space<vmem>>, vector<256x128xbf16>
    %c0_1 = arith.constant 0 : index
    %c0_2 = arith.constant 0 : index
    %1 = vector.load %arg4[%c0_1, %c0_2] : memref<128x128xbf16, #tpu.memory_space<vmem>>, vector<128x128xbf16>
    %cst = arith.constant dense<0.000000e+00> : vector<256x128xf32>
    %2 = tpu.matmul %0, %1, %cst {dimension_numbers = #tpu.dot_dimension_numbers<[1], [0], [0], [1], [0, 0, 1, 1], [], []>} : vector<256x128xbf16>, vector<128x128xbf16>, vector<256x128xf32> -> vector<256x128xf32>
    %c0_3 = arith.constant 0 : index
    %c0_4 = arith.constant 0 : index
    %3 = vector.load %arg5[%c0_3, %c0_4] : memref<1x128xf32, #tpu.memory_space<vmem>>, vector<1x128xf32>
    %4 = vector.broadcast %3 : vector<1x128xf32> to vector<256x128xf32>
    %5 = arith.addf %2, %4 : vector<256x128xf32>
    %c0_5 = arith.constant 0 : index
    %c0_6 = arith.constant 0 : index
    %6 = vector.load %arg6[%c0_5, %c0_6] : memref<256x128xf32, #tpu.memory_space<vmem>>, vector<256x128xf32>
    %7 = arith.addf %5, %6 : vector<256x128xf32>
    %c0_7 = arith.constant 0 : index
    %c0_8 = arith.constant 0 : index
    %8 = vector.load %arg7[%c0_7, %c0_8] : memref<256x128xf32, #tpu.memory_space<vmem>>, vector<256x128xf32>
    tpu.vector_store %arg7[%c0_7, %c0_8], %7 {strides = array<i32>} : memref<256x128xf32, #tpu.memory_space<vmem>>, vector<256x128xf32>,
    return
  }
  func.func @transform_0(%arg0: i32, %arg1: i32, %arg2: i32) -> (i32, i32) {
    %c0_i32 = arith.constant 0 : i32
    return %arg0, %arg2 : i32, i32
  }
  func.func @transform_1(%arg0: i32, %arg1: i32, %arg2: i32) -> (i32, i32) {
    %c0_i32 = arith.constant 0 : i32
    return %arg2, %arg1 : i32, i32
  }
  func.func @transform_2(%arg0: i32, %arg1: i32, %arg2: i32) -> (i32, i32) {
    %c0_i32 = arith.constant 0 : i32
    %c0_i32_0 = arith.constant 0 : i32
    return %c0_i32, %arg1 : i32, i32
  }
  func.func @transform_3(%arg0: i32, %arg1: i32, %arg2: i32) -> (i32, i32) {
    %c0_i32 = arith.constant 0 : i32
    return %arg0, %arg1 : i32, i32
  }
  func.func @transform_4(%arg0: i32, %arg1: i32, %arg2: i32) -> (i32, i32) {
    %c0_i32 = arith.constant 0 : i32
    return %arg0, %arg1 : i32, i32
  }
}

</mosaic_0001>

<llo_original>
// kernel: qgcn_forward.11
$region0: #{qgcn_forward.11}
  #allocation0 [shape = 'u32[]', space=smem, size = 0x4, offset = 0x4, fixed_abs, tag = 'smem constant byte address 0x4 - core index']
  #allocation1 [shape = 'u32[72,128]{1,0:T(1,128)}', space=vmem, size = 0x9000, scoped, tag = 'internal scratch']
  %s0 = inlined_call_operand.vmem [shape: bf16[256,128], index: 0, kind: input, shape index: {}]
  %s1 = inlined_call_operand.vmem [shape: f32[1,128], index: 1, kind: input, shape index: {}]
  %s2 = inlined_call_operand.vmem [shape: f32[1,128], index: 2, kind: input, shape index: {}]
  %s3 = inlined_call_operand.vmem [shape: f32[256,1], index: 3, kind: input, shape index: {}]
  %s4 = inlined_call_operand.vmem [shape: bf16[256,128], index: 4, kind: output, shape index: {}]
  %s5 = sld [smem:[#allocation0]]
  $region26: #{qgcn_forward.11} parent=0
    _
  %s7 = ssub.s32 1, %s5
  %s8 = scalar_select 0, %s7, %s5
  // Predicated region
  $region2: #{qgcn_forward.11} parent=0 // pred_check
    _
  $region3: #{qgcn_forward.11} parent=0 // pred_check_branch
    %10 = sbr.rel (0) target = $region5
  $region4: #{qgcn_forward.11} parent=0 // pred_region
    _
  $region5: #{qgcn_forward.11} parent=0 // pred_fallthru
    _
  // Predicated region
  $region6: #{qgcn_forward.11} parent=0 // pred_check
    _
  $region7: #{qgcn_forward.11} parent=0 // pred_check_branch
    %12 = sbr.rel (0) target = $region9
  $region8: #{qgcn_forward.11} parent=0 // pred_region
    _
  $region9: #{qgcn_forward.11} parent=0 // pred_fallthru
    _
  // Predicated region
  $region10: #{qgcn_forward.11} parent=0 // pred_check
    _
  $region11: #{qgcn_forward.11} parent=0 // pred_check_branch
    %14 = sbr.rel (0) target = $region13
  $region12: #{qgcn_forward.11} parent=0 // pred_region
    _
  $region13: #{qgcn_forward.11} parent=0 // pred_fallthru
    _
  // Predicated region
  $region14: #{qgcn_forward.11} parent=0 // pred_check
    _
  $region15: #{qgcn_forward.11} parent=0 // pred_check_branch
    %16 = sbr.rel (0) target = $region17
  $region16: #{qgcn_forward.11} parent=0 // pred_region
    _
  $region17: #{qgcn_forward.11} parent=0 // pred_fallthru
    _
  %v17 = vld [vmem:[%s0] sm:$0xf]
  %v18 = vld [vmem:[%s0 + $0x4] sm:$0xf]
  %v19 = vld [vmem:[%s0 + $0x8] sm:$0xf]
  %v20 = vld [vmem:[%s0 + $0xc] sm:$0xf]
  %v21 = vld [vmem:[%s0 + $0x10] sm:$0xf]
  %v22 = vld [vmem:[%s0 + $0x14] sm:$0xf]
  %v23 = vld [vmem:[%s0 + $0x18] sm:$0xf]
  %v24 = vld [vmem:[%s0 + $0x1c] sm:$0xf]
  %v25 = vld [vmem:[%s0 + $0x20] sm:$0xf]
  %v26 = vld [vmem:[%s0 + $0x24] sm:$0xf]
  %v27 = vld [vmem:[%s0 + $0x28] sm:$0xf]
  %v28 = vld [vmem:[%s0 + $0x2c] sm:$0xf]
  %v29 = vld [vmem:[%s0 + $0x30] sm:$0xf]
  %v30 = vld [vmem:[%s0 + $0x34] sm:$0xf]
  %v31 = vld [vmem:[%s0 + $0x38] sm:$0xf]
  %v32 = vld [vmem:[%s0 + $0x3c] sm:$0xf]
  %v33 = vld [vmem:[%s0 + $0x40] sm:$0xf]
  %v34 = vld [vmem:[%s0 + $0x44] sm:$0xf]
  %v35 = vld [vmem:[%s0 + $0x48] sm:$0xf]
  %v36 = vld [vmem:[%s0 + $0x4c] sm:$0xf]
  %v37 = vld [vmem:[%s0 + $0x50] sm:$0xf]
  %v38 = vld [vmem:[%s0 + $0x54] sm:$0xf]
  %v39 = vld [vmem:[%s0 + $0x58] sm:$0xf]
  %v40 = vld [vmem:[%s0 + $0x5c] sm:$0xf]
  %v41 = vld [vmem:[%s0 + $0x60] sm:$0xf]
  %v42 = vld [vmem:[%s0 + $0x64] sm:$0xf]
  %v43 = vld [vmem:[%s0 + $0x68] sm:$0xf]
  %v44 = vld [vmem:[%s0 + $0x6c] sm:$0xf]
  %v45 = vld [vmem:[%s0 + $0x70] sm:$0xf]
  %v46 = vld [vmem:[%s0 + $0x74] sm:$0xf]
  %v47 = vld [vmem:[%s0 + $0x78] sm:$0xf]
  %v48 = vld [vmem:[%s0 + $0x7c] sm:$0xf]
  %v49 = vunpack.c.l.bf16 %v17
  %v50 = vunpack.c.l.bf16 %v18
  %v51 = vunpack.c.l.bf16 %v19
  %v52 = vunpack.c.l.bf16 %v20
  %v53 = vunpack.c.l.bf16 %v21
  %v54 = vunpack.c.l.bf16 %v22
  %v55 = vunpack.c.l.bf16 %v23
  %v56 = vunpack.c.l.bf16 %v24
  %v57 = vunpack.c.l.bf16 %v25
  %v58 = vunpack.c.l.bf16 %v26
  %v59 = vunpack.c.l.bf16 %v27
  %v60 = vunpack.c.l.bf16 %v28
  %v61 = vunpack.c.l.bf16 %v29
  %v62 = vunpack.c.l.bf16 %v30
  %v63 = vunpack.c.l.bf16 %v31
  %v64 = vunpack.c.l.bf16 %v32
  %v65 = vunpack.c.l.bf16 %v33
  %v66 = vunpack.c.l.bf16 %v34
  %v67 = vunpack.c.l.bf16 %v35
  %v68 = vunpack.c.l.bf16 %v36
  %v69 = vunpack.c.l.bf16 %v37
  %v70 = vunpack.c.l.bf16 %v38
  %v71 = vunpack.c.l.bf16 %v39
  %v72 = vunpack.c.l.bf16 %v40
  %v73 = vunpack.c.l.bf16 %v41
  %v74 = vunpack.c.l.bf16 %v42
  %v75 = vunpack.c.l.bf16 %v43
  %v76 = vunpack.c.l.bf16 %v44
  %v77 = vunpack.c.l.bf16 %v45
  %v78 = vunpack.c.l.bf16 %v46
  %v79 = vunpack.c.l.bf16 %v47
  %v80 = vunpack.c.l.bf16 %v48
  %v81 = vld [vmem:[%s1] sm:$0x1]
  %v83 = vperm.slane %v81, 0
  %v85 = vmul.f32 %v49, %v83
  %v86 = vmul.f32 %v50, %v83
  %v87 = vmul.f32 %v51, %v83
  %v88 = vmul.f32 %v52, %v83
  %v89 = vmul.f32 %v53, %v83
  %v90 = vmul.f32 %v54, %v83
  %v91 = vmul.f32 %v55, %v83
  %v92 = vmul.f32 %v56, %v83
  %v93 = vmul.f32 %v57, %v83
  %v94 = vmul.f32 %v58, %v83
  %v95 = vmul.f32 %v59, %v83
  %v96 = vmul.f32 %v60, %v83
  %v97 = vmul.f32 %v61, %v83
  %v98 = vmul.f32 %v62, %v83
  %v99 = vmul.f32 %v63, %v83
  %v100 = vmul.f32 %v64, %v83
  %v101 = vmul.f32 %v65, %v83
  %v102 = vmul.f32 %v66, %v83
  %v103 = vmul.f32 %v67, %v83
  %v104 = vmul.f32 %v68, %v83
  %v105 = vmul.f32 %v69, %v83
  %v106 = vmul.f32 %v70, %v83
  %v107 = vmul.f32 %v71, %v83
  %v108 = vmul.f32 %v72, %v83
  %v109 = vmul.f32 %v73, %v83
  %v110 = vmul.f32 %v74, %v83
  %v111 = vmul.f32 %v75, %v83
  %v112 = vmul.f32 %v76, %v83
  %v113 = vmul.f32 %v77, %v83
  %v114 = vmul.f32 %v78, %v83
  %v115 = vmul.f32 %v79, %v83
  %v116 = vmul.f32 %v80, %v83
  %v117 = vld [vmem:[%s2] sm:$0x1]
  %v119 = vperm.slane %v117, 0
  %v121 = vadd.f32 %v85, %v119
  %v122 = vadd.f32 %v86, %v119
  %v123 = vadd.f32 %v87, %v119
  %v124 = vadd.f32 %v88, %v119
  %v125 = vadd.f32 %v89, %v119
  %v126 = vadd.f32 %v90, %v119
  %v127 = vadd.f32 %v91, %v119
  %v128 = vadd.f32 %v92, %v119
  %v129 = vadd.f32 %v93, %v119
  %v130 = vadd.f32 %v94, %v119
  %v131 = vadd.f32 %v95, %v119
  %v132 = vadd.f32 %v96, %v119
  %v133 = vadd.f32 %v97, %v119
  %v134 = vadd.f32 %v98, %v119
  %v135 = vadd.f32 %v99, %v119
  %v136 = vadd.f32 %v100, %v119
  %v137 = vadd.f32 %v101, %v119
  %v138 = vadd.f32 %v102, %v119
  %v139 = vadd.f32 %v103, %v119
  %v140 = vadd.f32 %v104, %v119
  %v141 = vadd.f32 %v105, %v119
  %v142 = vadd.f32 %v106, %v119
  %v143 = vadd.f32 %v107, %v119
  %v144 = vadd.f32 %v108, %v119
  %v145 = vadd.f32 %v109, %v119
  %v146 = vadd.f32 %v110, %v119
  %v147 = vadd.f32 %v111, %v119
  %v148 = vadd.f32 %v112, %v119
  %v149 = vadd.f32 %v113, %v119
  %v150 = vadd.f32 %v114, %v119
  %v151 = vadd.f32 %v115, %v119
  %v152 = vadd.f32 %v116, %v119
  %v153 = vmax.f32 %v121, 0.0
  %v154 = vmax.f32 %v122, 0.0
  %v155 = vmax.f32 %v123, 0.0
  %v156 = vmax.f32 %v124, 0.0
  %v157 = vmax.f32 %v125, 0.0
  %v158 = vmax.f32 %v126, 0.0
  %v159 = vmax.f32 %v127, 0.0
  %v160 = vmax.f32 %v128, 0.0
  %v161 = vmax.f32 %v129, 0.0
  %v162 = vmax.f32 %v130, 0.0
  %v163 = vmax.f32 %v131, 0.0
  %v164 = vmax.f32 %v132, 0.0
  %v165 = vmax.f32 %v133, 0.0
  %v166 = vmax.f32 %v134, 0.0
  %v167 = vmax.f32 %v135, 0.0
  %v168 = vmax.f32 %v136, 0.0
  %v169 = vmax.f32 %v137, 0.0
  %v170 = vmax.f32 %v138, 0.0
  %v171 = vmax.f32 %v139, 0.0
  %v172 = vmax.f32 %v140, 0.0
  %v173 = vmax.f32 %v141, 0.0
  %v174 = vmax.f32 %v142, 0.0
  %v175 = vmax.f32 %v143, 0.0
  %v176 = vmax.f32 %v144, 0.0
  %v177 = vmax.f32 %v145, 0.0
  %v178 = vmax.f32 %v146, 0.0
  %v179 = vmax.f32 %v147, 0.0
  %v180 = vmax.f32 %v148, 0.0
  %v181 = vmax.f32 %v149, 0.0
  %v182 = vmax.f32 %v150, 0.0
  %v183 = vmax.f32 %v151, 0.0
  %v184 = vmax.f32 %v152, 0.0
  %v185 = vld [vmem:[%s3] sm:$0xff]
  %v186 = vld [vmem:[%s3 + $0x8] sm:$0xff]
  %v187 = vld [vmem:[%s3 + $0x10] sm:$0xff]
  %v188 = vld [vmem:[%s3 + $0x18] sm:$0xff]
  %v189 = vld [vmem:[%s3 + $0x20] sm:$0xff]
  %v190 = vld [vmem:[%s3 + $0x28] sm:$0xff]
  %v191 = vld [vmem:[%s3 + $0x30] sm:$0xff]
  %v192 = vld [vmem:[%s3 + $0x38] sm:$0xff]
  %v193 = vld [vmem:[%s3 + $0x40] sm:$0xff]
  %v194 = vld [vmem:[%s3 + $0x48] sm:$0xff]
  %v195 = vld [vmem:[%s3 + $0x50] sm:$0xff]
  %v196 = vld [vmem:[%s3 + $0x58] sm:$0xff]
  %v197 = vld [vmem:[%s3 + $0x60] sm:$0xff]
  %v198 = vld [vmem:[%s3 + $0x68] sm:$0xff]
  %v199 = vld [vmem:[%s3 + $0x70] sm:$0xff]
  %v200 = vld [vmem:[%s3 + $0x78] sm:$0xff]
  %v201 = vld [vmem:[%s3 + $0x80] sm:$0xff]
  %v202 = vld [vmem:[%s3 + $0x88] sm:$0xff]
  %v203 = vld [vmem:[%s3 + $0x90] sm:$0xff]
  %v204 = vld [vmem:[%s3 + $0x98] sm:$0xff]
  %v205 = vld [vmem:[%s3 + $0xa0] sm:$0xff]
  %v206 = vld [vmem:[%s3 + $0xa8] sm:$0xff]
  %v207 = vld [vmem:[%s3 + $0xb0] sm:$0xff]
  %v208 = vld [vmem:[%s3 + $0xb8] sm:$0xff]
  %v209 = vld [vmem:[%s3 + $0xc0] sm:$0xff]
  %v210 = vld [vmem:[%s3 + $0xc8] sm:$0xff]
  %v211 = vld [vmem:[%s3 + $0xd0] sm:$0xff]
  %v212 = vld [vmem:[%s3 + $0xd8] sm:$0xff]
  %v213 = vld [vmem:[%s3 + $0xe0] sm:$0xff]
  %v214 = vld [vmem:[%s3 + $0xe8] sm:$0xff]
  %v215 = vld [vmem:[%s3 + $0xf0] sm:$0xff]
  %v216 = vld [vmem:[%s3 + $0xf8] sm:$0xff]
  %218 = vset.pattern.permute.xlu0 0
  %219 = vperm.xlu0 %218, %v185
  %v220 = vpop.permute.xlu0 %219
  %223 = vset.pattern.permute.xlu0 0
  %224 = vperm.xlu0 %223, %v186
  %v225 = vpop.permute.xlu0 %224
  %228 = vset.pattern.permute.xlu0 0
  %229 = vperm.xlu0 %228, %v187
  %v230 = vpop.permute.xlu0 %229
  %233 = vset.pattern.permute.xlu0 0
  %234 = vperm.xlu0 %233, %v188
  %v235 = vpop.permute.xlu0 %234
  %238 = vset.pattern.permute.xlu0 0
  %239 = vperm.xlu0 %238, %v189
  %v240 = vpop.permute.xlu0 %239
  %243 = vset.pattern.permute.xlu0 0
  %244 = vperm.xlu0 %243, %v190
  %v245 = vpop.permute.xlu0 %244
  %248 = vset.pattern.permute.xlu0 0
  %249 = vperm.xlu0 %248, %v191
  %v250 = vpop.permute.xlu0 %249
  %253 = vset.pattern.permute.xlu0 0
  %254 = vperm.xlu0 %253, %v192
  %v255 = vpop.permute.xlu0 %254
  %258 = vset.pattern.permute.xlu0 0
  %259 = vperm.xlu0 %258, %v193
  %v260 = vpop.permute.xlu0 %259
  %263 = vset.pattern.permute.xlu0 0
  %264 = vperm.xlu0 %263, %v194
  %v265 = vpop.permute.xlu0 %264
  %268 = vset.pattern.permute.xlu0 0
  %269 = vperm.xlu0 %268, %v195
  %v270 = vpop.permute.xlu0 %269
  %273 = vset.pattern.permute.xlu0 0
  %274 = vperm.xlu0 %273, %v196
  %v275 = vpop.permute.xlu0 %274
  %278 = vset.pattern.permute.xlu0 0
  %279 = vperm.xlu0 %278, %v197
  %v280 = vpop.permute.xlu0 %279
  %283 = vset.pattern.permute.xlu0 0
  %284 = vperm.xlu0 %283, %v198
  %v285 = vpop.permute.xlu0 %284
  %288 = vset.pattern.permute.xlu0 0
  %289 = vperm.xlu0 %288, %v199
  %v290 = vpop.permute.xlu0 %289
  %293 = vset.pattern.permute.xlu0 0
  %294 = vperm.xlu0 %293, %v200
  %v295 = vpop.permute.xlu0 %294
  %298 = vset.pattern.permute.xlu0 0
  %299 = vperm.xlu0 %298, %v201
  %v300 = vpop.permute.xlu0 %299
  %303 = vset.pattern.permute.xlu0 0
  %304 = vperm.xlu0 %303, %v202
  %v305 = vpop.permute.xlu0 %304
  %308 = vset.pattern.permute.xlu0 0
  %309 = vperm.xlu0 %308, %v203
  %v310 = vpop.permute.xlu0 %309
  %313 = vset.pattern.permute.xlu0 0
  %314 = vperm.xlu0 %313, %v204
  %v315 = vpop.permute.xlu0 %314
  %318 = vset.pattern.permute.xlu0 0
  %319 = vperm.xlu0 %318, %v205
  %v320 = vpop.permute.xlu0 %319
  %323 = vset.pattern.permute.xlu0 0
  %324 = vperm.xlu0 %323, %v206
  %v325 = vpop.permute.xlu0 %324
  %328 = vset.pattern.permute.xlu0 0
  %329 = vperm.xlu0 %328, %v207
  %v330 = vpop.permute.xlu0 %329
  %333 = vset.pattern.permute.xlu0 0
  %334 = vperm.xlu0 %333, %v208
  %v335 = vpop.permute.xlu0 %334
  %338 = vset.pattern.permute.xlu0 0
  %339 = vperm.xlu0 %338, %v209
  %v340 = vpop.permute.xlu0 %339
  %343 = vset.pattern.permute.xlu0 0
  %344 = vperm.xlu0 %343, %v210
  %v345 = vpop.permute.xlu0 %344
  %348 = vset.pattern.permute.xlu0 0
  %349 = vperm.xlu0 %348, %v211
  %v350 = vpop.permute.xlu0 %349
  %353 = vset.pattern.permute.xlu0 0
  %354 = vperm.xlu0 %353, %v212
  %v355 = vpop.permute.xlu0 %354
  %358 = vset.pattern.permute.xlu0 0
  %359 = vperm.xlu0 %358, %v213
  %v360 = vpop.permute.xlu0 %359
  %363 = vset.pattern.permute.xlu0 0
  %364 = vperm.xlu0 %363, %v214
  %v365 = vpop.permute.xlu0 %364
  %368 = vset.pattern.permute.xlu0 0
  %369 = vperm.xlu0 %368, %v215
  %v370 = vpop.permute.xlu0 %369
  %373 = vset.pattern.permute.xlu0 0
  %374 = vperm.xlu0 %373, %v216
  %v375 = vpop.permute.xlu0 %374
  %v377 = vmul.f32 %v153, %v220
  %v378 = vmul.f32 %v154, %v225
  %v379 = vmul.f32 %v155, %v230
  %v380 = vmul.f32 %v156, %v235
  %v381 = vmul.f32 %v157, %v240
  %v382 = vmul.f32 %v158, %v245
  %v383 = vmul.f32 %v159, %v250
  %v384 = vmul.f32 %v160, %v255
  %v385 = vmul.f32 %v161, %v260
  %v386 = vmul.f32 %v162, %v265
  %v387 = vmul.f32 %v163, %v270
  %v388 = vmul.f32 %v164, %v275
  %v389 = vmul.f32 %v165, %v280
  %v390 = vmul.f32 %v166, %v285
  %v391 = vmul.f32 %v167, %v290
  %v392 = vmul.f32 %v168, %v295
  %v393 = vmul.f32 %v169, %v300
  %v394 = vmul.f32 %v170, %v305
  %v395 = vmul.f32 %v171, %v310
  %v396 = vmul.f32 %v172, %v315
  %v397 = vmul.f32 %v173, %v320
  %v398 = vmul.f32 %v174, %v325
  %v399 = vmul.f32 %v175, %v330
  %v400 = vmul.f32 %v176, %v335
  %v401 = vmul.f32 %v177, %v340
  %v402 = vmul.f32 %v178, %v345
  %v403 = vmul.f32 %v179, %v350
  %v404 = vmul.f32 %v180, %v355
  %v405 = vmul.f32 %v181, %v360
  %v406 = vmul.f32 %v182, %v365
  %v407 = vmul.f32 %v183, %v370
  %v408 = vmul.f32 %v184, %v375
  %v409 = vpack.c.bf16 %v377, %v377
  %v410 = vpack.c.bf16 %v378, %v378
  %v411 = vpack.c.bf16 %v379, %v379
  %v412 = vpack.c.bf16 %v380, %v380
  %v413 = vpack.c.bf16 %v381, %v381
  %v414 = vpack.c.bf16 %v382, %v382
  %v415 = vpack.c.bf16 %v383, %v383
  %v416 = vpack.c.bf16 %v384, %v384
  %v417 = vpack.c.bf16 %v385, %v385
  %v418 = vpack.c.bf16 %v386, %v386
  %v419 = vpack.c.bf16 %v387, %v387
  %v420 = vpack.c.bf16 %v388, %v388
  %v421 = vpack.c.bf16 %v389, %v389
  %v422 = vpack.c.bf16 %v390, %v390
  %v423 = vpack.c.bf16 %v391, %v391
  %v424 = vpack.c.bf16 %v392, %v392
  %v425 = vpack.c.bf16 %v393, %v393
  %v426 = vpack.c.bf16 %v394, %v394
  %v427 = vpack.c.bf16 %v395, %v395
  %v428 = vpack.c.bf16 %v396, %v396
  %v429 = vpack.c.bf16 %v397, %v397
  %v430 = vpack.c.bf16 %v398, %v398
  %v431 = vpack.c.bf16 %v399, %v399
  %v432 = vpack.c.bf16 %v400, %v400
  %v433 = vpack.c.bf16 %v401, %v401
  %v434 = vpack.c.bf16 %v402, %v402
  %v435 = vpack.c.bf16 %v403, %v403
  %v436 = vpack.c.bf16 %v404, %v404
  %v437 = vpack.c.bf16 %v405, %v405
  %v438 = vpack.c.bf16 %v406, %v406
  %v439 = vpack.c.bf16 %v407, %v407
  %v440 = vpack.c.bf16 %v408, %v408
  %441 = vst [vmem:[%s4] sm:$0xf] %v409
  %442 = vst [vmem:[%s4 + $0x4] sm:$0xf] %v410
  %443 = vst [vmem:[%s4 + $0x8] sm:$0xf] %v411
  %444 = vst [vmem:[%s4 + $0xc] sm:$0xf] %v412
  %445 = vst [vmem:[%s4 + $0x10] sm:$0xf] %v413
  %446 = vst [vmem:[%s4 + $0x14] sm:$0xf] %v414
  %447 = vst [vmem:[%s4 + $0x18] sm:$0xf] %v415
  %448 = vst [vmem:[%s4 + $0x1c] sm:$0xf] %v416
  %449 = vst [vmem:[%s4 + $0x20] sm:$0xf] %v417
  %450 = vst [vmem:[%s4 + $0x24] sm:$0xf] %v418
  %451 = vst [vmem:[%s4 + $0x28] sm:$0xf] %v419
  %452 = vst [vmem:[%s4 + $0x2c] sm:$0xf] %v420
  %453 = vst [vmem:[%s4 + $0x30] sm:$0xf] %v421
  %454 = vst [vmem:[%s4 + $0x34] sm:$0xf] %v422
  %455 = vst [vmem:[%s4 + $0x38] sm:$0xf] %v423
  %456 = vst [vmem:[%s4 + $0x3c] sm:$0xf] %v424
  %457 = vst [vmem:[%s4 + $0x40] sm:$0xf] %v425
  %458 = vst [vmem:[%s4 + $0x44] sm:$0xf] %v426
  %459 = vst [vmem:[%s4 + $0x48] sm:$0xf] %v427
  %460 = vst [vmem:[%s4 + $0x4c] sm:$0xf] %v428
  %461 = vst [vmem:[%s4 + $0x50] sm:$0xf] %v429
  %462 = vst [vmem:[%s4 + $0x54] sm:$0xf] %v430
  %463 = vst [vmem:[%s4 + $0x58] sm:$0xf] %v431
  %464 = vst [vmem:[%s4 + $0x5c] sm:$0xf] %v432
  %465 = vst [vmem:[%s4 + $0x60] sm:$0xf] %v433
  %466 = vst [vmem:[%s4 + $0x64] sm:$0xf] %v434
  %467 = vst [vmem:[%s4 + $0x68] sm:$0xf] %v435
  %468 = vst [vmem:[%s4 + $0x6c] sm:$0xf] %v436
  %469 = vst [vmem:[%s4 + $0x70] sm:$0xf] %v437
  %470 = vst [vmem:[%s4 + $0x74] sm:$0xf] %v438
  %471 = vst [vmem:[%s4 + $0x78] sm:$0xf] %v439
  %472 = vst [vmem:[%s4 + $0x7c] sm:$0xf] %v440
  // Predicated region
  $region18: #{qgcn_forward.11} parent=0 // pred_check
    _
  $region19: #{qgcn_forward.11} parent=0 // pred_check_branch
    %474 = sbr.rel (0) target = $region21
  $region20: #{qgcn_forward.11} parent=0 // pred_region
    _
  $region21: #{qgcn_forward.11} parent=0 // pred_fallthru
    _
  // Predicated region
  $region22: #{qgcn_forward.11} parent=0 // pred_check
    _
  $region23: #{qgcn_forward.11} parent=0 // pred_check_branch
    %476 = sbr.rel (0) target = $region25
  $region24: #{qgcn_forward.11} parent=0 // pred_region
    _
  $region25: #{qgcn_forward.11} parent=0 // pred_fallthru
    _

// kernel: qgcn_forward.10
$region0: #{qgcn_forward.10}
  #allocation0 [shape = 'u32[]', space=smem, size = 0x4, offset = 0x4, fixed_abs, tag = 'smem constant byte address 0x4 - core index']
  #allocation1 [shape = 'u32[72,128]{1,0:T(1,128)}', space=vmem, size = 0x9000, scoped, tag = 'internal scratch']
  %s0 = inlined_call_operand.vmem [shape: bf16[256,128], index: 0, kind: input, shape index: {}]
  %s1 = inlined_call_operand.vmem [shape: bf16[128,128], index: 1, kind: input, shape index: {}]
  %s2 = inlined_call_operand.vmem [shape: bf16[256,128], index: 2, kind: input, shape index: {}]
  %s3 = inlined_call_operand.vmem [shape: bf16[128,128], index: 3, kind: input, shape index: {}]
  %s4 = inlined_call_operand.vmem [shape: f32[256,1], index: 4, kind: input, shape index: {}]
  %s5 = inlined_call_operand.vmem [shape: bf16[256,128], index: 5, kind: output, shape index: {0}]
  %s6 = inlined_call_operand.vmem [shape: f32[1,128], index: 6, kind: output, shape index: {1}]
  %s7 = inlined_call_operand.vmem [shape: f32[1,128], index: 7, kind: output, shape index: {2}]
  %8 = xla_tuple %s5, %s6, %s7
  %s9 = sld [smem:[#allocation0]]
  $region50: #{qgcn_forward.10} parent=0
    _
  %s11 = ssub.s32 1, %s9
  %s12 = scalar_select 0, %s11, %s9
  // Predicated region
  $region2: #{qgcn_forward.10} parent=0 // pred_check
    _
  $region3: #{qgcn_forward.10} parent=0 // pred_check_branch
    %14 = sbr.rel (0) target = $region5
  $region4: #{qgcn_forward.10} parent=0 // pred_region
    _
  $region5: #{qgcn_forward.10} parent=0 // pred_fallthru
    _
  // Predicated region
  $region6: #{qgcn_forward.10} parent=0 // pred_check
    _
  $region7: #{qgcn_forward.10} parent=0 // pred_check_branch
    %16 = sbr.rel (0) target = $region9
  $region8: #{qgcn_forward.10} parent=0 // pred_region
    _
  $region9: #{qgcn_forward.10} parent=0 // pred_fallthru
    _
  // Predicated region
  $region10: #{qgcn_forward.10} parent=0 // pred_check
    _
  $region11: #{qgcn_forward.10} parent=0 // pred_check_branch
    %18 = sbr.rel (0) target = $region13
  $region12: #{qgcn_forward.10} parent=0 // pred_region
    _
  $region13: #{qgcn_forward.10} parent=0 // pred_fallthru
    _
  // Predicated region
  $region14: #{qgcn_forward.10} parent=0 // pred_check
    _
  $region15: #{qgcn_forward.10} parent=0 // pred_check_branch
    %20 = sbr.rel (0) target = $region17
  $region16: #{qgcn_forward.10} parent=0 // pred_region
    _
  $region17: #{qgcn_forward.10} parent=0 // pred_fallthru
    _
  // Predicated region
  $region18: #{qgcn_forward.10} parent=0 // pred_check
    _
  $region19: #{qgcn_forward.10} parent=0 // pred_check_branch
    %22 = sbr.rel (0) target = $region21
  $region20: #{qgcn_forward.10} parent=0 // pred_region
    _
  $region21: #{qgcn_forward.10} parent=0 // pred_fallthru
    _
  %p23 = scmp.eq.s32.totalorder 0, 0
  %p24 = scmp.eq.s32.totalorder 0, 0
  %p25 = pnand %p23, %p24
  %p26 = pneg %p25
  %p27 = scmp.eq.s32.totalorder 0, 0
  %p28 = pnand %p26, %p27
  %p29 = pneg %p28
  // Predicated region
  $region22: #{qgcn_forward.10} parent=0 // pred_check
    _
  $region23: #{qgcn_forward.10} parent=0 // pred_check_branch
    %31 = sbr.rel (%p28) target = $region25
  $region24: #{qgcn_forward.10} parent=0 // pred_region
    %32 = vst [vmem:[%s6] sm:$0x1] 0.0
    %33 = vst [vmem:[%s7] sm:$0x1] 0.0
  $region25: #{qgcn_forward.10} parent=0 // pred_fallthru
    _
  %v34 = vld [vmem:[%s0] sm:$0xf]
  %v35 = vld [vmem:[%s0 + $0x4] sm:$0xf]
  %v36 = vld [vmem:[%s0 + $0x8] sm:$0xf]
  %v37 = vld [vmem:[%s0 + $0xc] sm:$0xf]
  %v38 = vld [vmem:[%s0 + $0x10] sm:$0xf]
  %v39 = vld [vmem:[%s0 + $0x14] sm:$0xf]
  %v40 = vld [vmem:[%s0 + $0x18] sm:$0xf]
  %v41 = vld [vmem:[%s0 + $0x1c] sm:$0xf]
  %v42 = vld [vmem:[%s0 + $0x20] sm:$0xf]
  %v43 = vld [vmem:[%s0 + $0x24] sm:$0xf]
  %v44 = vld [vmem:[%s0 + $0x28] sm:$0xf]
  %v45 = vld [vmem:[%s0 + $0x2c] sm:$0xf]
  %v46 = vld [vmem:[%s0 + $0x30] sm:$0xf]
  %v47 = vld [vmem:[%s0 + $0x34] sm:$0xf]
  %v48 = vld [vmem:[%s0 + $0x38] sm:$0xf]
  %v49 = vld [vmem:[%s0 + $0x3c] sm:$0xf]
  %v50 = vld [vmem:[%s0 + $0x40] sm:$0xf]
  %v51 = vld [vmem:[%s0 + $0x44] sm:$0xf]
  %v52 = vld [vmem:[%s0 + $0x48] sm:$0xf]
  %v53 = vld [vmem:[%s0 + $0x4c] sm:$0xf]
  %v54 = vld [vmem:[%s0 + $0x50] sm:$0xf]
  %v55 = vld [vmem:[%s0 + $0x54] sm:$0xf]
  %v56 = vld [vmem:[%s0 + $0x58] sm:$0xf]
  %v57 = vld [vmem:[%s0 + $0x5c] sm:$0xf]
  %v58 = vld [vmem:[%s0 + $0x60] sm:$0xf]
  %v59 = vld [vmem:[%s0 + $0x64] sm:$0xf]
  %v60 = vld [vmem:[%s0 + $0x68] sm:$0xf]
  %v61 = vld [vmem:[%s0 + $0x6c] sm:$0xf]
  %v62 = vld [vmem:[%s0 + $0x70] sm:$0xf]
  %v63 = vld [vmem:[%s0 + $0x74] sm:$0xf]
  %v64 = vld [vmem:[%s0 + $0x78] sm:$0xf]
  %v65 = vld [vmem:[%s0 + $0x7c] sm:$0xf]
  %v66 = vld [vmem:[%s1] sm:$0xf]
  %v67 = vld [vmem:[%s1 + $0x4] sm:$0xf]
  %v68 = vld [vmem:[%s1 + $0x8] sm:$0xf]
  %v69 = vld [vmem:[%s1 + $0xc] sm:$0xf]
  %v70 = vld [vmem:[%s1 + $0x10] sm:$0xf]
  %v71 = vld [vmem:[%s1 + $0x14] sm:$0xf]
  %v72 = vld [vmem:[%s1 + $0x18] sm:$0xf]
  %v73 = vld [vmem:[%s1 + $0x1c] sm:$0xf]
  %v74 = vld [vmem:[%s1 + $0x20] sm:$0xf]
  %v75 = vld [vmem:[%s1 + $0x24] sm:$0xf]
  %v76 = vld [vmem:[%s1 + $0x28] sm:$0xf]
  %v77 = vld [vmem:[%s1 + $0x2c] sm:$0xf]
  %v78 = vld [vmem:[%s1 + $0x30] sm:$0xf]
  %v79 = vld [vmem:[%s1 + $0x34] sm:$0xf]
  %v80 = vld [vmem:[%s1 + $0x38] sm:$0xf]
  %v81 = vld [vmem:[%s1 + $0x3c] sm:$0xf]
  %v82 = vld [vmem:[%s2] sm:$0xf]
  %v83 = vld [vmem:[%s2 + $0x4] sm:$0xf]
  %v84 = vld [vmem:[%s2 + $0x8] sm:$0xf]
  %v85 = vld [vmem:[%s2 + $0xc] sm:$0xf]
  %v86 = vld [vmem:[%s2 + $0x10] sm:$0xf]
  %v87 = vld [vmem:[%s2 + $0x14] sm:$0xf]
  %v88 = vld [vmem:[%s2 + $0x18] sm:$0xf]
  %v89 = vld [vmem:[%s2 + $0x1c] sm:$0xf]
  %v90 = vld [vmem:[%s2 + $0x20] sm:$0xf]
  %v91 = vld [vmem:[%s2 + $0x24] sm:$0xf]
  %v92 = vld [vmem:[%s2 + $0x28] sm:$0xf]
  %v93 = vld [vmem:[%s2 + $0x2c] sm:$0xf]
  %v94 = vld [vmem:[%s2 + $0x30] sm:$0xf]
  %v95 = vld [vmem:[%s2 + $0x34] sm:$0xf]
  %v96 = vld [vmem:[%s2 + $0x38] sm:$0xf]
  %v97 = vld [vmem:[%s2 + $0x3c] sm:$0xf]
  %v98 = vld [vmem:[%s2 + $0x40] sm:$0xf]
  %v99 = vld [vmem:[%s2 + $0x44] sm:$0xf]
  %v100 = vld [vmem:[%s2 + $0x48] sm:$0xf]
  %v101 = vld [vmem:[%s2 + $0x4c] sm:$0xf]
  %v102 = vld [vmem:[%s2 + $0x50] sm:$0xf]
  %v103 = vld [vmem:[%s2 + $0x54] sm:$0xf]
  %v104 = vld [vmem:[%s2 + $0x58] sm:$0xf]
  %v105 = vld [vmem:[%s2 + $0x5c] sm:$0xf]
  %v106 = vld [vmem:[%s2 + $0x60] sm:$0xf]
  %v107 = vld [vmem:[%s2 + $0x64] sm:$0xf]
  %v108 = vld [vmem:[%s2 + $0x68] sm:$0xf]
  %v109 = vld [vmem:[%s2 + $0x6c] sm:$0xf]
  %v110 = vld [vmem:[%s2 + $0x70] sm:$0xf]
  %v111 = vld [vmem:[%s2 + $0x74] sm:$0xf]
  %v112 = vld [vmem:[%s2 + $0x78] sm:$0xf]
  %v113 = vld [vmem:[%s2 + $0x7c] sm:$0xf]
  %v114 = vld [vmem:[%s3] sm:$0xf]
  %v115 = vld [vmem:[%s3 + $0x4] sm:$0xf]
  %v116 = vld [vmem:[%s3 + $0x8] sm:$0xf]
  %v117 = vld [vmem:[%s3 + $0xc] sm:$0xf]
  %v118 = vld [vmem:[%s3 + $0x10] sm:$0xf]
  %v119 = vld [vmem:[%s3 + $0x14] sm:$0xf]
  %v120 = vld [vmem:[%s3 + $0x18] sm:$0xf]
  %v121 = vld [vmem:[%s3 + $0x1c] sm:$0xf]
  %v122 = vld [vmem:[%s3 + $0x20] sm:$0xf]
  %v123 = vld [vmem:[%s3 + $0x24] sm:$0xf]
  %v124 = vld [vmem:[%s3 + $0x28] sm:$0xf]
  %v125 = vld [vmem:[%s3 + $0x2c] sm:$0xf]
  %v126 = vld [vmem:[%s3 + $0x30] sm:$0xf]
  %v127 = vld [vmem:[%s3 + $0x34] sm:$0xf]
  %v128 = vld [vmem:[%s3 + $0x38] sm:$0xf]
  %v129 = vld [vmem:[%s3 + $0x3c] sm:$0xf]
  %v162 = vunpack.c.l.b16 %v82
  %v163 = vunpack.c.l.b16 %v83
  %v164 = vunpack.c.l.b16 %v84
  %v165 = vunpack.c.l.b16 %v85
  %v166 = vunpack.c.l.b16 %v86
  %v167 = vunpack.c.l.b16 %v87
  %v168 = vunpack.c.l.b16 %v88
  %v169 = vunpack.c.l.b16 %v89
  %v170 = vunpack.c.l.b16 %v90
  %v171 = vunpack.c.l.b16 %v91
  %v172 = vunpack.c.l.b16 %v92
  %v173 = vunpack.c.l.b16 %v93
  %v174 = vunpack.c.l.b16 %v94
  %v175 = vunpack.c.l.b16 %v95
  %v176 = vunpack.c.l.b16 %v96
  %v177 = vunpack.c.l.b16 %v97
  %v178 = vunpack.c.l.b16 %v98
  %v179 = vunpack.c.l.b16 %v99
  %v180 = vunpack.c.l.b16 %v100
  %v181 = vunpack.c.l.b16 %v101
  %v182 = vunpack.c.l.b16 %v102
  %v183 = vunpack.c.l.b16 %v103
  %v184 = vunpack.c.l.b16 %v104
  %v185 = vunpack.c.l.b16 %v105
  %v186 = vunpack.c.l.b16 %v106
  %v187 = vunpack.c.l.b16 %v107
  %v188 = vunpack.c.l.b16 %v108
  %v189 = vunpack.c.l.b16 %v109
  %v190 = vunpack.c.l.b16 %v110
  %v191 = vunpack.c.l.b16 %v111
  %v192 = vunpack.c.l.b16 %v112
  %v193 = vunpack.c.l.b16 %v113
  %v194 = vpack.c.b16 %v163, %v162
  %v195 = vpack.c.b16 %v165, %v164
  %v196 = vpack.c.b16 %v167, %v166
  %v197 = vpack.c.b16 %v169, %v168
  %v198 = vpack.c.b16 %v171, %v170
  %v199 = vpack.c.b16 %v173, %v172
  %v200 = vpack.c.b16 %v175, %v174
  %v201 = vpack.c.b16 %v177, %v176
  %v202 = vpack.c.b16 %v179, %v178
  %v203 = vpack.c.b16 %v181, %v180
  %v204 = vpack.c.b16 %v183, %v182
  %v205 = vpack.c.b16 %v185, %v184
  %v206 = vpack.c.b16 %v187, %v186
  %v207 = vpack.c.b16 %v189, %v188
  %v208 = vpack.c.b16 %v191, %v190
  %v209 = vpack.c.b16 %v193, %v192
  %v242 = vunpack.c.l.b16 %v114
  %v243 = vunpack.c.l.b16 %v115
  %v244 = vunpack.c.l.b16 %v116
  %v245 = vunpack.c.l.b16 %v117
  %v246 = vunpack.c.l.b16 %v118
  %v247 = vunpack.c.l.b16 %v119
  %v248 = vunpack.c.l.b16 %v120
  %v249 = vunpack.c.l.b16 %v121
  %v250 = vunpack.c.l.b16 %v122
  %v251 = vunpack.c.l.b16 %v123
  %v252 = vunpack.c.l.b16 %v124
  %v253 = vunpack.c.l.b16 %v125
  %v254 = vunpack.c.l.b16 %v126
  %v255 = vunpack.c.l.b16 %v127
  %v256 = vunpack.c.l.b16 %v128
  %v257 = vunpack.c.l.b16 %v129
  %v258 = vpack.c.b16 %v243, %v242
  %v259 = vpack.c.b16 %v245, %v244
  %v260 = vpack.c.b16 %v247, %v246
  %v261 = vpack.c.b16 %v249, %v248
  %v262 = vpack.c.b16 %v251, %v250
  %v263 = vpack.c.b16 %v253, %v252
  %v264 = vpack.c.b16 %v255, %v254
  %v265 = vpack.c.b16 %v257, %v256
  %274 = vmatpush.bf16.msra.mxu0 %v265
  %275 = vmatpush.bf16.msra.mxu0 %v264
  %276 = vmatpush.bf16.msra.mxu0 %v263
  %277 = vmatpush.bf16.msra.mxu0 %v262
  %278 = vmatpush.bf16.msra.mxu0 %v261
  %279 = vmatpush.bf16.msra.mxu0 %v260
  %280 = vmatpush.bf16.msra.mxu0 %v259
  %281 = vmatpush.bf16.msra.mxu0 %v258
  %282 = vmatmul.bf16.gmra.mxu0 %v194
  %v283 = vpop.f32.mrf.mxu0
  %v284 = vadd.f32 0.0, %v283
  %v285 = vpop.f32.mrf.mxu0
  %v286 = vadd.f32 0.0, %v285
  %287 = vmatmul.bf16.gmra.mxu0 %v195
  %v288 = vpop.f32.mrf.mxu0
  %v289 = vadd.f32 0.0, %v288
  %v290 = vpop.f32.mrf.mxu0
  %v291 = vadd.f32 0.0, %v290
  %292 = vmatmul.bf16.gmra.mxu0 %v196
  %v293 = vpop.f32.mrf.mxu0
  %v294 = vadd.f32 0.0, %v293
  %v295 = vpop.f32.mrf.mxu0
  %v296 = vadd.f32 0.0, %v295
  %297 = vmatmul.bf16.gmra.mxu0 %v197
  %v298 = vpop.f32.mrf.mxu0
  %v299 = vadd.f32 0.0, %v298
  %v300 = vpop.f32.mrf.mxu0
  %v301 = vadd.f32 0.0, %v300
  %302 = vmatmul.bf16.gmra.mxu0 %v198
  %v303 = vpop.f32.mrf.mxu0
  %v304 = vadd.f32 0.0, %v303
  %v305 = vpop.f32.mrf.mxu0
  %v306 = vadd.f32 0.0, %v305
  %307 = vmatmul.bf16.gmra.mxu0 %v199
  %v308 = vpop.f32.mrf.mxu0
  %v309 = vadd.f32 0.0, %v308
  %v310 = vpop.f32.mrf.mxu0
  %v311 = vadd.f32 0.0, %v310
  %312 = vmatmul.bf16.gmra.mxu0 %v200
  %v313 = vpop.f32.mrf.mxu0
  %v314 = vadd.f32 0.0, %v313
  %v315 = vpop.f32.mrf.mxu0
  %v316 = vadd.f32 0.0, %v315
  %317 = vmatmul.bf16.gmra.mxu0 %v201
  %v318 = vpop.f32.mrf.mxu0
  %v319 = vadd.f32 0.0, %v318
  %v320 = vpop.f32.mrf.mxu0
  %v321 = vadd.f32 0.0, %v320
  %322 = vmatmul.bf16.gmra.mxu0 %v202
  %v323 = vpop.f32.mrf.mxu0
  %v324 = vadd.f32 0.0, %v323
  %v325 = vpop.f32.mrf.mxu0
  %v326 = vadd.f32 0.0, %v325
  %327 = vmatmul.bf16.gmra.mxu0 %v203
  %v328 = vpop.f32.mrf.mxu0
  %v329 = vadd.f32 0.0, %v328
  %v330 = vpop.f32.mrf.mxu0
  %v331 = vadd.f32 0.0, %v330
  %332 = vmatmul.bf16.gmra.mxu0 %v204
  %v333 = vpop.f32.mrf.mxu0
  %v334 = vadd.f32 0.0, %v333
  %v335 = vpop.f32.mrf.mxu0
  %v336 = vadd.f32 0.0, %v335
  %337 = vmatmul.bf16.gmra.mxu0 %v205
  %v338 = vpop.f32.mrf.mxu0
  %v339 = vadd.f32 0.0, %v338
  %v340 = vpop.f32.mrf.mxu0
  %v341 = vadd.f32 0.0, %v340
  %342 = vmatmul.bf16.gmra.mxu0 %v206
  %v343 = vpop.f32.mrf.mxu0
  %v344 = vadd.f32 0.0, %v343
  %v345 = vpop.f32.mrf.mxu0
  %v346 = vadd.f32 0.0, %v345
  %347 = vmatmul.bf16.gmra.mxu0 %v207
  %v348 = vpop.f32.mrf.mxu0
  %v349 = vadd.f32 0.0, %v348
  %v350 = vpop.f32.mrf.mxu0
  %v351 = vadd.f32 0.0, %v350
  %352 = vmatmul.bf16.gmra.mxu0 %v208
  %v353 = vpop.f32.mrf.mxu0
  %v354 = vadd.f32 0.0, %v353
  %v355 = vpop.f32.mrf.mxu0
  %v356 = vadd.f32 0.0, %v355
  %357 = vmatmul.bf16.gmra.mxu0 %v209
  %v358 = vpop.f32.mrf.mxu0
  %v359 = vadd.f32 0.0, %v358
  %v360 = vpop.f32.mrf.mxu0
  %v361 = vadd.f32 0.0, %v360
  %362 = vdwg.mxu0
  %v395 = vunpack.c.l.b16 %v34
  %v396 = vunpack.c.l.b16 %v35
  %v397 = vunpack.c.l.b16 %v36
  %v398 = vunpack.c.l.b16 %v37
  %v399 = vunpack.c.l.b16 %v38
  %v400 = vunpack.c.l.b16 %v39
  %v401 = vunpack.c.l.b16 %v40
  %v402 = vunpack.c.l.b16 %v41
  %v403 = vunpack.c.l.b16 %v42
  %v404 = vunpack.c.l.b16 %v43
  %v405 = vunpack.c.l.b16 %v44
  %v406 = vunpack.c.l.b16 %v45
  %v407 = vunpack.c.l.b16 %v46
  %v408 = vunpack.c.l.b16 %v47
  %v409 = vunpack.c.l.b16 %v48
  %v410 = vunpack.c.l.b16 %v49
  %v411 = vunpack.c.l.b16 %v50
  %v412 = vunpack.c.l.b16 %v51
  %v413 = vunpack.c.l.b16 %v52
  %v414 = vunpack.c.l.b16 %v53
  %v415 = vunpack.c.l.b16 %v54
  %v416 = vunpack.c.l.b16 %v55
  %v417 = vunpack.c.l.b16 %v56
  %v418 = vunpack.c.l.b16 %v57
  %v419 = vunpack.c.l.b16 %v58
  %v420 = vunpack.c.l.b16 %v59
  %v421 = vunpack.c.l.b16 %v60
  %v422 = vunpack.c.l.b16 %v61
  %v423 = vunpack.c.l.b16 %v62
  %v424 = vunpack.c.l.b16 %v63
  %v425 = vunpack.c.l.b16 %v64
  %v426 = vunpack.c.l.b16 %v65
  %v427 = vpack.c.b16 %v396, %v395
  %v428 = vpack.c.b16 %v398, %v397
  %v429 = vpack.c.b16 %v400, %v399
  %v430 = vpack.c.b16 %v402, %v401
  %v431 = vpack.c.b16 %v404, %v403
  %v432 = vpack.c.b16 %v406, %v405
  %v433 = vpack.c.b16 %v408, %v407
  %v434 = vpack.c.b16 %v410, %v409
  %v435 = vpack.c.b16 %v412, %v411
  %v436 = vpack.c.b16 %v414, %v413
  %v437 = vpack.c.b16 %v416, %v415
  %v438 = vpack.c.b16 %v418, %v417
  %v439 = vpack.c.b16 %v420, %v419
  %v440 = vpack.c.b16 %v422, %v421
  %v441 = vpack.c.b16 %v424, %v423
  %v442 = vpack.c.b16 %v426, %v425
  %v475 = vunpack.c.l.b16 %v66
  %v476 = vunpack.c.l.b16 %v67
  %v477 = vunpack.c.l.b16 %v68
  %v478 = vunpack.c.l.b16 %v69
  %v479 = vunpack.c.l.b16 %v70
  %v480 = vunpack.c.l.b16 %v71
  %v481 = vunpack.c.l.b16 %v72
  %v482 = vunpack.c.l.b16 %v73
  %v483 = vunpack.c.l.b16 %v74
  %v484 = vunpack.c.l.b16 %v75
  %v485 = vunpack.c.l.b16 %v76
  %v486 = vunpack.c.l.b16 %v77
  %v487 = vunpack.c.l.b16 %v78
  %v488 = vunpack.c.l.b16 %v79
  %v489 = vunpack.c.l.b16 %v80
  %v490 = vunpack.c.l.b16 %v81
  %v491 = vpack.c.b16 %v476, %v475
  %v492 = vpack.c.b16 %v478, %v477
  %v493 = vpack.c.b16 %v480, %v479
  %v494 = vpack.c.b16 %v482, %v481
  %v495 = vpack.c.b16 %v484, %v483
  %v496 = vpack.c.b16 %v486, %v485
  %v497 = vpack.c.b16 %v488, %v487
  %v498 = vpack.c.b16 %v490, %v489
  %507 = vmatpush.bf16.msra.mxu0 %v498
  %508 = vmatpush.bf16.msra.mxu0 %v497
  %509 = vmatpush.bf16.msra.mxu0 %v496
  %510 = vmatpush.bf16.msra.mxu0 %v495
  %511 = vmatpush.bf16.msra.mxu0 %v494
  %512 = vmatpush.bf16.msra.mxu0 %v493
  %513 = vmatpush.bf16.msra.mxu0 %v492
  %514 = vmatpush.bf16.msra.mxu0 %v491
  %515 = vmatmul.bf16.gmra.mxu0 %v427
  %v516 = vpop.f32.mrf.mxu0
  %v517 = vadd.f32 %v284, %v516
  %v518 = vpop.f32.mrf.mxu0
  %v519 = vadd.f32 %v286, %v518
  %520 = vmatmul.bf16.gmra.mxu0 %v428
  %v521 = vpop.f32.mrf.mxu0
  %v522 = vadd.f32 %v289, %v521
  %v523 = vpop.f32.mrf.mxu0
  %v524 = vadd.f32 %v291, %v523
  %525 = vmatmul.bf16.gmra.mxu0 %v429
  %v526 = vpop.f32.mrf.mxu0
  %v527 = vadd.f32 %v294, %v526
  %v528 = vpop.f32.mrf.mxu0
  %v529 = vadd.f32 %v296, %v528
  %530 = vmatmul.bf16.gmra.mxu0 %v430
  %v531 = vpop.f32.mrf.mxu0
  %v532 = vadd.f32 %v299, %v531
  %v533 = vpop.f32.mrf.mxu0
  %v534 = vadd.f32 %v301, %v533
  %535 = vmatmul.bf16.gmra.mxu0 %v431
  %v536 = vpop.f32.mrf.mxu0
  %v537 = vadd.f32 %v304, %v536
  %v538 = vpop.f32.mrf.mxu0
  %v539 = vadd.f32 %v306, %v538
  %540 = vmatmul.bf16.gmra.mxu0 %v432
  %v541 = vpop.f32.mrf.mxu0
  %v542 = vadd.f32 %v309, %v541
  %v543 = vpop.f32.mrf.mxu0
  %v544 = vadd.f32 %v311, %v543
  %545 = vmatmul.bf16.gmra.mxu0 %v433
  %v546 = vpop.f32.mrf.mxu0
  %v547 = vadd.f32 %v314, %v546
  %v548 = vpop.f32.mrf.mxu0
  %v549 = vadd.f32 %v316, %v548
  %550 = vmatmul.bf16.gmra.mxu0 %v434
  %v551 = vpop.f32.mrf.mxu0
  %v552 = vadd.f32 %v319, %v551
  %v553 = vpop.f32.mrf.mxu0
  %v554 = vadd.f32 %v321, %v553
  %555 = vmatmul.bf16.gmra.mxu0 %v435
  %v556 = vpop.f32.mrf.mxu0
  %v557 = vadd.f32 %v324, %v556
  %v558 = vpop.f32.mrf.mxu0
  %v559 = vadd.f32 %v326, %v558
  %560 = vmatmul.bf16.gmra.mxu0 %v436
  %v561 = vpop.f32.mrf.mxu0
  %v562 = vadd.f32 %v329, %v561
  %v563 = vpop.f32.mrf.mxu0
  %v564 = vadd.f32 %v331, %v563
  %565 = vmatmul.bf16.gmra.mxu0 %v437
  %v566 = vpop.f32.mrf.mxu0
  %v567 = vadd.f32 %v334, %v566
  %v568 = vpop.f32.mrf.mxu0
  %v569 = vadd.f32 %v336, %v568
  %570 = vmatmul.bf16.gmra.mxu0 %v438
  %v571 = vpop.f32.mrf.mxu0
  %v572 = vadd.f32 %v339, %v571
  %v573 = vpop.f32.mrf.mxu0
  %v574 = vadd.f32 %v341, %v573
  %575 = vmatmul.bf16.gmra.mxu0 %v439
  %v576 = vpop.f32.mrf.mxu0
  %v577 = vadd.f32 %v344, %v576
  %v578 = vpop.f32.mrf.mxu0
  %v579 = vadd.f32 %v346, %v578
  %580 = vmatmul.bf16.gmra.mxu0 %v440
  %v581 = vpop.f32.mrf.mxu0
  %v582 = vadd.f32 %v349, %v581
  %v583 = vpop.f32.mrf.mxu0
  %v584 = vadd.f32 %v351, %v583
  %585 = vmatmul.bf16.gmra.mxu0 %v441
  %v586 = vpop.f32.mrf.mxu0
  %v587 = vadd.f32 %v354, %v586
  %v588 = vpop.f32.mrf.mxu0
  %v589 = vadd.f32 %v356, %v588
  %590 = vmatmul.bf16.gmra.mxu0 %v442
  %v591 = vpop.f32.mrf.mxu0
  %v592 = vadd.f32 %v359, %v591
  %v593 = vpop.f32.mrf.mxu0
  %v594 = vadd.f32 %v361, %v593
  %595 = vdwg.mxu0
  %v596 = vpack.c.bf16 %v517, %v517
  %v597 = vpack.c.bf16 %v519, %v519
  %v598 = vpack.c.bf16 %v522, %v522
  %v599 = vpack.c.bf16 %v524, %v524
  %v600 = vpack.c.bf16 %v527, %v527
  %v601 = vpack.c.bf16 %v529, %v529
  %v602 = vpack.c.bf16 %v532, %v532
  %v603 = vpack.c.bf16 %v534, %v534
  %v604 = vpack.c.bf16 %v537, %v537
  %v605 = vpack.c.bf16 %v539, %v539
  %v606 = vpack.c.bf16 %v542, %v542
  %v607 = vpack.c.bf16 %v544, %v544
  %v608 = vpack.c.bf16 %v547, %v547
  %v609 = vpack.c.bf16 %v549, %v549
  %v610 = vpack.c.bf16 %v552, %v552
  %v611 = vpack.c.bf16 %v554, %v554
  %v612 = vpack.c.bf16 %v557, %v557
  %v613 = vpack.c.bf16 %v559, %v559
  %v614 = vpack.c.bf16 %v562, %v562
  %v615 = vpack.c.bf16 %v564, %v564
  %v616 = vpack.c.bf16 %v567, %v567
  %v617 = vpack.c.bf16 %v569, %v569
  %v618 = vpack.c.bf16 %v572, %v572
  %v619 = vpack.c.bf16 %v574, %v574
  %v620 = vpack.c.bf16 %v577, %v577
  %v621 = vpack.c.bf16 %v579, %v579
  %v622 = vpack.c.bf16 %v582, %v582
  %v623 = vpack.c.bf16 %v584, %v584
  %v624 = vpack.c.bf16 %v587, %v587
  %v625 = vpack.c.bf16 %v589, %v589
  %v626 = vpack.c.bf16 %v592, %v592
  %v627 = vpack.c.bf16 %v594, %v594
  %628 = vst [vmem:[%s5] sm:$0xf] %v596
  %629 = vst [vmem:[%s5 + $0x4] sm:$0xf] %v597
  %630 = vst [vmem:[%s5 + $0x8] sm:$0xf] %v598
  %631 = vst [vmem:[%s5 + $0xc] sm:$0xf] %v599
  %632 = vst [vmem:[%s5 + $0x10] sm:$0xf] %v600
  %633 = vst [vmem:[%s5 + $0x14] sm:$0xf] %v601
  %634 = vst [vmem:[%s5 + $0x18] sm:$0xf] %v602
  %635 = vst [vmem:[%s5 + $0x1c] sm:$0xf] %v603
  %636 = vst [vmem:[%s5 + $0x20] sm:$0xf] %v604
  %637 = vst [vmem:[%s5 + $0x24] sm:$0xf] %v605
  %638 = vst [vmem:[%s5 + $0x28] sm:$0xf] %v606
  %639 = vst [vmem:[%s5 + $0x2c] sm:$0xf] %v607
  %640 = vst [vmem:[%s5 + $0x30] sm:$0xf] %v608
  %641 = vst [vmem:[%s5 + $0x34] sm:$0xf] %v609
  %642 = vst [vmem:[%s5 + $0x38] sm:$0xf] %v610
  %643 = vst [vmem:[%s5 + $0x3c] sm:$0xf] %v611
  %644 = vst [vmem:[%s5 + $0x40] sm:$0xf] %v612
  %645 = vst [vmem:[%s5 + $0x44] sm:$0xf] %v613
  %646 = vst [vmem:[%s5 + $0x48] sm:$0xf] %v614
  %647 = vst [vmem:[%s5 + $0x4c] sm:$0xf] %v615
  %648 = vst [vmem:[%s5 + $0x50] sm:$0xf] %v616
  %649 = vst [vmem:[%s5 + $0x54] sm:$0xf] %v617
  %650 = vst [vmem:[%s5 + $0x58] sm:$0xf] %v618
  %651 = vst [vmem:[%s5 + $0x5c] sm:$0xf] %v619
  %652 = vst [vmem:[%s5 + $0x60] sm:$0xf] %v620
  %653 = vst [vmem:[%s5 + $0x64] sm:$0xf] %v621
  %654 = vst [vmem:[%s5 + $0x68] sm:$0xf] %v622
  %655 = vst [vmem:[%s5 + $0x6c] sm:$0xf] %v623
  %656 = vst [vmem:[%s5 + $0x70] sm:$0xf] %v624
  %657 = vst [vmem:[%s5 + $0x74] sm:$0xf] %v625
  %658 = vst [vmem:[%s5 + $0x78] sm:$0xf] %v626
  %659 = vst [vmem:[%s5 + $0x7c] sm:$0xf] %v627
  %v660 = vld [vmem:[%s4] sm:$0xff]
  %v661 = vld [vmem:[%s4 + $0x8] sm:$0xff]
  %v662 = vld [vmem:[%s4 + $0x10] sm:$0xff]
  %v663 = vld [vmem:[%s4 + $0x18] sm:$0xff]
  %v664 = vld [vmem:[%s4 + $0x20] sm:$0xff]
  %v665 = vld [vmem:[%s4 + $0x28] sm:$0xff]
  %v666 = vld [vmem:[%s4 + $0x30] sm:$0xff]
  %v667 = vld [vmem:[%s4 + $0x38] sm:$0xff]
  %v668 = vld [vmem:[%s4 + $0x40] sm:$0xff]
  %v669 = vld [vmem:[%s4 + $0x48] sm:$0xff]
  %v670 = vld [vmem:[%s4 + $0x50] sm:$0xff]
  %v671 = vld [vmem:[%s4 + $0x58] sm:$0xff]
  %v672 = vld [vmem:[%s4 + $0x60] sm:$0xff]
  %v673 = vld [vmem:[%s4 + $0x68] sm:$0xff]
  %v674 = vld [vmem:[%s4 + $0x70] sm:$0xff]
  %v675 = vld [vmem:[%s4 + $0x78] sm:$0xff]
  %v676 = vld [vmem:[%s4 + $0x80] sm:$0xff]
  %v677 = vld [vmem:[%s4 + $0x88] sm:$0xff]
  %v678 = vld [vmem:[%s4 + $0x90] sm:$0xff]
  %v679 = vld [vmem:[%s4 + $0x98] sm:$0xff]
  %v680 = vld [vmem:[%s4 + $0xa0] sm:$0xff]
  %v681 = vld [vmem:[%s4 + $0xa8] sm:$0xff]
  %v682 = vld [vmem:[%s4 + $0xb0] sm:$0xff]
  %v683 = vld [vmem:[%s4 + $0xb8] sm:$0xff]
  %v684 = vld [vmem:[%s4 + $0xc0] sm:$0xff]
  %v685 = vld [vmem:[%s4 + $0xc8] sm:$0xff]
  %v686 = vld [vmem:[%s4 + $0xd0] sm:$0xff]
  %v687 = vld [vmem:[%s4 + $0xd8] sm:$0xff]
  %v688 = vld [vmem:[%s4 + $0xe0] sm:$0xff]
  %v689 = vld [vmem:[%s4 + $0xe8] sm:$0xff]
  %v690 = vld [vmem:[%s4 + $0xf0] sm:$0xff]
  %v691 = vld [vmem:[%s4 + $0xf8] sm:$0xff]
  %693 = vset.pattern.permute.xlu0 0
  %694 = vperm.xlu0 %693, %v660
  %v695 = vpop.permute.xlu0 %694
  %698 = vset.pattern.permute.xlu0 0
  %699 = vperm.xlu0 %698, %v661
  %v700 = vpop.permute.xlu0 %699
  %703 = vset.pattern.permute.xlu0 0
  %704 = vperm.xlu0 %703, %v662
  %v705 = vpop.permute.xlu0 %704
  %708 = vset.pattern.permute.xlu0 0
  %709 = vperm.xlu0 %708, %v663
  %v710 = vpop.permute.xlu0 %709
  %713 = vset.pattern.permute.xlu0 0
  %714 = vperm.xlu0 %713, %v664
  %v715 = vpop.permute.xlu0 %714
  %718 = vset.pattern.permute.xlu0 0
  %719 = vperm.xlu0 %718, %v665
  %v720 = vpop.permute.xlu0 %719
  %723 = vset.pattern.permute.xlu0 0
  %724 = vperm.xlu0 %723, %v666
  %v725 = vpop.permute.xlu0 %724
  %728 = vset.pattern.permute.xlu0 0
  %729 = vperm.xlu0 %728, %v667
  %v730 = vpop.permute.xlu0 %729
  %733 = vset.pattern.permute.xlu0 0
  %734 = vperm.xlu0 %733, %v668
  %v735 = vpop.permute.xlu0 %734
  %738 = vset.pattern.permute.xlu0 0
  %739 = vperm.xlu0 %738, %v669
  %v740 = vpop.permute.xlu0 %739
  %743 = vset.pattern.permute.xlu0 0
  %744 = vperm.xlu0 %743, %v670
  %v745 = vpop.permute.xlu0 %744
  %748 = vset.pattern.permute.xlu0 0
  %749 = vperm.xlu0 %748, %v671
  %v750 = vpop.permute.xlu0 %749
  %753 = vset.pattern.permute.xlu0 0
  %754 = vperm.xlu0 %753, %v672
  %v755 = vpop.permute.xlu0 %754
  %758 = vset.pattern.permute.xlu0 0
  %759 = vperm.xlu0 %758, %v673
  %v760 = vpop.permute.xlu0 %759
  %763 = vset.pattern.permute.xlu0 0
  %764 = vperm.xlu0 %763, %v674
  %v765 = vpop.permute.xlu0 %764
  %768 = vset.pattern.permute.xlu0 0
  %769 = vperm.xlu0 %768, %v675
  %v770 = vpop.permute.xlu0 %769
  %773 = vset.pattern.permute.xlu0 0
  %774 = vperm.xlu0 %773, %v676
  %v775 = vpop.permute.xlu0 %774
  %778 = vset.pattern.permute.xlu0 0
  %779 = vperm.xlu0 %778, %v677
  %v780 = vpop.permute.xlu0 %779
  %783 = vset.pattern.permute.xlu0 0
  %784 = vperm.xlu0 %783, %v678
  %v785 = vpop.permute.xlu0 %784
  %788 = vset.pattern.permute.xlu0 0
  %789 = vperm.xlu0 %788, %v679
  %v790 = vpop.permute.xlu0 %789
  %793 = vset.pattern.permute.xlu0 0
  %794 = vperm.xlu0 %793, %v680
  %v795 = vpop.permute.xlu0 %794
  %798 = vset.pattern.permute.xlu0 0
  %799 = vperm.xlu0 %798, %v681
  %v800 = vpop.permute.xlu0 %799
  %803 = vset.pattern.permute.xlu0 0
  %804 = vperm.xlu0 %803, %v682
  %v805 = vpop.permute.xlu0 %804
  %808 = vset.pattern.permute.xlu0 0
  %809 = vperm.xlu0 %808, %v683
  %v810 = vpop.permute.xlu0 %809
  %813 = vset.pattern.permute.xlu0 0
  %814 = vperm.xlu0 %813, %v684
  %v815 = vpop.permute.xlu0 %814
  %818 = vset.pattern.permute.xlu0 0
  %819 = vperm.xlu0 %818, %v685
  %v820 = vpop.permute.xlu0 %819
  %823 = vset.pattern.permute.xlu0 0
  %824 = vperm.xlu0 %823, %v686
  %v825 = vpop.permute.xlu0 %824
  %828 = vset.pattern.permute.xlu0 0
  %829 = vperm.xlu0 %828, %v687
  %v830 = vpop.permute.xlu0 %829
  %833 = vset.pattern.permute.xlu0 0
  %834 = vperm.xlu0 %833, %v688
  %v835 = vpop.permute.xlu0 %834
  %838 = vset.pattern.permute.xlu0 0
  %839 = vperm.xlu0 %838, %v689
  %v840 = vpop.permute.xlu0 %839
  %843 = vset.pattern.permute.xlu0 0
  %844 = vperm.xlu0 %843, %v690
  %v845 = vpop.permute.xlu0 %844
  %848 = vset.pattern.permute.xlu0 0
  %849 = vperm.xlu0 %848, %v691
  %v850 = vpop.permute.xlu0 %849
  %v852 = vmul.f32 %v517, %v695
  %v853 = vmul.f32 %v519, %v700
  %v854 = vmul.f32 %v522, %v705
  %v855 = vmul.f32 %v524, %v710
  %v856 = vmul.f32 %v527, %v715
  %v857 = vmul.f32 %v529, %v720
  %v858 = vmul.f32 %v532, %v725
  %v859 = vmul.f32 %v534, %v730
  %v860 = vmul.f32 %v537, %v735
  %v861 = vmul.f32 %v539, %v740
  %v862 = vmul.f32 %v542, %v745
  %v863 = vmul.f32 %v544, %v750
  %v864 = vmul.f32 %v547, %v755
  %v865 = vmul.f32 %v549, %v760
  %v866 = vmul.f32 %v552, %v765
  %v867 = vmul.f32 %v554, %v770
  %v868 = vmul.f32 %v557, %v775
  %v869 = vmul.f32 %v559, %v780
  %v870 = vmul.f32 %v562, %v785
  %v871 = vmul.f32 %v564, %v790
  %v872 = vmul.f32 %v567, %v795
  %v873 = vmul.f32 %v569, %v800
  %v874 = vmul.f32 %v572, %v805
  %v875 = vmul.f32 %v574, %v810
  %v876 = vmul.f32 %v577, %v815
  %v877 = vmul.f32 %v579, %v820
  %v878 = vmul.f32 %v582, %v825
  %v879 = vmul.f32 %v584, %v830
  %v880 = vmul.f32 %v587, %v835
  %v881 = vmul.f32 %v589, %v840
  %v882 = vmul.f32 %v592, %v845
  %v883 = vmul.f32 %v594, %v850
  %v884 = vld [vmem:[%s6] sm:$0x1]
  %v885 = vadd.f32 %v852, %v853
  %v886 = vadd.f32 %v885, %v854
  %v887 = vadd.f32 %v886, %v855
  %v888 = vadd.f32 %v887, %v856
  %v889 = vadd.f32 %v888, %v857
  %v890 = vadd.f32 %v889, %v858
  %v891 = vadd.f32 %v890, %v859
  %v892 = vadd.f32 %v891, %v860
  %v893 = vadd.f32 %v892, %v861
  %v894 = vadd.f32 %v893, %v862
  %v895 = vadd.f32 %v894, %v863
  %v896 = vadd.f32 %v895, %v864
  %v897 = vadd.f32 %v896, %v865
  %v898 = vadd.f32 %v897, %v866
  %v899 = vadd.f32 %v898, %v867
  %v900 = vadd.f32 %v899, %v868
  %v901 = vadd.f32 %v900, %v869
  %v902 = vadd.f32 %v901, %v870
  %v903 = vadd.f32 %v902, %v871
  %v904 = vadd.f32 %v903, %v872
  %v905 = vadd.f32 %v904, %v873
  %v906 = vadd.f32 %v905, %v874
  %v907 = vadd.f32 %v906, %v875
  %v908 = vadd.f32 %v907, %v876
  %v909 = vadd.f32 %v908, %v877
  %v910 = vadd.f32 %v909, %v878
  %v911 = vadd.f32 %v910, %v879
  %v912 = vadd.f32 %v911, %v880
  %v913 = vadd.f32 %v912, %v881
  %v914 = vadd.f32 %v913, %v882
  %v915 = vadd.f32 %v914, %v883
  %v916 = vrot.slane %v915, 4
  %v917 = vadd.f32 %v915, %v916
  %v918 = vrot.slane %v917, 2
  %v919 = vadd.f32 %v917, %v918
  %v920 = vrot.slane %v919, 1
  %v921 = vadd.f32 %v919, %v920
  %v922 = vadd.f32 %v884, %v921
  %923 = vst [vmem:[%s6] sm:$0x1] %v922
  %v924 = vld [vmem:[%s7] sm:$0x1]
  %v925 = vmul.f32 %v852, %v852
  %v926 = vmul.f32 %v853, %v853
  %v927 = vmul.f32 %v854, %v854
  %v928 = vmul.f32 %v855, %v855
  %v929 = vmul.f32 %v856, %v856
  %v930 = vmul.f32 %v857, %v857
  %v931 = vmul.f32 %v858, %v858
  %v932 = vmul.f32 %v859, %v859
  %v933 = vmul.f32 %v860, %v860
  %v934 = vmul.f32 %v861, %v861
  %v935 = vmul.f32 %v862, %v862
  %v936 = vmul.f32 %v863, %v863
  %v937 = vmul.f32 %v864, %v864
  %v938 = vmul.f32 %v865, %v865
  %v939 = vmul.f32 %v866, %v866
  %v940 = vmul.f32 %v867, %v867
  %v941 = vmul.f32 %v868, %v868
  %v942 = vmul.f32 %v869, %v869
  %v943 = vmul.f32 %v870, %v870
  %v944 = vmul.f32 %v871, %v871
  %v945 = vmul.f32 %v872, %v872
  %v946 = vmul.f32 %v873, %v873
  %v947 = vmul.f32 %v874, %v874
  %v948 = vmul.f32 %v875, %v875
  %v949 = vmul.f32 %v876, %v876
  %v950 = vmul.f32 %v877, %v877
  %v951 = vmul.f32 %v878, %v878
  %v952 = vmul.f32 %v879, %v879
  %v953 = vmul.f32 %v880, %v880
  %v954 = vmul.f32 %v881, %v881
  %v955 = vmul.f32 %v882, %v882
  %v956 = vmul.f32 %v883, %v883
  %v957 = vadd.f32 %v925, %v926
  %v958 = vadd.f32 %v957, %v927
  %v959 = vadd.f32 %v958, %v928
  %v960 = vadd.f32 %v959, %v929
  %v961 = vadd.f32 %v960, %v930
  %v962 = vadd.f32 %v961, %v931
  %v963 = vadd.f32 %v962, %v932
  %v964 = vadd.f32 %v963, %v933
  %v965 = vadd.f32 %v964, %v934
  %v966 = vadd.f32 %v965, %v935
  %v967 = vadd.f32 %v966, %v936
  %v968 = vadd.f32 %v967, %v937
  %v969 = vadd.f32 %v968, %v938
  %v970 = vadd.f32 %v969, %v939
  %v971 = vadd.f32 %v970, %v940
  %v972 = vadd.f32 %v971, %v941
  %v973 = vadd.f32 %v972, %v942
  %v974 = vadd.f32 %v973, %v943
  %v975 = vadd.f32 %v974, %v944
  %v976 = vadd.f32 %v975, %v945
  %v977 = vadd.f32 %v976, %v946
  %v978 = vadd.f32 %v977, %v947
  %v979 = vadd.f32 %v978, %v948
  %v980 = vadd.f32 %v979, %v949
  %v981 = vadd.f32 %v980, %v950
  %v982 = vadd.f32 %v981, %v951
  %v983 = vadd.f32 %v982, %v952
  %v984 = vadd.f32 %v983, %v953
  %v985 = vadd.f32 %v984, %v954
  %v986 = vadd.f32 %v985, %v955
  %v987 = vadd.f32 %v986, %v956
  %v988 = vrot.slane %v987, 4
  %v989 = vadd.f32 %v987, %v988
  %v990 = vrot.slane %v989, 2
  %v991 = vadd.f32 %v989, %v990
  %v992 = vrot.slane %v991, 1
  %v993 = vadd.f32 %v991, %v992
  %v994 = vadd.f32 %v924, %v993
  %995 = vst [vmem:[%s7] sm:$0x1] %v994
  // Predicated region
  $region26: #{qgcn_forward.10} parent=0 // pred_check
    _
  $region27: #{qgcn_forward.10} parent=0 // pred_check_branch
    %997 = sbr.rel (0) target = $region29
  $region28: #{qgcn_forward.10} parent=0 // pred_region
    _
  $region29: #{qgcn_forward.10} parent=0 // pred_fallthru
    _
  // Predicated region
  $region30: #{qgcn_forward.10} parent=0 // pred_check
    _
  $region31: #{qgcn_forward.10} parent=0 // pred_check_branch
    %999 = sbr.rel (0) target = $region33
  $region32: #{qgcn_forward.10} parent=0 // pred_region
    _
  $region33: #{qgcn_forward.10} parent=0 // pred_fallthru
    _
  // Predicated region
  $region34: #{qgcn_forward.10} parent=0 // pred_check
    _
  $region35: #{qgcn_forward.10} parent=0 // pred_check_branch
    %1001 = sbr.rel (0) target = $region37
  $region36: #{qgcn_forward.10} parent=0 // pred_region
    _
  $region37: #{qgcn_forward.10} parent=0 // pred_fallthru
    _
  // Predicated region
  $region38: #{qgcn_forward.10} parent=0 // pred_check
    _
  $region39: #{qgcn_forward.10} parent=0 // pred_check_branch
    %1003 = sbr.rel (0) target = $region41
  $region40: #{qgcn_forward.10} parent=0 // pred_region
    _
  $region41: #{qgcn_forward.10} parent=0 // pred_fallthru
    _
  // Predicated region
  $region42: #{qgcn_forward.10} parent=0 // pred_check
    _
  $region43: #{qgcn_forward.10} parent=0 // pred_check_branch
    %1005 = sbr.rel (0) target = $region45
  $region44: #{qgcn_forward.10} parent=0 // pred_region
    _
  $region45: #{qgcn_forward.10} parent=0 // pred_fallthru
    _
  // Predicated region
  $region46: #{qgcn_forward.10} parent=0 // pred_check
    _
  $region47: #{qgcn_forward.10} parent=0 // pred_check_branch
    %1007 = sbr.rel (0) target = $region49
  $region48: #{qgcn_forward.10} parent=0 // pred_region
    _
  $region49: #{qgcn_forward.10} parent=0 // pred_fallthru
    _

// kernel: qgcn_forward.9
$region0: #{qgcn_forward.9}
  #allocation0 [shape = 'u32[]', space=smem, size = 0x4, offset = 0x4, fixed_abs, tag = 'smem constant byte address 0x4 - core index']
  #allocation1 [shape = 'u32[72,128]{1,0:T(1,128)}', space=vmem, size = 0x9000, scoped, tag = 'internal scratch']
  #allocation2 [shape = 'f32[256,128]{1,0:T(8,128)}', space=vmem, size = 0x20000, scoped, tag = 'scratch operand']
  %s0 = inlined_call_operand.vmem [shape: s8[256,256], index: 0, kind: input, shape index: {}]
  %s1 = inlined_call_operand.vmem [shape: bf16[256,128], index: 1, kind: input, shape index: {}]
  %s2 = inlined_call_operand.vmem [shape: f32[256,1], index: 2, kind: input, shape index: {}]
  %s3 = inlined_call_operand.vmem [shape: f32[256,1], index: 3, kind: input, shape index: {}]
  %s4 = inlined_call_operand.vmem [shape: bf16[256,128], index: 4, kind: output, shape index: {}]
  %s5 = sld [smem:[#allocation0]]
  $region34: #{qgcn_forward.9} parent=0
    _
  %s7 = ssub.s32 1, %s5
  %s8 = scalar_select 0, %s7, %s5
  // Predicated region
  $region2: #{qgcn_forward.9} parent=0 // pred_check
    _
  $region3: #{qgcn_forward.9} parent=0 // pred_check_branch
    %10 = sbr.rel (0) target = $region5
  $region4: #{qgcn_forward.9} parent=0 // pred_region
    _
  $region5: #{qgcn_forward.9} parent=0 // pred_fallthru
    _
  // Predicated region
  $region6: #{qgcn_forward.9} parent=0 // pred_check
    _
  $region7: #{qgcn_forward.9} parent=0 // pred_check_branch
    %12 = sbr.rel (0) target = $region9
  $region8: #{qgcn_forward.9} parent=0 // pred_region
    _
  $region9: #{qgcn_forward.9} parent=0 // pred_fallthru
    _
  // Predicated region
  $region10: #{qgcn_forward.9} parent=0 // pred_check
    _
  $region11: #{qgcn_forward.9} parent=0 // pred_check_branch
    %14 = sbr.rel (0) target = $region13
  $region12: #{qgcn_forward.9} parent=0 // pred_region
    _
  $region13: #{qgcn_forward.9} parent=0 // pred_fallthru
    _
  // Predicated region
  $region14: #{qgcn_forward.9} parent=0 // pred_check
    _
  $region15: #{qgcn_forward.9} parent=0 // pred_check_branch
    %16 = sbr.rel (0) target = $region17
  $region16: #{qgcn_forward.9} parent=0 // pred_region
    _
  $region17: #{qgcn_forward.9} parent=0 // pred_fallthru
    _
  %p17 = scmp.eq.s32.totalorder 0, 0
  // Predicated region
  $region18: #{qgcn_forward.9} parent=0 // pred_check
    %p18 = pneg %p17
  $region19: #{qgcn_forward.9} parent=0 // pred_check_branch
    %20 = sbr.rel (%p18) target = $region21
  $region20: #{qgcn_forward.9} parent=0 // pred_region
    %21 = vst [vmem:[#allocation2] sm:$0xff] 0.0
    %22 = vst [vmem:[#allocation2 + $0x8] sm:$0xff] 0.0
    %23 = vst [vmem:[#allocation2 + $0x10] sm:$0xff] 0.0
    %24 = vst [vmem:[#allocation2 + $0x18] sm:$0xff] 0.0
    %25 = vst [vmem:[#allocation2 + $0x20] sm:$0xff] 0.0
    %26 = vst [vmem:[#allocation2 + $0x28] sm:$0xff] 0.0
    %27 = vst [vmem:[#allocation2 + $0x30] sm:$0xff] 0.0
    %28 = vst [vmem:[#allocation2 + $0x38] sm:$0xff] 0.0
    %29 = vst [vmem:[#allocation2 + $0x40] sm:$0xff] 0.0
    %30 = vst [vmem:[#allocation2 + $0x48] sm:$0xff] 0.0
    %31 = vst [vmem:[#allocation2 + $0x50] sm:$0xff] 0.0
    %32 = vst [vmem:[#allocation2 + $0x58] sm:$0xff] 0.0
    %33 = vst [vmem:[#allocation2 + $0x60] sm:$0xff] 0.0
    %34 = vst [vmem:[#allocation2 + $0x68] sm:$0xff] 0.0
    %35 = vst [vmem:[#allocation2 + $0x70] sm:$0xff] 0.0
    %36 = vst [vmem:[#allocation2 + $0x78] sm:$0xff] 0.0
    %37 = vst [vmem:[#allocation2 + $0x80] sm:$0xff] 0.0
    %38 = vst [vmem:[#allocation2 + $0x88] sm:$0xff] 0.0
    %39 = vst [vmem:[#allocation2 + $0x90] sm:$0xff] 0.0
    %40 = vst [vmem:[#allocation2 + $0x98] sm:$0xff] 0.0
    %41 = vst [vmem:[#allocation2 + $0xa0] sm:$0xff] 0.0
    %42 = vst [vmem:[#allocation2 + $0xa8] sm:$0xff] 0.0
    %43 = vst [vmem:[#allocation2 + $0xb0] sm:$0xff] 0.0
    %44 = vst [vmem:[#allocation2 + $0xb8] sm:$0xff] 0.0
    %45 = vst [vmem:[#allocation2 + $0xc0] sm:$0xff] 0.0
    %46 = vst [vmem:[#allocation2 + $0xc8] sm:$0xff] 0.0
    %47 = vst [vmem:[#allocation2 + $0xd0] sm:$0xff] 0.0
    %48 = vst [vmem:[#allocation2 + $0xd8] sm:$0xff] 0.0
    %49 = vst [vmem:[#allocation2 + $0xe0] sm:$0xff] 0.0
    %50 = vst [vmem:[#allocation2 + $0xe8] sm:$0xff] 0.0
    %51 = vst [vmem:[#allocation2 + $0xf0] sm:$0xff] 0.0
    %52 = vst [vmem:[#allocation2 + $0xf8] sm:$0xff] 0.0
  $region21: #{qgcn_forward.9} parent=0 // pred_fallthru
    _
  %v53 = vld [vmem:[%s0] sm:$0xff]
  %v54 = vld [vmem:[%s0 + $0x8] sm:$0xff]
  %v55 = vld [vmem:[%s0 + $0x10] sm:$0xff]
  %v56 = vld [vmem:[%s0 + $0x18] sm:$0xff]
  %v57 = vld [vmem:[%s0 + $0x20] sm:$0xff]
  %v58 = vld [vmem:[%s0 + $0x28] sm:$0xff]
  %v59 = vld [vmem:[%s0 + $0x30] sm:$0xff]
  %v60 = vld [vmem:[%s0 + $0x38] sm:$0xff]
  %v61 = vld [vmem:[%s0 + $0x40] sm:$0xff]
  %v62 = vld [vmem:[%s0 + $0x48] sm:$0xff]
  %v63 = vld [vmem:[%s0 + $0x50] sm:$0xff]
  %v64 = vld [vmem:[%s0 + $0x58] sm:$0xff]
  %v65 = vld [vmem:[%s0 + $0x60] sm:$0xff]
  %v66 = vld [vmem:[%s0 + $0x68] sm:$0xff]
  %v67 = vld [vmem:[%s0 + $0x70] sm:$0xff]
  %v68 = vld [vmem:[%s0 + $0x78] sm:$0xff]
  %v69 = vunpack.c.0.s8 %v53
  %v70 = vunpack.c.0.s8 %v54
  %v71 = vunpack.c.1.s8 %v53
  %v72 = vunpack.c.1.s8 %v54
  %v73 = vunpack.c.2.s8 %v53
  %v74 = vunpack.c.2.s8 %v54
  %v75 = vunpack.c.3.s8 %v53
  %v76 = vunpack.c.3.s8 %v54
  %v77 = vunpack.c.0.s8 %v55
  %v78 = vunpack.c.0.s8 %v56
  %v79 = vunpack.c.1.s8 %v55
  %v80 = vunpack.c.1.s8 %v56
  %v81 = vunpack.c.2.s8 %v55
  %v82 = vunpack.c.2.s8 %v56
  %v83 = vunpack.c.3.s8 %v55
  %v84 = vunpack.c.3.s8 %v56
  %v85 = vunpack.c.0.s8 %v57
  %v86 = vunpack.c.0.s8 %v58
  %v87 = vunpack.c.1.s8 %v57
  %v88 = vunpack.c.1.s8 %v58
  %v89 = vunpack.c.2.s8 %v57
  %v90 = vunpack.c.2.s8 %v58
  %v91 = vunpack.c.3.s8 %v57
  %v92 = vunpack.c.3.s8 %v58
  %v93 = vunpack.c.0.s8 %v59
  %v94 = vunpack.c.0.s8 %v60
  %v95 = vunpack.c.1.s8 %v59
  %v96 = vunpack.c.1.s8 %v60
  %v97 = vunpack.c.2.s8 %v59
  %v98 = vunpack.c.2.s8 %v60
  %v99 = vunpack.c.3.s8 %v59
  %v100 = vunpack.c.3.s8 %v60
  %v101 = vunpack.c.0.s8 %v61
  %v102 = vunpack.c.0.s8 %v62
  %v103 = vunpack.c.1.s8 %v61
  %v104 = vunpack.c.1.s8 %v62
  %v105 = vunpack.c.2.s8 %v61
  %v106 = vunpack.c.2.s8 %v62
  %v107 = vunpack.c.3.s8 %v61
  %v108 = vunpack.c.3.s8 %v62
  %v109 = vunpack.c.0.s8 %v63
  %v110 = vunpack.c.0.s8 %v64
  %v111 = vunpack.c.1.s8 %v63
  %v112 = vunpack.c.1.s8 %v64
  %v113 = vunpack.c.2.s8 %v63
  %v114 = vunpack.c.2.s8 %v64
  %v115 = vunpack.c.3.s8 %v63
  %v116 = vunpack.c.3.s8 %v64
  %v117 = vunpack.c.0.s8 %v65
  %v118 = vunpack.c.0.s8 %v66
  %v119 = vunpack.c.1.s8 %v65
  %v120 = vunpack.c.1.s8 %v66
  %v121 = vunpack.c.2.s8 %v65
  %v122 = vunpack.c.2.s8 %v66
  %v123 = vunpack.c.3.s8 %v65
  %v124 = vunpack.c.3.s8 %v66
  %v125 = vunpack.c.0.s8 %v67
  %v126 = vunpack.c.0.s8 %v68
  %v127 = vunpack.c.1.s8 %v67
  %v128 = vunpack.c.1.s8 %v68
  %v129 = vunpack.c.2.s8 %v67
  %v130 = vunpack.c.2.s8 %v68
  %v131 = vunpack.c.3.s8 %v67
  %v132 = vunpack.c.3.s8 %v68
  %v133 = vcvt.s32.f32 %v69
  %v134 = vcvt.s32.f32 %v70
  %v135 = vcvt.s32.f32 %v71
  %v136 = vcvt.s32.f32 %v72
  %v137 = vcvt.s32.f32 %v73
  %v138 = vcvt.s32.f32 %v74
  %v139 = vcvt.s32.f32 %v75
  %v140 = vcvt.s32.f32 %v76
  %v141 = vcvt.s32.f32 %v77
  %v142 = vcvt.s32.f32 %v78
  %v143 = vcvt.s32.f32 %v79
  %v144 = vcvt.s32.f32 %v80
  %v145 = vcvt.s32.f32 %v81
  %v146 = vcvt.s32.f32 %v82
  %v147 = vcvt.s32.f32 %v83
  %v148 = vcvt.s32.f32 %v84
  %v149 = vcvt.s32.f32 %v85
  %v150 = vcvt.s32.f32 %v86
  %v151 = vcvt.s32.f32 %v87
  %v152 = vcvt.s32.f32 %v88
  %v153 = vcvt.s32.f32 %v89
  %v154 = vcvt.s32.f32 %v90
  %v155 = vcvt.s32.f32 %v91
  %v156 = vcvt.s32.f32 %v92
  %v157 = vcvt.s32.f32 %v93
  %v158 = vcvt.s32.f32 %v94
  %v159 = vcvt.s32.f32 %v95
  %v160 = vcvt.s32.f32 %v96
  %v161 = vcvt.s32.f32 %v97
  %v162 = vcvt.s32.f32 %v98
  %v163 = vcvt.s32.f32 %v99
  %v164 = vcvt.s32.f32 %v100
  %v165 = vcvt.s32.f32 %v101
  %v166 = vcvt.s32.f32 %v102
  %v167 = vcvt.s32.f32 %v103
  %v168 = vcvt.s32.f32 %v104
  %v169 = vcvt.s32.f32 %v105
  %v170 = vcvt.s32.f32 %v106
  %v171 = vcvt.s32.f32 %v107
  %v172 = vcvt.s32.f32 %v108
  %v173 = vcvt.s32.f32 %v109
  %v174 = vcvt.s32.f32 %v110
  %v175 = vcvt.s32.f32 %v111
  %v176 = vcvt.s32.f32 %v112
  %v177 = vcvt.s32.f32 %v113
  %v178 = vcvt.s32.f32 %v114
  %v179 = vcvt.s32.f32 %v115
  %v180 = vcvt.s32.f32 %v116
  %v181 = vcvt.s32.f32 %v117
  %v182 = vcvt.s32.f32 %v118
  %v183 = vcvt.s32.f32 %v119
  %v184 = vcvt.s32.f32 %v120
  %v185 = vcvt.s32.f32 %v121
  %v186 = vcvt.s32.f32 %v122
  %v187 = vcvt.s32.f32 %v123
  %v188 = vcvt.s32.f32 %v124
  %v189 = vcvt.s32.f32 %v125
  %v190 = vcvt.s32.f32 %v126
  %v191 = vcvt.s32.f32 %v127
  %v192 = vcvt.s32.f32 %v128
  %v193 = vcvt.s32.f32 %v129
  %v194 = vcvt.s32.f32 %v130
  %v195 = vcvt.s32.f32 %v131
  %v196 = vcvt.s32.f32 %v132
  %v197 = vpack.c.bf16 %v135, %v133
  %v198 = vpack.c.bf16 %v136, %v134
  %v199 = vpack.c.bf16 %v139, %v137
  %v200 = vpack.c.bf16 %v140, %v138
  %v201 = vpack.c.bf16 %v143, %v141
  %v202 = vpack.c.bf16 %v144, %v142
  %v203 = vpack.c.bf16 %v147, %v145
  %v204 = vpack.c.bf16 %v148, %v146
  %v205 = vpack.c.bf16 %v151, %v149
  %v206 = vpack.c.bf16 %v152, %v150
  %v207 = vpack.c.bf16 %v155, %v153
  %v208 = vpack.c.bf16 %v156, %v154
  %v209 = vpack.c.bf16 %v159, %v157
  %v210 = vpack.c.bf16 %v160, %v158
  %v211 = vpack.c.bf16 %v163, %v161
  %v212 = vpack.c.bf16 %v164, %v162
  %v213 = vpack.c.bf16 %v167, %v165
  %v214 = vpack.c.bf16 %v168, %v166
  %v215 = vpack.c.bf16 %v171, %v169
  %v216 = vpack.c.bf16 %v172, %v170
  %v217 = vpack.c.bf16 %v175, %v173
  %v218 = vpack.c.bf16 %v176, %v174
  %v219 = vpack.c.bf16 %v179, %v177
  %v220 = vpack.c.bf16 %v180, %v178
  %v221 = vpack.c.bf16 %v183, %v181
  %v222 = vpack.c.bf16 %v184, %v182
  %v223 = vpack.c.bf16 %v187, %v185
  %v224 = vpack.c.bf16 %v188, %v186
  %v225 = vpack.c.bf16 %v191, %v189
  %v226 = vpack.c.bf16 %v192, %v190
  %v227 = vpack.c.bf16 %v195, %v193
  %v228 = vpack.c.bf16 %v196, %v194
  %v229 = vld [vmem:[%s1] sm:$0xf]
  %v230 = vld [vmem:[%s1 + $0x4] sm:$0xf]
  %v231 = vld [vmem:[%s1 + $0x8] sm:$0xf]
  %v232 = vld [vmem:[%s1 + $0xc] sm:$0xf]
  %v233 = vld [vmem:[%s1 + $0x10] sm:$0xf]
  %v234 = vld [vmem:[%s1 + $0x14] sm:$0xf]
  %v235 = vld [vmem:[%s1 + $0x18] sm:$0xf]
  %v236 = vld [vmem:[%s1 + $0x1c] sm:$0xf]
  %v237 = vld [vmem:[%s1 + $0x20] sm:$0xf]
  %v238 = vld [vmem:[%s1 + $0x24] sm:$0xf]
  %v239 = vld [vmem:[%s1 + $0x28] sm:$0xf]
  %v240 = vld [vmem:[%s1 + $0x2c] sm:$0xf]
  %v241 = vld [vmem:[%s1 + $0x30] sm:$0xf]
  %v242 = vld [vmem:[%s1 + $0x34] sm:$0xf]
  %v243 = vld [vmem:[%s1 + $0x38] sm:$0xf]
  %v244 = vld [vmem:[%s1 + $0x3c] sm:$0xf]
  %v245 = vld [vmem:[%s1 + $0x40] sm:$0xf]
  %v246 = vld [vmem:[%s1 + $0x44] sm:$0xf]
  %v247 = vld [vmem:[%s1 + $0x48] sm:$0xf]
  %v248 = vld [vmem:[%s1 + $0x4c] sm:$0xf]
  %v249 = vld [vmem:[%s1 + $0x50] sm:$0xf]
  %v250 = vld [vmem:[%s1 + $0x54] sm:$0xf]
  %v251 = vld [vmem:[%s1 + $0x58] sm:$0xf]
  %v252 = vld [vmem:[%s1 + $0x5c] sm:$0xf]
  %v253 = vld [vmem:[%s1 + $0x60] sm:$0xf]
  %v254 = vld [vmem:[%s1 + $0x64] sm:$0xf]
  %v255 = vld [vmem:[%s1 + $0x68] sm:$0xf]
  %v256 = vld [vmem:[%s1 + $0x6c] sm:$0xf]
  %v257 = vld [vmem:[%s1 + $0x70] sm:$0xf]
  %v258 = vld [vmem:[%s1 + $0x74] sm:$0xf]
  %v259 = vld [vmem:[%s1 + $0x78] sm:$0xf]
  %v260 = vld [vmem:[%s1 + $0x7c] sm:$0xf]
  %v261 = vld [vmem:[%s2] sm:$0xff]
  %v262 = vld [vmem:[%s2 + $0x8] sm:$0xff]
  %v263 = vld [vmem:[%s2 + $0x10] sm:$0xff]
  %v264 = vld [vmem:[%s2 + $0x18] sm:$0xff]
  %v265 = vld [vmem:[%s2 + $0x20] sm:$0xff]
  %v266 = vld [vmem:[%s2 + $0x28] sm:$0xff]
  %v267 = vld [vmem:[%s2 + $0x30] sm:$0xff]
  %v268 = vld [vmem:[%s2 + $0x38] sm:$0xff]
  %v269 = vld [vmem:[%s2 + $0x40] sm:$0xff]
  %v270 = vld [vmem:[%s2 + $0x48] sm:$0xff]
  %v271 = vld [vmem:[%s2 + $0x50] sm:$0xff]
  %v272 = vld [vmem:[%s2 + $0x58] sm:$0xff]
  %v273 = vld [vmem:[%s2 + $0x60] sm:$0xff]
  %v274 = vld [vmem:[%s2 + $0x68] sm:$0xff]
  %v275 = vld [vmem:[%s2 + $0x70] sm:$0xff]
  %v276 = vld [vmem:[%s2 + $0x78] sm:$0xff]
  %v277 = vld [vmem:[%s2 + $0x80] sm:$0xff]
  %v278 = vld [vmem:[%s2 + $0x88] sm:$0xff]
  %v279 = vld [vmem:[%s2 + $0x90] sm:$0xff]
  %v280 = vld [vmem:[%s2 + $0x98] sm:$0xff]
  %v281 = vld [vmem:[%s2 + $0xa0] sm:$0xff]
  %v282 = vld [vmem:[%s2 + $0xa8] sm:$0xff]
  %v283 = vld [vmem:[%s2 + $0xb0] sm:$0xff]
  %v284 = vld [vmem:[%s2 + $0xb8] sm:$0xff]
  %v285 = vld [vmem:[%s2 + $0xc0] sm:$0xff]
  %v286 = vld [vmem:[%s2 + $0xc8] sm:$0xff]
  %v287 = vld [vmem:[%s2 + $0xd0] sm:$0xff]
  %v288 = vld [vmem:[%s2 + $0xd8] sm:$0xff]
  %v289 = vld [vmem:[%s2 + $0xe0] sm:$0xff]
  %v290 = vld [vmem:[%s2 + $0xe8] sm:$0xff]
  %v291 = vld [vmem:[%s2 + $0xf0] sm:$0xff]
  %v292 = vld [vmem:[%s2 + $0xf8] sm:$0xff]
  %v293 = vunpack.c.l.bf16 %v229
  %v294 = vunpack.c.l.bf16 %v230
  %v295 = vunpack.c.l.bf16 %v231
  %v296 = vunpack.c.l.bf16 %v232
  %v297 = vunpack.c.l.bf16 %v233
  %v298 = vunpack.c.l.bf16 %v234
  %v299 = vunpack.c.l.bf16 %v235
  %v300 = vunpack.c.l.bf16 %v236
  %v301 = vunpack.c.l.bf16 %v237
  %v302 = vunpack.c.l.bf16 %v238
  %v303 = vunpack.c.l.bf16 %v239
  %v304 = vunpack.c.l.bf16 %v240
  %v305 = vunpack.c.l.bf16 %v241
  %v306 = vunpack.c.l.bf16 %v242
  %v307 = vunpack.c.l.bf16 %v243
  %v308 = vunpack.c.l.bf16 %v244
  %v309 = vunpack.c.l.bf16 %v245
  %v310 = vunpack.c.l.bf16 %v246
  %v311 = vunpack.c.l.bf16 %v247
  %v312 = vunpack.c.l.bf16 %v248
  %v313 = vunpack.c.l.bf16 %v249
  %v314 = vunpack.c.l.bf16 %v250
  %v315 = vunpack.c.l.bf16 %v251
  %v316 = vunpack.c.l.bf16 %v252
  %v317 = vunpack.c.l.bf16 %v253
  %v318 = vunpack.c.l.bf16 %v254
  %v319 = vunpack.c.l.bf16 %v255
  %v320 = vunpack.c.l.bf16 %v256
  %v321 = vunpack.c.l.bf16 %v257
  %v322 = vunpack.c.l.bf16 %v258
  %v323 = vunpack.c.l.bf16 %v259
  %v324 = vunpack.c.l.bf16 %v260
  %326 = vset.pattern.permute.xlu0 0
  %327 = vperm.xlu0 %326, %v261
  %v328 = vpop.permute.xlu0 %327
  %331 = vset.pattern.permute.xlu0 0
  %332 = vperm.xlu0 %331, %v262
  %v333 = vpop.permute.xlu0 %332
  %336 = vset.pattern.permute.xlu0 0
  %337 = vperm.xlu0 %336, %v263
  %v338 = vpop.permute.xlu0 %337
  %341 = vset.pattern.permute.xlu0 0
  %342 = vperm.xlu0 %341, %v264
  %v343 = vpop.permute.xlu0 %342
  %346 = vset.pattern.permute.xlu0 0
  %347 = vperm.xlu0 %346, %v265
  %v348 = vpop.permute.xlu0 %347
  %351 = vset.pattern.permute.xlu0 0
  %352 = vperm.xlu0 %351, %v266
  %v353 = vpop.permute.xlu0 %352
  %356 = vset.pattern.permute.xlu0 0
  %357 = vperm.xlu0 %356, %v267
  %v358 = vpop.permute.xlu0 %357
  %361 = vset.pattern.permute.xlu0 0
  %362 = vperm.xlu0 %361, %v268
  %v363 = vpop.permute.xlu0 %362
  %366 = vset.pattern.permute.xlu0 0
  %367 = vperm.xlu0 %366, %v269
  %v368 = vpop.permute.xlu0 %367
  %371 = vset.pattern.permute.xlu0 0
  %372 = vperm.xlu0 %371, %v270
  %v373 = vpop.permute.xlu0 %372
  %376 = vset.pattern.permute.xlu0 0
  %377 = vperm.xlu0 %376, %v271
  %v378 = vpop.permute.xlu0 %377
  %381 = vset.pattern.permute.xlu0 0
  %382 = vperm.xlu0 %381, %v272
  %v383 = vpop.permute.xlu0 %382
  %386 = vset.pattern.permute.xlu0 0
  %387 = vperm.xlu0 %386, %v273
  %v388 = vpop.permute.xlu0 %387
  %391 = vset.pattern.permute.xlu0 0
  %392 = vperm.xlu0 %391, %v274
  %v393 = vpop.permute.xlu0 %392
  %396 = vset.pattern.permute.xlu0 0
  %397 = vperm.xlu0 %396, %v275
  %v398 = vpop.permute.xlu0 %397
  %401 = vset.pattern.permute.xlu0 0
  %402 = vperm.xlu0 %401, %v276
  %v403 = vpop.permute.xlu0 %402
  %406 = vset.pattern.permute.xlu0 0
  %407 = vperm.xlu0 %406, %v277
  %v408 = vpop.permute.xlu0 %407
  %411 = vset.pattern.permute.xlu0 0
  %412 = vperm.xlu0 %411, %v278
  %v413 = vpop.permute.xlu0 %412
  %416 = vset.pattern.permute.xlu0 0
  %417 = vperm.xlu0 %416, %v279
  %v418 = vpop.permute.xlu0 %417
  %421 = vset.pattern.permute.xlu0 0
  %422 = vperm.xlu0 %421, %v280
  %v423 = vpop.permute.xlu0 %422
  %426 = vset.pattern.permute.xlu0 0
  %427 = vperm.xlu0 %426, %v281
  %v428 = vpop.permute.xlu0 %427
  %431 = vset.pattern.permute.xlu0 0
  %432 = vperm.xlu0 %431, %v282
  %v433 = vpop.permute.xlu0 %432
  %436 = vset.pattern.permute.xlu0 0
  %437 = vperm.xlu0 %436, %v283
  %v438 = vpop.permute.xlu0 %437
  %441 = vset.pattern.permute.xlu0 0
  %442 = vperm.xlu0 %441, %v284
  %v443 = vpop.permute.xlu0 %442
  %446 = vset.pattern.permute.xlu0 0
  %447 = vperm.xlu0 %446, %v285
  %v448 = vpop.permute.xlu0 %447
  %451 = vset.pattern.permute.xlu0 0
  %452 = vperm.xlu0 %451, %v286
  %v453 = vpop.permute.xlu0 %452
  %456 = vset.pattern.permute.xlu0 0
  %457 = vperm.xlu0 %456, %v287
  %v458 = vpop.permute.xlu0 %457
  %461 = vset.pattern.permute.xlu0 0
  %462 = vperm.xlu0 %461, %v288
  %v463 = vpop.permute.xlu0 %462
  %466 = vset.pattern.permute.xlu0 0
  %467 = vperm.xlu0 %466, %v289
  %v468 = vpop.permute.xlu0 %467
  %471 = vset.pattern.permute.xlu0 0
  %472 = vperm.xlu0 %471, %v290
  %v473 = vpop.permute.xlu0 %472
  %476 = vset.pattern.permute.xlu0 0
  %477 = vperm.xlu0 %476, %v291
  %v478 = vpop.permute.xlu0 %477
  %481 = vset.pattern.permute.xlu0 0
  %482 = vperm.xlu0 %481, %v292
  %v483 = vpop.permute.xlu0 %482
  %v485 = vmul.f32 %v293, %v328
  %v486 = vmul.f32 %v294, %v333
  %v487 = vmul.f32 %v295, %v338
  %v488 = vmul.f32 %v296, %v343
  %v489 = vmul.f32 %v297, %v348
  %v490 = vmul.f32 %v298, %v353
  %v491 = vmul.f32 %v299, %v358
  %v492 = vmul.f32 %v300, %v363
  %v493 = vmul.f32 %v301, %v368
  %v494 = vmul.f32 %v302, %v373
  %v495 = vmul.f32 %v303, %v378
  %v496 = vmul.f32 %v304, %v383
  %v497 = vmul.f32 %v305, %v388
  %v498 = vmul.f32 %v306, %v393
  %v499 = vmul.f32 %v307, %v398
  %v500 = vmul.f32 %v308, %v403
  %v501 = vmul.f32 %v309, %v408
  %v502 = vmul.f32 %v310, %v413
  %v503 = vmul.f32 %v311, %v418
  %v504 = vmul.f32 %v312, %v423
  %v505 = vmul.f32 %v313, %v428
  %v506 = vmul.f32 %v314, %v433
  %v507 = vmul.f32 %v315, %v438
  %v508 = vmul.f32 %v316, %v443
  %v509 = vmul.f32 %v317, %v448
  %v510 = vmul.f32 %v318, %v453
  %v511 = vmul.f32 %v319, %v458
  %v512 = vmul.f32 %v320, %v463
  %v513 = vmul.f32 %v321, %v468
  %v514 = vmul.f32 %v322, %v473
  %v515 = vmul.f32 %v323, %v478
  %v516 = vmul.f32 %v324, %v483
  %v517 = vpack.c.bf16 %v486, %v485
  %v518 = vpack.c.bf16 %v488, %v487
  %v519 = vpack.c.bf16 %v490, %v489
  %v520 = vpack.c.bf16 %v492, %v491
  %v521 = vpack.c.bf16 %v494, %v493
  %v522 = vpack.c.bf16 %v496, %v495
  %v523 = vpack.c.bf16 %v498, %v497
  %v524 = vpack.c.bf16 %v500, %v499
  %v525 = vpack.c.bf16 %v502, %v501
  %v526 = vpack.c.bf16 %v504, %v503
  %v527 = vpack.c.bf16 %v506, %v505
  %v528 = vpack.c.bf16 %v508, %v507
  %v529 = vpack.c.bf16 %v510, %v509
  %v530 = vpack.c.bf16 %v512, %v511
  %v531 = vpack.c.bf16 %v514, %v513
  %v532 = vpack.c.bf16 %v516, %v515
  %v533 = vld [vmem:[#allocation2] sm:$0xff]
  %v534 = vld [vmem:[#allocation2 + $0x8] sm:$0xff]
  %v535 = vld [vmem:[#allocation2 + $0x10] sm:$0xff]
  %v536 = vld [vmem:[#allocation2 + $0x18] sm:$0xff]
  %v537 = vld [vmem:[#allocation2 + $0x20] sm:$0xff]
  %v538 = vld [vmem:[#allocation2 + $0x28] sm:$0xff]
  %v539 = vld [vmem:[#allocation2 + $0x30] sm:$0xff]
  %v540 = vld [vmem:[#allocation2 + $0x38] sm:$0xff]
  %v541 = vld [vmem:[#allocation2 + $0x40] sm:$0xff]
  %v542 = vld [vmem:[#allocation2 + $0x48] sm:$0xff]
  %v543 = vld [vmem:[#allocation2 + $0x50] sm:$0xff]
  %v544 = vld [vmem:[#allocation2 + $0x58] sm:$0xff]
  %v545 = vld [vmem:[#allocation2 + $0x60] sm:$0xff]
  %v546 = vld [vmem:[#allocation2 + $0x68] sm:$0xff]
  %v547 = vld [vmem:[#allocation2 + $0x70] sm:$0xff]
  %v548 = vld [vmem:[#allocation2 + $0x78] sm:$0xff]
  %v549 = vld [vmem:[#allocation2 + $0x80] sm:$0xff]
  %v550 = vld [vmem:[#allocation2 + $0x88] sm:$0xff]
  %v551 = vld [vmem:[#allocation2 + $0x90] sm:$0xff]
  %v552 = vld [vmem:[#allocation2 + $0x98] sm:$0xff]
  %v553 = vld [vmem:[#allocation2 + $0xa0] sm:$0xff]
  %v554 = vld [vmem:[#allocation2 + $0xa8] sm:$0xff]
  %v555 = vld [vmem:[#allocation2 + $0xb0] sm:$0xff]
  %v556 = vld [vmem:[#allocation2 + $0xb8] sm:$0xff]
  %v557 = vld [vmem:[#allocation2 + $0xc0] sm:$0xff]
  %v558 = vld [vmem:[#allocation2 + $0xc8] sm:$0xff]
  %v559 = vld [vmem:[#allocation2 + $0xd0] sm:$0xff]
  %v560 = vld [vmem:[#allocation2 + $0xd8] sm:$0xff]
  %v561 = vld [vmem:[#allocation2 + $0xe0] sm:$0xff]
  %v562 = vld [vmem:[#allocation2 + $0xe8] sm:$0xff]
  %v563 = vld [vmem:[#allocation2 + $0xf0] sm:$0xff]
  %v564 = vld [vmem:[#allocation2 + $0xf8] sm:$0xff]
  %565 = vmatpush.bf16.msra.mxu0 %v524
  %566 = vmatpush.bf16.msra.mxu0 %v523
  %567 = vmatpush.bf16.msra.mxu0 %v522
  %568 = vmatpush.bf16.msra.mxu0 %v521
  %569 = vmatpush.bf16.msra.mxu0 %v520
  %570 = vmatpush.bf16.msra.mxu0 %v519
  %571 = vmatpush.bf16.msra.mxu0 %v518
  %572 = vmatpush.bf16.msra.mxu0 %v517
  %573 = vmatmul.bf16.gmra.mxu0 %v197
  %v574 = vpop.f32.mrf.mxu0
  %v575 = vadd.f32 0.0, %v574
  %v576 = vpop.f32.mrf.mxu0
  %v577 = vadd.f32 0.0, %v576
  %578 = vmatmul.bf16.gmra.mxu0 %v199
  %v579 = vpop.f32.mrf.mxu0
  %v580 = vadd.f32 0.0, %v579
  %v581 = vpop.f32.mrf.mxu0
  %v582 = vadd.f32 0.0, %v581
  %583 = vmatmul.bf16.gmra.mxu0 %v201
  %v584 = vpop.f32.mrf.mxu0
  %v585 = vadd.f32 0.0, %v584
  %v586 = vpop.f32.mrf.mxu0
  %v587 = vadd.f32 0.0, %v586
  %588 = vmatmul.bf16.gmra.mxu0 %v203
  %v589 = vpop.f32.mrf.mxu0
  %v590 = vadd.f32 0.0, %v589
  %v591 = vpop.f32.mrf.mxu0
  %v592 = vadd.f32 0.0, %v591
  %593 = vmatmul.bf16.gmra.mxu0 %v205
  %v594 = vpop.f32.mrf.mxu0
  %v595 = vadd.f32 0.0, %v594
  %v596 = vpop.f32.mrf.mxu0
  %v597 = vadd.f32 0.0, %v596
  %598 = vmatmul.bf16.gmra.mxu0 %v207
  %v599 = vpop.f32.mrf.mxu0
  %v600 = vadd.f32 0.0, %v599
  %v601 = vpop.f32.mrf.mxu0
  %v602 = vadd.f32 0.0, %v601
  %603 = vmatmul.bf16.gmra.mxu0 %v209
  %v604 = vpop.f32.mrf.mxu0
  %v605 = vadd.f32 0.0, %v604
  %v606 = vpop.f32.mrf.mxu0
  %v607 = vadd.f32 0.0, %v606
  %608 = vmatmul.bf16.gmra.mxu0 %v211
  %v609 = vpop.f32.mrf.mxu0
  %v610 = vadd.f32 0.0, %v609
  %v611 = vpop.f32.mrf.mxu0
  %v612 = vadd.f32 0.0, %v611
  %613 = vmatmul.bf16.gmra.mxu0 %v213
  %v614 = vpop.f32.mrf.mxu0
  %v615 = vadd.f32 0.0, %v614
  %v616 = vpop.f32.mrf.mxu0
  %v617 = vadd.f32 0.0, %v616
  %618 = vmatmul.bf16.gmra.mxu0 %v215
  %v619 = vpop.f32.mrf.mxu0
  %v620 = vadd.f32 0.0, %v619
  %v621 = vpop.f32.mrf.mxu0
  %v622 = vadd.f32 0.0, %v621
  %623 = vmatmul.bf16.gmra.mxu0 %v217
  %v624 = vpop.f32.mrf.mxu0
  %v625 = vadd.f32 0.0, %v624
  %v626 = vpop.f32.mrf.mxu0
  %v627 = vadd.f32 0.0, %v626
  %628 = vmatmul.bf16.gmra.mxu0 %v219
  %v629 = vpop.f32.mrf.mxu0
  %v630 = vadd.f32 0.0, %v629
  %v631 = vpop.f32.mrf.mxu0
  %v632 = vadd.f32 0.0, %v631
  %633 = vmatmul.bf16.gmra.mxu0 %v221
  %v634 = vpop.f32.mrf.mxu0
  %v635 = vadd.f32 0.0, %v634
  %v636 = vpop.f32.mrf.mxu0
  %v637 = vadd.f32 0.0, %v636
  %638 = vmatmul.bf16.gmra.mxu0 %v223
  %v639 = vpop.f32.mrf.mxu0
  %v640 = vadd.f32 0.0, %v639
  %v641 = vpop.f32.mrf.mxu0
  %v642 = vadd.f32 0.0, %v641
  %643 = vmatmul.bf16.gmra.mxu0 %v225
  %v644 = vpop.f32.mrf.mxu0
  %v645 = vadd.f32 0.0, %v644
  %v646 = vpop.f32.mrf.mxu0
  %v647 = vadd.f32 0.0, %v646
  %648 = vmatmul.bf16.gmra.mxu0 %v227
  %v649 = vpop.f32.mrf.mxu0
  %v650 = vadd.f32 0.0, %v649
  %v651 = vpop.f32.mrf.mxu0
  %v652 = vadd.f32 0.0, %v651
  %653 = vdwg.mxu0
  %654 = vmatpush.bf16.msra.mxu0 %v532
  %655 = vmatpush.bf16.msra.mxu0 %v531
  %656 = vmatpush.bf16.msra.mxu0 %v530
  %657 = vmatpush.bf16.msra.mxu0 %v529
  %658 = vmatpush.bf16.msra.mxu0 %v528
  %659 = vmatpush.bf16.msra.mxu0 %v527
  %660 = vmatpush.bf16.msra.mxu0 %v526
  %661 = vmatpush.bf16.msra.mxu0 %v525
  %662 = vmatmul.bf16.gmra.mxu0 %v198
  %v663 = vpop.f32.mrf.mxu0
  %v664 = vadd.f32 %v575, %v663
  %v665 = vpop.f32.mrf.mxu0
  %v666 = vadd.f32 %v577, %v665
  %667 = vmatmul.bf16.gmra.mxu0 %v200
  %v668 = vpop.f32.mrf.mxu0
  %v669 = vadd.f32 %v580, %v668
  %v670 = vpop.f32.mrf.mxu0
  %v671 = vadd.f32 %v582, %v670
  %672 = vmatmul.bf16.gmra.mxu0 %v202
  %v673 = vpop.f32.mrf.mxu0
  %v674 = vadd.f32 %v585, %v673
  %v675 = vpop.f32.mrf.mxu0
  %v676 = vadd.f32 %v587, %v675
  %677 = vmatmul.bf16.gmra.mxu0 %v204
  %v678 = vpop.f32.mrf.mxu0
  %v679 = vadd.f32 %v590, %v678
  %v680 = vpop.f32.mrf.mxu0
  %v681 = vadd.f32 %v592, %v680
  %682 = vmatmul.bf16.gmra.mxu0 %v206
  %v683 = vpop.f32.mrf.mxu0
  %v684 = vadd.f32 %v595, %v683
  %v685 = vpop.f32.mrf.mxu0
  %v686 = vadd.f32 %v597, %v685
  %687 = vmatmul.bf16.gmra.mxu0 %v208
  %v688 = vpop.f32.mrf.mxu0
  %v689 = vadd.f32 %v600, %v688
  %v690 = vpop.f32.mrf.mxu0
  %v691 = vadd.f32 %v602, %v690
  %692 = vmatmul.bf16.gmra.mxu0 %v210
  %v693 = vpop.f32.mrf.mxu0
  %v694 = vadd.f32 %v605, %v693
  %v695 = vpop.f32.mrf.mxu0
  %v696 = vadd.f32 %v607, %v695
  %697 = vmatmul.bf16.gmra.mxu0 %v212
  %v698 = vpop.f32.mrf.mxu0
  %v699 = vadd.f32 %v610, %v698
  %v700 = vpop.f32.mrf.mxu0
  %v701 = vadd.f32 %v612, %v700
  %702 = vmatmul.bf16.gmra.mxu0 %v214
  %v703 = vpop.f32.mrf.mxu0
  %v704 = vadd.f32 %v615, %v703
  %v705 = vpop.f32.mrf.mxu0
  %v706 = vadd.f32 %v617, %v705
  %707 = vmatmul.bf16.gmra.mxu0 %v216
  %v708 = vpop.f32.mrf.mxu0
  %v709 = vadd.f32 %v620, %v708
  %v710 = vpop.f32.mrf.mxu0
  %v711 = vadd.f32 %v622, %v710
  %712 = vmatmul.bf16.gmra.mxu0 %v218
  %v713 = vpop.f32.mrf.mxu0
  %v714 = vadd.f32 %v625, %v713
  %v715 = vpop.f32.mrf.mxu0
  %v716 = vadd.f32 %v627, %v715
  %717 = vmatmul.bf16.gmra.mxu0 %v220
  %v718 = vpop.f32.mrf.mxu0
  %v719 = vadd.f32 %v630, %v718
  %v720 = vpop.f32.mrf.mxu0
  %v721 = vadd.f32 %v632, %v720
  %722 = vmatmul.bf16.gmra.mxu0 %v222
  %v723 = vpop.f32.mrf.mxu0
  %v724 = vadd.f32 %v635, %v723
  %v725 = vpop.f32.mrf.mxu0
  %v726 = vadd.f32 %v637, %v725
  %727 = vmatmul.bf16.gmra.mxu0 %v224
  %v728 = vpop.f32.mrf.mxu0
  %v729 = vadd.f32 %v640, %v728
  %v730 = vpop.f32.mrf.mxu0
  %v731 = vadd.f32 %v642, %v730
  %732 = vmatmul.bf16.gmra.mxu0 %v226
  %v733 = vpop.f32.mrf.mxu0
  %v734 = vadd.f32 %v645, %v733
  %v735 = vpop.f32.mrf.mxu0
  %v736 = vadd.f32 %v647, %v735
  %737 = vmatmul.bf16.gmra.mxu0 %v228
  %v738 = vpop.f32.mrf.mxu0
  %v739 = vadd.f32 %v650, %v738
  %v740 = vpop.f32.mrf.mxu0
  %v741 = vadd.f32 %v652, %v740
  %742 = vdwg.mxu0
  %v743 = vadd.f32 %v533, %v664
  %v744 = vadd.f32 %v534, %v666
  %v745 = vadd.f32 %v535, %v669
  %v746 = vadd.f32 %v536, %v671
  %v747 = vadd.f32 %v537, %v674
  %v748 = vadd.f32 %v538, %v676
  %v749 = vadd.f32 %v539, %v679
  %v750 = vadd.f32 %v540, %v681
  %v751 = vadd.f32 %v541, %v684
  %v752 = vadd.f32 %v542, %v686
  %v753 = vadd.f32 %v543, %v689
  %v754 = vadd.f32 %v544, %v691
  %v755 = vadd.f32 %v545, %v694
  %v756 = vadd.f32 %v546, %v696
  %v757 = vadd.f32 %v547, %v699
  %v758 = vadd.f32 %v548, %v701
  %v759 = vadd.f32 %v549, %v704
  %v760 = vadd.f32 %v550, %v706
  %v761 = vadd.f32 %v551, %v709
  %v762 = vadd.f32 %v552, %v711
  %v763 = vadd.f32 %v553, %v714
  %v764 = vadd.f32 %v554, %v716
  %v765 = vadd.f32 %v555, %v719
  %v766 = vadd.f32 %v556, %v721
  %v767 = vadd.f32 %v557, %v724
  %v768 = vadd.f32 %v558, %v726
  %v769 = vadd.f32 %v559, %v729
  %v770 = vadd.f32 %v560, %v731
  %v771 = vadd.f32 %v561, %v734
  %v772 = vadd.f32 %v562, %v736
  %v773 = vadd.f32 %v563, %v739
  %v774 = vadd.f32 %v564, %v741
  %775 = vst [vmem:[#allocation2] sm:$0xff] %v743
  %776 = vst [vmem:[#allocation2 + $0x8] sm:$0xff] %v744
  %777 = vst [vmem:[#allocation2 + $0x10] sm:$0xff] %v745
  %778 = vst [vmem:[#allocation2 + $0x18] sm:$0xff] %v746
  %779 = vst [vmem:[#allocation2 + $0x20] sm:$0xff] %v747
  %780 = vst [vmem:[#allocation2 + $0x28] sm:$0xff] %v748
  %781 = vst [vmem:[#allocation2 + $0x30] sm:$0xff] %v749
  %782 = vst [vmem:[#allocation2 + $0x38] sm:$0xff] %v750
  %783 = vst [vmem:[#allocation2 + $0x40] sm:$0xff] %v751
  %784 = vst [vmem:[#allocation2 + $0x48] sm:$0xff] %v752
  %785 = vst [vmem:[#allocation2 + $0x50] sm:$0xff] %v753
  %786 = vst [vmem:[#allocation2 + $0x58] sm:$0xff] %v754
  %787 = vst [vmem:[#allocation2 + $0x60] sm:$0xff] %v755
  %788 = vst [vmem:[#allocation2 + $0x68] sm:$0xff] %v756
  %789 = vst [vmem:[#allocation2 + $0x70] sm:$0xff] %v757
  %790 = vst [vmem:[#allocation2 + $0x78] sm:$0xff] %v758
  %791 = vst [vmem:[#allocation2 + $0x80] sm:$0xff] %v759
  %792 = vst [vmem:[#allocation2 + $0x88] sm:$0xff] %v760
  %793 = vst [vmem:[#allocation2 + $0x90] sm:$0xff] %v761
  %794 = vst [vmem:[#allocation2 + $0x98] sm:$0xff] %v762
  %795 = vst [vmem:[#allocation2 + $0xa0] sm:$0xff] %v763
  %796 = vst [vmem:[#allocation2 + $0xa8] sm:$0xff] %v764
  %797 = vst [vmem:[#allocation2 + $0xb0] sm:$0xff] %v765
  %798 = vst [vmem:[#allocation2 + $0xb8] sm:$0xff] %v766
  %799 = vst [vmem:[#allocation2 + $0xc0] sm:$0xff] %v767
  %800 = vst [vmem:[#allocation2 + $0xc8] sm:$0xff] %v768
  %801 = vst [vmem:[#allocation2 + $0xd0] sm:$0xff] %v769
  %802 = vst [vmem:[#allocation2 + $0xd8] sm:$0xff] %v770
  %803 = vst [vmem:[#allocation2 + $0xe0] sm:$0xff] %v771
  %804 = vst [vmem:[#allocation2 + $0xe8] sm:$0xff] %v772
  %805 = vst [vmem:[#allocation2 + $0xf0] sm:$0xff] %v773
  %806 = vst [vmem:[#allocation2 + $0xf8] sm:$0xff] %v774
  // Predicated region
  $region22: #{qgcn_forward.9} parent=0 // pred_check
    %p807 = pneg %p17
  $region23: #{qgcn_forward.9} parent=0 // pred_check_branch
    %809 = sbr.rel (%p807) target = $region25
  $region24: #{qgcn_forward.9} parent=0 // pred_region
    %v810 = vld [vmem:[#allocation2] sm:$0xff]
    %v811 = vld [vmem:[#allocation2 + $0x8] sm:$0xff]
    %v812 = vld [vmem:[#allocation2 + $0x10] sm:$0xff]
    %v813 = vld [vmem:[#allocation2 + $0x18] sm:$0xff]
    %v814 = vld [vmem:[#allocation2 + $0x20] sm:$0xff]
    %v815 = vld [vmem:[#allocation2 + $0x28] sm:$0xff]
    %v816 = vld [vmem:[#allocation2 + $0x30] sm:$0xff]
    %v817 = vld [vmem:[#allocation2 + $0x38] sm:$0xff]
    %v818 = vld [vmem:[#allocation2 + $0x40] sm:$0xff]
    %v819 = vld [vmem:[#allocation2 + $0x48] sm:$0xff]
    %v820 = vld [vmem:[#allocation2 + $0x50] sm:$0xff]
    %v821 = vld [vmem:[#allocation2 + $0x58] sm:$0xff]
    %v822 = vld [vmem:[#allocation2 + $0x60] sm:$0xff]
    %v823 = vld [vmem:[#allocation2 + $0x68] sm:$0xff]
    %v824 = vld [vmem:[#allocation2 + $0x70] sm:$0xff]
    %v825 = vld [vmem:[#allocation2 + $0x78] sm:$0xff]
    %v826 = vld [vmem:[#allocation2 + $0x80] sm:$0xff]
    %v827 = vld [vmem:[#allocation2 + $0x88] sm:$0xff]
    %v828 = vld [vmem:[#allocation2 + $0x90] sm:$0xff]
    %v829 = vld [vmem:[#allocation2 + $0x98] sm:$0xff]
    %v830 = vld [vmem:[#allocation2 + $0xa0] sm:$0xff]
    %v831 = vld [vmem:[#allocation2 + $0xa8] sm:$0xff]
    %v832 = vld [vmem:[#allocation2 + $0xb0] sm:$0xff]
    %v833 = vld [vmem:[#allocation2 + $0xb8] sm:$0xff]
    %v834 = vld [vmem:[#allocation2 + $0xc0] sm:$0xff]
    %v835 = vld [vmem:[#allocation2 + $0xc8] sm:$0xff]
    %v836 = vld [vmem:[#allocation2 + $0xd0] sm:$0xff]
    %v837 = vld [vmem:[#allocation2 + $0xd8] sm:$0xff]
    %v838 = vld [vmem:[#allocation2 + $0xe0] sm:$0xff]
    %v839 = vld [vmem:[#allocation2 + $0xe8] sm:$0xff]
    %v840 = vld [vmem:[#allocation2 + $0xf0] sm:$0xff]
    %v841 = vld [vmem:[#allocation2 + $0xf8] sm:$0xff]
    %v842 = vld [vmem:[%s3] sm:$0xff]
    %v843 = vld [vmem:[%s3 + $0x8] sm:$0xff]
    %v844 = vld [vmem:[%s3 + $0x10] sm:$0xff]
    %v845 = vld [vmem:[%s3 + $0x18] sm:$0xff]
    %v846 = vld [vmem:[%s3 + $0x20] sm:$0xff]
    %v847 = vld [vmem:[%s3 + $0x28] sm:$0xff]
    %v848 = vld [vmem:[%s3 + $0x30] sm:$0xff]
    %v849 = vld [vmem:[%s3 + $0x38] sm:$0xff]
    %v850 = vld [vmem:[%s3 + $0x40] sm:$0xff]
    %v851 = vld [vmem:[%s3 + $0x48] sm:$0xff]
    %v852 = vld [vmem:[%s3 + $0x50] sm:$0xff]
    %v853 = vld [vmem:[%s3 + $0x58] sm:$0xff]
    %v854 = vld [vmem:[%s3 + $0x60] sm:$0xff]
    %v855 = vld [vmem:[%s3 + $0x68] sm:$0xff]
    %v856 = vld [vmem:[%s3 + $0x70] sm:$0xff]
    %v857 = vld [vmem:[%s3 + $0x78] sm:$0xff]
    %v858 = vld [vmem:[%s3 + $0x80] sm:$0xff]
    %v859 = vld [vmem:[%s3 + $0x88] sm:$0xff]
    %v860 = vld [vmem:[%s3 + $0x90] sm:$0xff]
    %v861 = vld [vmem:[%s3 + $0x98] sm:$0xff]
    %v862 = vld [vmem:[%s3 + $0xa0] sm:$0xff]
    %v863 = vld [vmem:[%s3 + $0xa8] sm:$0xff]
    %v864 = vld [vmem:[%s3 + $0xb0] sm:$0xff]
    %v865 = vld [vmem:[%s3 + $0xb8] sm:$0xff]
    %v866 = vld [vmem:[%s3 + $0xc0] sm:$0xff]
    %v867 = vld [vmem:[%s3 + $0xc8] sm:$0xff]
    %v868 = vld [vmem:[%s3 + $0xd0] sm:$0xff]
    %v869 = vld [vmem:[%s3 + $0xd8] sm:$0xff]
    %v870 = vld [vmem:[%s3 + $0xe0] sm:$0xff]
    %v871 = vld [vmem:[%s3 + $0xe8] sm:$0xff]
    %v872 = vld [vmem:[%s3 + $0xf0] sm:$0xff]
    %v873 = vld [vmem:[%s3 + $0xf8] sm:$0xff]
    %875 = vset.pattern.permute.xlu0 0
    %876 = vperm.xlu0 %875, %v842
    %v877 = vpop.permute.xlu0 %876
    %880 = vset.pattern.permute.xlu0 0
    %881 = vperm.xlu0 %880, %v843
    %v882 = vpop.permute.xlu0 %881
    %885 = vset.pattern.permute.xlu0 0
    %886 = vperm.xlu0 %885, %v844
    %v887 = vpop.permute.xlu0 %886
    %890 = vset.pattern.permute.xlu0 0
    %891 = vperm.xlu0 %890, %v845
    %v892 = vpop.permute.xlu0 %891
    %895 = vset.pattern.permute.xlu0 0
    %896 = vperm.xlu0 %895, %v846
    %v897 = vpop.permute.xlu0 %896
    %900 = vset.pattern.permute.xlu0 0
    %901 = vperm.xlu0 %900, %v847
    %v902 = vpop.permute.xlu0 %901
    %905 = vset.pattern.permute.xlu0 0
    %906 = vperm.xlu0 %905, %v848
    %v907 = vpop.permute.xlu0 %906
    %910 = vset.pattern.permute.xlu0 0
    %911 = vperm.xlu0 %910, %v849
    %v912 = vpop.permute.xlu0 %911
    %915 = vset.pattern.permute.xlu0 0
    %916 = vperm.xlu0 %915, %v850
    %v917 = vpop.permute.xlu0 %916
    %920 = vset.pattern.permute.xlu0 0
    %921 = vperm.xlu0 %920, %v851
    %v922 = vpop.permute.xlu0 %921
    %925 = vset.pattern.permute.xlu0 0
    %926 = vperm.xlu0 %925, %v852
    %v927 = vpop.permute.xlu0 %926
    %930 = vset.pattern.permute.xlu0 0
    %931 = vperm.xlu0 %930, %v853
    %v932 = vpop.permute.xlu0 %931
    %935 = vset.pattern.permute.xlu0 0
    %936 = vperm.xlu0 %935, %v854
    %v937 = vpop.permute.xlu0 %936
    %940 = vset.pattern.permute.xlu0 0
    %941 = vperm.xlu0 %940, %v855
    %v942 = vpop.permute.xlu0 %941
    %945 = vset.pattern.permute.xlu0 0
    %946 = vperm.xlu0 %945, %v856
    %v947 = vpop.permute.xlu0 %946
    %950 = vset.pattern.permute.xlu0 0
    %951 = vperm.xlu0 %950, %v857
    %v952 = vpop.permute.xlu0 %951
    %955 = vset.pattern.permute.xlu0 0
    %956 = vperm.xlu0 %955, %v858
    %v957 = vpop.permute.xlu0 %956
    %960 = vset.pattern.permute.xlu0 0
    %961 = vperm.xlu0 %960, %v859
    %v962 = vpop.permute.xlu0 %961
    %965 = vset.pattern.permute.xlu0 0
    %966 = vperm.xlu0 %965, %v860
    %v967 = vpop.permute.xlu0 %966
    %970 = vset.pattern.permute.xlu0 0
    %971 = vperm.xlu0 %970, %v861
    %v972 = vpop.permute.xlu0 %971
    %975 = vset.pattern.permute.xlu0 0
    %976 = vperm.xlu0 %975, %v862
    %v977 = vpop.permute.xlu0 %976
    %980 = vset.pattern.permute.xlu0 0
    %981 = vperm.xlu0 %980, %v863
    %v982 = vpop.permute.xlu0 %981
    %985 = vset.pattern.permute.xlu0 0
    %986 = vperm.xlu0 %985, %v864
    %v987 = vpop.permute.xlu0 %986
    %990 = vset.pattern.permute.xlu0 0
    %991 = vperm.xlu0 %990, %v865
    %v992 = vpop.permute.xlu0 %991
    %995 = vset.pattern.permute.xlu0 0
    %996 = vperm.xlu0 %995, %v866
    %v997 = vpop.permute.xlu0 %996
    %1000 = vset.pattern.permute.xlu0 0
    %1001 = vperm.xlu0 %1000, %v867
    %v1002 = vpop.permute.xlu0 %1001
    %1005 = vset.pattern.permute.xlu0 0
    %1006 = vperm.xlu0 %1005, %v868
    %v1007 = vpop.permute.xlu0 %1006
    %1010 = vset.pattern.permute.xlu0 0
    %1011 = vperm.xlu0 %1010, %v869
    %v1012 = vpop.permute.xlu0 %1011
    %1015 = vset.pattern.permute.xlu0 0
    %1016 = vperm.xlu0 %1015, %v870
    %v1017 = vpop.permute.xlu0 %1016
    %1020 = vset.pattern.permute.xlu0 0
    %1021 = vperm.xlu0 %1020, %v871
    %v1022 = vpop.permute.xlu0 %1021
    %1025 = vset.pattern.permute.xlu0 0
    %1026 = vperm.xlu0 %1025, %v872
    %v1027 = vpop.permute.xlu0 %1026
    %1030 = vset.pattern.permute.xlu0 0
    %1031 = vperm.xlu0 %1030, %v873
    %v1032 = vpop.permute.xlu0 %1031
    %v1034 = vmul.f32 %v810, %v877
    %v1035 = vmul.f32 %v811, %v882
    %v1036 = vmul.f32 %v812, %v887
    %v1037 = vmul.f32 %v813, %v892
    %v1038 = vmul.f32 %v814, %v897
    %v1039 = vmul.f32 %v815, %v902
    %v1040 = vmul.f32 %v816, %v907
    %v1041 = vmul.f32 %v817, %v912
    %v1042 = vmul.f32 %v818, %v917
    %v1043 = vmul.f32 %v819, %v922
    %v1044 = vmul.f32 %v820, %v927
    %v1045 = vmul.f32 %v821, %v932
    %v1046 = vmul.f32 %v822, %v937
    %v1047 = vmul.f32 %v823, %v942
    %v1048 = vmul.f32 %v824, %v947
    %v1049 = vmul.f32 %v825, %v952
    %v1050 = vmul.f32 %v826, %v957
    %v1051 = vmul.f32 %v827, %v962
    %v1052 = vmul.f32 %v828, %v967
    %v1053 = vmul.f32 %v829, %v972
    %v1054 = vmul.f32 %v830, %v977
    %v1055 = vmul.f32 %v831, %v982
    %v1056 = vmul.f32 %v832, %v987
    %v1057 = vmul.f32 %v833, %v992
    %v1058 = vmul.f32 %v834, %v997
    %v1059 = vmul.f32 %v835, %v1002
    %v1060 = vmul.f32 %v836, %v1007
    %v1061 = vmul.f32 %v837, %v1012
    %v1062 = vmul.f32 %v838, %v1017
    %v1063 = vmul.f32 %v839, %v1022
    %v1064 = vmul.f32 %v840, %v1027
    %v1065 = vmul.f32 %v841, %v1032
    %v1066 = vpack.c.bf16 %v1034, %v1034
    %v1067 = vpack.c.bf16 %v1035, %v1035
    %v1068 = vpack.c.bf16 %v1036, %v1036
    %v1069 = vpack.c.bf16 %v1037, %v1037
    %v1070 = vpack.c.bf16 %v1038, %v1038
    %v1071 = vpack.c.bf16 %v1039, %v1039
    %v1072 = vpack.c.bf16 %v1040, %v1040
    %v1073 = vpack.c.bf16 %v1041, %v1041
    %v1074 = vpack.c.bf16 %v1042, %v1042
    %v1075 = vpack.c.bf16 %v1043, %v1043
    %v1076 = vpack.c.bf16 %v1044, %v1044
    %v1077 = vpack.c.bf16 %v1045, %v1045
    %v1078 = vpack.c.bf16 %v1046, %v1046
    %v1079 = vpack.c.bf16 %v1047, %v1047
    %v1080 = vpack.c.bf16 %v1048, %v1048
    %v1081 = vpack.c.bf16 %v1049, %v1049
    %v1082 = vpack.c.bf16 %v1050, %v1050
    %v1083 = vpack.c.bf16 %v1051, %v1051
    %v1084 = vpack.c.bf16 %v1052, %v1052
    %v1085 = vpack.c.bf16 %v1053, %v1053
    %v1086 = vpack.c.bf16 %v1054, %v1054
    %v1087 = vpack.c.bf16 %v1055, %v1055
    %v1088 = vpack.c.bf16 %v1056, %v1056
    %v1089 = vpack.c.bf16 %v1057, %v1057
    %v1090 = vpack.c.bf16 %v1058, %v1058
    %v1091 = vpack.c.bf16 %v1059, %v1059
    %v1092 = vpack.c.bf16 %v1060, %v1060
    %v1093 = vpack.c.bf16 %v1061, %v1061
    %v1094 = vpack.c.bf16 %v1062, %v1062
    %v1095 = vpack.c.bf16 %v1063, %v1063
    %v1096 = vpack.c.bf16 %v1064, %v1064
    %v1097 = vpack.c.bf16 %v1065, %v1065
    %1098 = vst [vmem:[%s4] sm:$0xf] %v1066
    %1099 = vst [vmem:[%s4 + $0x4] sm:$0xf] %v1067
    %1100 = vst [vmem:[%s4 + $0x8] sm:$0xf] %v1068
    %1101 = vst [vmem:[%s4 + $0xc] sm:$0xf] %v1069
    %1102 = vst [vmem:[%s4 + $0x10] sm:$0xf] %v1070
    %1103 = vst [vmem:[%s4 + $0x14] sm:$0xf] %v1071
    %1104 = vst [vmem:[%s4 + $0x18] sm:$0xf] %v1072
    %1105 = vst [vmem:[%s4 + $0x1c] sm:$0xf] %v1073
    %1106 = vst [vmem:[%s4 + $0x20] sm:$0xf] %v1074
    %1107 = vst [vmem:[%s4 + $0x24] sm:$0xf] %v1075
    %1108 = vst [vmem:[%s4 + $0x28] sm:$0xf] %v1076
    %1109 = vst [vmem:[%s4 + $0x2c] sm:$0xf] %v1077
    %1110 = vst [vmem:[%s4 + $0x30] sm:$0xf] %v1078
    %1111 = vst [vmem:[%s4 + $0x34] sm:$0xf] %v1079
    %1112 = vst [vmem:[%s4 + $0x38] sm:$0xf] %v1080
    %1113 = vst [vmem:[%s4 + $0x3c] sm:$0xf] %v1081
    %1114 = vst [vmem:[%s4 + $0x40] sm:$0xf] %v1082
    %1115 = vst [vmem:[%s4 + $0x44] sm:$0xf] %v1083
    %1116 = vst [vmem:[%s4 + $0x48] sm:$0xf] %v1084
    %1117 = vst [vmem:[%s4 + $0x4c] sm:$0xf] %v1085
    %1118 = vst [vmem:[%s4 + $0x50] sm:$0xf] %v1086
    %1119 = vst [vmem:[%s4 + $0x54] sm:$0xf] %v1087
    %1120 = vst [vmem:[%s4 + $0x58] sm:$0xf] %v1088
    %1121 = vst [vmem:[%s4 + $0x5c] sm:$0xf] %v1089
    %1122 = vst [vmem:[%s4 + $0x60] sm:$0xf] %v1090
    %1123 = vst [vmem:[%s4 + $0x64] sm:$0xf] %v1091
    %1124 = vst [vmem:[%s4 + $0x68] sm:$0xf] %v1092
    %1125 = vst [vmem:[%s4 + $0x6c] sm:$0xf] %v1093
    %1126 = vst [vmem:[%s4 + $0x70] sm:$0xf] %v1094
    %1127 = vst [vmem:[%s4 + $0x74] sm:$0xf] %v1095
    %1128 = vst [vmem:[%s4 + $0x78] sm:$0xf] %v1096
    %1129 = vst [vmem:[%s4 + $0x7c] sm:$0xf] %v1097
  $region25: #{qgcn_forward.9} parent=0 // pred_fallthru
    _
  // Predicated region
  $region26: #{qgcn_forward.9} parent=0 // pred_check
    _
  $region27: #{qgcn_forward.9} parent=0 // pred_check_branch
    %1131 = sbr.rel (0) target = $region29
  $region28: #{qgcn_forward.9} parent=0 // pred_region
    _
  $region29: #{qgcn_forward.9} parent=0 // pred_fallthru
    _
  // Predicated region
  $region30: #{qgcn_forward.9} parent=0 // pred_check
    _
  $region31: #{qgcn_forward.9} parent=0 // pred_check_branch
    %1133 = sbr.rel (0) target = $region33
  $region32: #{qgcn_forward.9} parent=0 // pred_region
    _
  $region33: #{qgcn_forward.9} parent=0 // pred_fallthru
    _

// kernel: qgcn_forward.15
$region0: #{qgcn_forward.15}
  #allocation0 [shape = 'u32[]', space=smem, size = 0x4, offset = 0x4, fixed_abs, tag = 'smem constant byte address 0x4 - core index']
  #allocation1 [shape = 'u32[72,128]{1,0:T(1,128)}', space=vmem, size = 0x9000, scoped, tag = 'internal scratch']
  %s0 = inlined_call_operand.vmem [shape: bf16[256,128], index: 0, kind: input, shape index: {}]
  %s1 = inlined_call_operand.vmem [shape: bf16[128,128], index: 1, kind: input, shape index: {}]
  %s2 = inlined_call_operand.vmem [shape: f32[256,1], index: 2, kind: input, shape index: {}]
  %s3 = inlined_call_operand.vmem [shape: bf16[256,128], index: 3, kind: output, shape index: {}]
  %s4 = sld [smem:[#allocation0]]
  $region22: #{qgcn_forward.15} parent=0
    _
  %s6 = ssub.s32 1, %s4
  %s7 = scalar_select 0, %s6, %s4
  // Predicated region
  $region2: #{qgcn_forward.15} parent=0 // pred_check
    _
  $region3: #{qgcn_forward.15} parent=0 // pred_check_branch
    %9 = sbr.rel (0) target = $region5
  $region4: #{qgcn_forward.15} parent=0 // pred_region
    _
  $region5: #{qgcn_forward.15} parent=0 // pred_fallthru
    _
  // Predicated region
  $region6: #{qgcn_forward.15} parent=0 // pred_check
    _
  $region7: #{qgcn_forward.15} parent=0 // pred_check_branch
    %11 = sbr.rel (0) target = $region9
  $region8: #{qgcn_forward.15} parent=0 // pred_region
    _
  $region9: #{qgcn_forward.15} parent=0 // pred_fallthru
    _
  // Predicated region
  $region10: #{qgcn_forward.15} parent=0 // pred_check
    _
  $region11: #{qgcn_forward.15} parent=0 // pred_check_branch
    %13 = sbr.rel (0) target = $region13
  $region12: #{qgcn_forward.15} parent=0 // pred_region
    _
  $region13: #{qgcn_forward.15} parent=0 // pred_fallthru
    _
  %v14 = vld [vmem:[%s0] sm:$0xf]
  %v15 = vld [vmem:[%s0 + $0x4] sm:$0xf]
  %v16 = vld [vmem:[%s0 + $0x8] sm:$0xf]
  %v17 = vld [vmem:[%s0 + $0xc] sm:$0xf]
  %v18 = vld [vmem:[%s0 + $0x10] sm:$0xf]
  %v19 = vld [vmem:[%s0 + $0x14] sm:$0xf]
  %v20 = vld [vmem:[%s0 + $0x18] sm:$0xf]
  %v21 = vld [vmem:[%s0 + $0x1c] sm:$0xf]
  %v22 = vld [vmem:[%s0 + $0x20] sm:$0xf]
  %v23 = vld [vmem:[%s0 + $0x24] sm:$0xf]
  %v24 = vld [vmem:[%s0 + $0x28] sm:$0xf]
  %v25 = vld [vmem:[%s0 + $0x2c] sm:$0xf]
  %v26 = vld [vmem:[%s0 + $0x30] sm:$0xf]
  %v27 = vld [vmem:[%s0 + $0x34] sm:$0xf]
  %v28 = vld [vmem:[%s0 + $0x38] sm:$0xf]
  %v29 = vld [vmem:[%s0 + $0x3c] sm:$0xf]
  %v30 = vld [vmem:[%s0 + $0x40] sm:$0xf]
  %v31 = vld [vmem:[%s0 + $0x44] sm:$0xf]
  %v32 = vld [vmem:[%s0 + $0x48] sm:$0xf]
  %v33 = vld [vmem:[%s0 + $0x4c] sm:$0xf]
  %v34 = vld [vmem:[%s0 + $0x50] sm:$0xf]
  %v35 = vld [vmem:[%s0 + $0x54] sm:$0xf]
  %v36 = vld [vmem:[%s0 + $0x58] sm:$0xf]
  %v37 = vld [vmem:[%s0 + $0x5c] sm:$0xf]
  %v38 = vld [vmem:[%s0 + $0x60] sm:$0xf]
  %v39 = vld [vmem:[%s0 + $0x64] sm:$0xf]
  %v40 = vld [vmem:[%s0 + $0x68] sm:$0xf]
  %v41 = vld [vmem:[%s0 + $0x6c] sm:$0xf]
  %v42 = vld [vmem:[%s0 + $0x70] sm:$0xf]
  %v43 = vld [vmem:[%s0 + $0x74] sm:$0xf]
  %v44 = vld [vmem:[%s0 + $0x78] sm:$0xf]
  %v45 = vld [vmem:[%s0 + $0x7c] sm:$0xf]
  %v46 = vld [vmem:[%s1] sm:$0xf]
  %v47 = vld [vmem:[%s1 + $0x4] sm:$0xf]
  %v48 = vld [vmem:[%s1 + $0x8] sm:$0xf]
  %v49 = vld [vmem:[%s1 + $0xc] sm:$0xf]
  %v50 = vld [vmem:[%s1 + $0x10] sm:$0xf]
  %v51 = vld [vmem:[%s1 + $0x14] sm:$0xf]
  %v52 = vld [vmem:[%s1 + $0x18] sm:$0xf]
  %v53 = vld [vmem:[%s1 + $0x1c] sm:$0xf]
  %v54 = vld [vmem:[%s1 + $0x20] sm:$0xf]
  %v55 = vld [vmem:[%s1 + $0x24] sm:$0xf]
  %v56 = vld [vmem:[%s1 + $0x28] sm:$0xf]
  %v57 = vld [vmem:[%s1 + $0x2c] sm:$0xf]
  %v58 = vld [vmem:[%s1 + $0x30] sm:$0xf]
  %v59 = vld [vmem:[%s1 + $0x34] sm:$0xf]
  %v60 = vld [vmem:[%s1 + $0x38] sm:$0xf]
  %v61 = vld [vmem:[%s1 + $0x3c] sm:$0xf]
  %v94 = vunpack.c.l.b16 %v14
  %v95 = vunpack.c.l.b16 %v15
  %v96 = vunpack.c.l.b16 %v16
  %v97 = vunpack.c.l.b16 %v17
  %v98 = vunpack.c.l.b16 %v18
  %v99 = vunpack.c.l.b16 %v19
  %v100 = vunpack.c.l.b16 %v20
  %v101 = vunpack.c.l.b16 %v21
  %v102 = vunpack.c.l.b16 %v22
  %v103 = vunpack.c.l.b16 %v23
  %v104 = vunpack.c.l.b16 %v24
  %v105 = vunpack.c.l.b16 %v25
  %v106 = vunpack.c.l.b16 %v26
  %v107 = vunpack.c.l.b16 %v27
  %v108 = vunpack.c.l.b16 %v28
  %v109 = vunpack.c.l.b16 %v29
  %v110 = vunpack.c.l.b16 %v30
  %v111 = vunpack.c.l.b16 %v31
  %v112 = vunpack.c.l.b16 %v32
  %v113 = vunpack.c.l.b16 %v33
  %v114 = vunpack.c.l.b16 %v34
  %v115 = vunpack.c.l.b16 %v35
  %v116 = vunpack.c.l.b16 %v36
  %v117 = vunpack.c.l.b16 %v37
  %v118 = vunpack.c.l.b16 %v38
  %v119 = vunpack.c.l.b16 %v39
  %v120 = vunpack.c.l.b16 %v40
  %v121 = vunpack.c.l.b16 %v41
  %v122 = vunpack.c.l.b16 %v42
  %v123 = vunpack.c.l.b16 %v43
  %v124 = vunpack.c.l.b16 %v44
  %v125 = vunpack.c.l.b16 %v45
  %v126 = vpack.c.b16 %v95, %v94
  %v127 = vpack.c.b16 %v97, %v96
  %v128 = vpack.c.b16 %v99, %v98
  %v129 = vpack.c.b16 %v101, %v100
  %v130 = vpack.c.b16 %v103, %v102
  %v131 = vpack.c.b16 %v105, %v104
  %v132 = vpack.c.b16 %v107, %v106
  %v133 = vpack.c.b16 %v109, %v108
  %v134 = vpack.c.b16 %v111, %v110
  %v135 = vpack.c.b16 %v113, %v112
  %v136 = vpack.c.b16 %v115, %v114
  %v137 = vpack.c.b16 %v117, %v116
  %v138 = vpack.c.b16 %v119, %v118
  %v139 = vpack.c.b16 %v121, %v120
  %v140 = vpack.c.b16 %v123, %v122
  %v141 = vpack.c.b16 %v125, %v124
  %v174 = vunpack.c.l.b16 %v46
  %v175 = vunpack.c.l.b16 %v47
  %v176 = vunpack.c.l.b16 %v48
  %v177 = vunpack.c.l.b16 %v49
  %v178 = vunpack.c.l.b16 %v50
  %v179 = vunpack.c.l.b16 %v51
  %v180 = vunpack.c.l.b16 %v52
  %v181 = vunpack.c.l.b16 %v53
  %v182 = vunpack.c.l.b16 %v54
  %v183 = vunpack.c.l.b16 %v55
  %v184 = vunpack.c.l.b16 %v56
  %v185 = vunpack.c.l.b16 %v57
  %v186 = vunpack.c.l.b16 %v58
  %v187 = vunpack.c.l.b16 %v59
  %v188 = vunpack.c.l.b16 %v60
  %v189 = vunpack.c.l.b16 %v61
  %v190 = vpack.c.b16 %v175, %v174
  %v191 = vpack.c.b16 %v177, %v176
  %v192 = vpack.c.b16 %v179, %v178
  %v193 = vpack.c.b16 %v181, %v180
  %v194 = vpack.c.b16 %v183, %v182
  %v195 = vpack.c.b16 %v185, %v184
  %v196 = vpack.c.b16 %v187, %v186
  %v197 = vpack.c.b16 %v189, %v188
  %206 = vmatpush.bf16.msra.mxu0 %v197
  %207 = vmatpush.bf16.msra.mxu0 %v196
  %208 = vmatpush.bf16.msra.mxu0 %v195
  %209 = vmatpush.bf16.msra.mxu0 %v194
  %210 = vmatpush.bf16.msra.mxu0 %v193
  %211 = vmatpush.bf16.msra.mxu0 %v192
  %212 = vmatpush.bf16.msra.mxu0 %v191
  %213 = vmatpush.bf16.msra.mxu0 %v190
  %214 = vmatmul.bf16.gmra.mxu0 %v126
  %v215 = vpop.f32.mrf.mxu0
  %v216 = vadd.f32 0.0, %v215
  %v217 = vpop.f32.mrf.mxu0
  %v218 = vadd.f32 0.0, %v217
  %219 = vmatmul.bf16.gmra.mxu0 %v127
  %v220 = vpop.f32.mrf.mxu0
  %v221 = vadd.f32 0.0, %v220
  %v222 = vpop.f32.mrf.mxu0
  %v223 = vadd.f32 0.0, %v222
  %224 = vmatmul.bf16.gmra.mxu0 %v128
  %v225 = vpop.f32.mrf.mxu0
  %v226 = vadd.f32 0.0, %v225
  %v227 = vpop.f32.mrf.mxu0
  %v228 = vadd.f32 0.0, %v227
  %229 = vmatmul.bf16.gmra.mxu0 %v129
  %v230 = vpop.f32.mrf.mxu0
  %v231 = vadd.f32 0.0, %v230
  %v232 = vpop.f32.mrf.mxu0
  %v233 = vadd.f32 0.0, %v232
  %234 = vmatmul.bf16.gmra.mxu0 %v130
  %v235 = vpop.f32.mrf.mxu0
  %v236 = vadd.f32 0.0, %v235
  %v237 = vpop.f32.mrf.mxu0
  %v238 = vadd.f32 0.0, %v237
  %239 = vmatmul.bf16.gmra.mxu0 %v131
  %v240 = vpop.f32.mrf.mxu0
  %v241 = vadd.f32 0.0, %v240
  %v242 = vpop.f32.mrf.mxu0
  %v243 = vadd.f32 0.0, %v242
  %244 = vmatmul.bf16.gmra.mxu0 %v132
  %v245 = vpop.f32.mrf.mxu0
  %v246 = vadd.f32 0.0, %v245
  %v247 = vpop.f32.mrf.mxu0
  %v248 = vadd.f32 0.0, %v247
  %249 = vmatmul.bf16.gmra.mxu0 %v133
  %v250 = vpop.f32.mrf.mxu0
  %v251 = vadd.f32 0.0, %v250
  %v252 = vpop.f32.mrf.mxu0
  %v253 = vadd.f32 0.0, %v252
  %254 = vmatmul.bf16.gmra.mxu0 %v134
  %v255 = vpop.f32.mrf.mxu0
  %v256 = vadd.f32 0.0, %v255
  %v257 = vpop.f32.mrf.mxu0
  %v258 = vadd.f32 0.0, %v257
  %259 = vmatmul.bf16.gmra.mxu0 %v135
  %v260 = vpop.f32.mrf.mxu0
  %v261 = vadd.f32 0.0, %v260
  %v262 = vpop.f32.mrf.mxu0
  %v263 = vadd.f32 0.0, %v262
  %264 = vmatmul.bf16.gmra.mxu0 %v136
  %v265 = vpop.f32.mrf.mxu0
  %v266 = vadd.f32 0.0, %v265
  %v267 = vpop.f32.mrf.mxu0
  %v268 = vadd.f32 0.0, %v267
  %269 = vmatmul.bf16.gmra.mxu0 %v137
  %v270 = vpop.f32.mrf.mxu0
  %v271 = vadd.f32 0.0, %v270
  %v272 = vpop.f32.mrf.mxu0
  %v273 = vadd.f32 0.0, %v272
  %274 = vmatmul.bf16.gmra.mxu0 %v138
  %v275 = vpop.f32.mrf.mxu0
  %v276 = vadd.f32 0.0, %v275
  %v277 = vpop.f32.mrf.mxu0
  %v278 = vadd.f32 0.0, %v277
  %279 = vmatmul.bf16.gmra.mxu0 %v139
  %v280 = vpop.f32.mrf.mxu0
  %v281 = vadd.f32 0.0, %v280
  %v282 = vpop.f32.mrf.mxu0
  %v283 = vadd.f32 0.0, %v282
  %284 = vmatmul.bf16.gmra.mxu0 %v140
  %v285 = vpop.f32.mrf.mxu0
  %v286 = vadd.f32 0.0, %v285
  %v287 = vpop.f32.mrf.mxu0
  %v288 = vadd.f32 0.0, %v287
  %289 = vmatmul.bf16.gmra.mxu0 %v141
  %v290 = vpop.f32.mrf.mxu0
  %v291 = vadd.f32 0.0, %v290
  %v292 = vpop.f32.mrf.mxu0
  %v293 = vadd.f32 0.0, %v292
  %294 = vdwg.mxu0
  %v295 = vld [vmem:[%s2] sm:$0xff]
  %v296 = vld [vmem:[%s2 + $0x8] sm:$0xff]
  %v297 = vld [vmem:[%s2 + $0x10] sm:$0xff]
  %v298 = vld [vmem:[%s2 + $0x18] sm:$0xff]
  %v299 = vld [vmem:[%s2 + $0x20] sm:$0xff]
  %v300 = vld [vmem:[%s2 + $0x28] sm:$0xff]
  %v301 = vld [vmem:[%s2 + $0x30] sm:$0xff]
  %v302 = vld [vmem:[%s2 + $0x38] sm:$0xff]
  %v303 = vld [vmem:[%s2 + $0x40] sm:$0xff]
  %v304 = vld [vmem:[%s2 + $0x48] sm:$0xff]
  %v305 = vld [vmem:[%s2 + $0x50] sm:$0xff]
  %v306 = vld [vmem:[%s2 + $0x58] sm:$0xff]
  %v307 = vld [vmem:[%s2 + $0x60] sm:$0xff]
  %v308 = vld [vmem:[%s2 + $0x68] sm:$0xff]
  %v309 = vld [vmem:[%s2 + $0x70] sm:$0xff]
  %v310 = vld [vmem:[%s2 + $0x78] sm:$0xff]
  %v311 = vld [vmem:[%s2 + $0x80] sm:$0xff]
  %v312 = vld [vmem:[%s2 + $0x88] sm:$0xff]
  %v313 = vld [vmem:[%s2 + $0x90] sm:$0xff]
  %v314 = vld [vmem:[%s2 + $0x98] sm:$0xff]
  %v315 = vld [vmem:[%s2 + $0xa0] sm:$0xff]
  %v316 = vld [vmem:[%s2 + $0xa8] sm:$0xff]
  %v317 = vld [vmem:[%s2 + $0xb0] sm:$0xff]
  %v318 = vld [vmem:[%s2 + $0xb8] sm:$0xff]
  %v319 = vld [vmem:[%s2 + $0xc0] sm:$0xff]
  %v320 = vld [vmem:[%s2 + $0xc8] sm:$0xff]
  %v321 = vld [vmem:[%s2 + $0xd0] sm:$0xff]
  %v322 = vld [vmem:[%s2 + $0xd8] sm:$0xff]
  %v323 = vld [vmem:[%s2 + $0xe0] sm:$0xff]
  %v324 = vld [vmem:[%s2 + $0xe8] sm:$0xff]
  %v325 = vld [vmem:[%s2 + $0xf0] sm:$0xff]
  %v326 = vld [vmem:[%s2 + $0xf8] sm:$0xff]
  %328 = vset.pattern.permute.xlu0 0
  %329 = vperm.xlu0 %328, %v295
  %v330 = vpop.permute.xlu0 %329
  %333 = vset.pattern.permute.xlu0 0
  %334 = vperm.xlu0 %333, %v296
  %v335 = vpop.permute.xlu0 %334
  %338 = vset.pattern.permute.xlu0 0
  %339 = vperm.xlu0 %338, %v297
  %v340 = vpop.permute.xlu0 %339
  %343 = vset.pattern.permute.xlu0 0
  %344 = vperm.xlu0 %343, %v298
  %v345 = vpop.permute.xlu0 %344
  %348 = vset.pattern.permute.xlu0 0
  %349 = vperm.xlu0 %348, %v299
  %v350 = vpop.permute.xlu0 %349
  %353 = vset.pattern.permute.xlu0 0
  %354 = vperm.xlu0 %353, %v300
  %v355 = vpop.permute.xlu0 %354
  %358 = vset.pattern.permute.xlu0 0
  %359 = vperm.xlu0 %358, %v301
  %v360 = vpop.permute.xlu0 %359
  %363 = vset.pattern.permute.xlu0 0
  %364 = vperm.xlu0 %363, %v302
  %v365 = vpop.permute.xlu0 %364
  %368 = vset.pattern.permute.xlu0 0
  %369 = vperm.xlu0 %368, %v303
  %v370 = vpop.permute.xlu0 %369
  %373 = vset.pattern.permute.xlu0 0
  %374 = vperm.xlu0 %373, %v304
  %v375 = vpop.permute.xlu0 %374
  %378 = vset.pattern.permute.xlu0 0
  %379 = vperm.xlu0 %378, %v305
  %v380 = vpop.permute.xlu0 %379
  %383 = vset.pattern.permute.xlu0 0
  %384 = vperm.xlu0 %383, %v306
  %v385 = vpop.permute.xlu0 %384
  %388 = vset.pattern.permute.xlu0 0
  %389 = vperm.xlu0 %388, %v307
  %v390 = vpop.permute.xlu0 %389
  %393 = vset.pattern.permute.xlu0 0
  %394 = vperm.xlu0 %393, %v308
  %v395 = vpop.permute.xlu0 %394
  %398 = vset.pattern.permute.xlu0 0
  %399 = vperm.xlu0 %398, %v309
  %v400 = vpop.permute.xlu0 %399
  %403 = vset.pattern.permute.xlu0 0
  %404 = vperm.xlu0 %403, %v310
  %v405 = vpop.permute.xlu0 %404
  %408 = vset.pattern.permute.xlu0 0
  %409 = vperm.xlu0 %408, %v311
  %v410 = vpop.permute.xlu0 %409
  %413 = vset.pattern.permute.xlu0 0
  %414 = vperm.xlu0 %413, %v312
  %v415 = vpop.permute.xlu0 %414
  %418 = vset.pattern.permute.xlu0 0
  %419 = vperm.xlu0 %418, %v313
  %v420 = vpop.permute.xlu0 %419
  %423 = vset.pattern.permute.xlu0 0
  %424 = vperm.xlu0 %423, %v314
  %v425 = vpop.permute.xlu0 %424
  %428 = vset.pattern.permute.xlu0 0
  %429 = vperm.xlu0 %428, %v315
  %v430 = vpop.permute.xlu0 %429
  %433 = vset.pattern.permute.xlu0 0
  %434 = vperm.xlu0 %433, %v316
  %v435 = vpop.permute.xlu0 %434
  %438 = vset.pattern.permute.xlu0 0
  %439 = vperm.xlu0 %438, %v317
  %v440 = vpop.permute.xlu0 %439
  %443 = vset.pattern.permute.xlu0 0
  %444 = vperm.xlu0 %443, %v318
  %v445 = vpop.permute.xlu0 %444
  %448 = vset.pattern.permute.xlu0 0
  %449 = vperm.xlu0 %448, %v319
  %v450 = vpop.permute.xlu0 %449
  %453 = vset.pattern.permute.xlu0 0
  %454 = vperm.xlu0 %453, %v320
  %v455 = vpop.permute.xlu0 %454
  %458 = vset.pattern.permute.xlu0 0
  %459 = vperm.xlu0 %458, %v321
  %v460 = vpop.permute.xlu0 %459
  %463 = vset.pattern.permute.xlu0 0
  %464 = vperm.xlu0 %463, %v322
  %v465 = vpop.permute.xlu0 %464
  %468 = vset.pattern.permute.xlu0 0
  %469 = vperm.xlu0 %468, %v323
  %v470 = vpop.permute.xlu0 %469
  %473 = vset.pattern.permute.xlu0 0
  %474 = vperm.xlu0 %473, %v324
  %v475 = vpop.permute.xlu0 %474
  %478 = vset.pattern.permute.xlu0 0
  %479 = vperm.xlu0 %478, %v325
  %v480 = vpop.permute.xlu0 %479
  %483 = vset.pattern.permute.xlu0 0
  %484 = vperm.xlu0 %483, %v326
  %v485 = vpop.permute.xlu0 %484
  %v487 = vmul.f32 %v216, %v330
  %v488 = vmul.f32 %v218, %v335
  %v489 = vmul.f32 %v221, %v340
  %v490 = vmul.f32 %v223, %v345
  %v491 = vmul.f32 %v226, %v350
  %v492 = vmul.f32 %v228, %v355
  %v493 = vmul.f32 %v231, %v360
  %v494 = vmul.f32 %v233, %v365
  %v495 = vmul.f32 %v236, %v370
  %v496 = vmul.f32 %v238, %v375
  %v497 = vmul.f32 %v241, %v380
  %v498 = vmul.f32 %v243, %v385
  %v499 = vmul.f32 %v246, %v390
  %v500 = vmul.f32 %v248, %v395
  %v501 = vmul.f32 %v251, %v400
  %v502 = vmul.f32 %v253, %v405
  %v503 = vmul.f32 %v256, %v410
  %v504 = vmul.f32 %v258, %v415
  %v505 = vmul.f32 %v261, %v420
  %v506 = vmul.f32 %v263, %v425
  %v507 = vmul.f32 %v266, %v430
  %v508 = vmul.f32 %v268, %v435
  %v509 = vmul.f32 %v271, %v440
  %v510 = vmul.f32 %v273, %v445
  %v511 = vmul.f32 %v276, %v450
  %v512 = vmul.f32 %v278, %v455
  %v513 = vmul.f32 %v281, %v460
  %v514 = vmul.f32 %v283, %v465
  %v515 = vmul.f32 %v286, %v470
  %v516 = vmul.f32 %v288, %v475
  %v517 = vmul.f32 %v291, %v480
  %v518 = vmul.f32 %v293, %v485
  %v519 = vpack.c.bf16 %v487, %v487
  %v520 = vpack.c.bf16 %v488, %v488
  %v521 = vpack.c.bf16 %v489, %v489
  %v522 = vpack.c.bf16 %v490, %v490
  %v523 = vpack.c.bf16 %v491, %v491
  %v524 = vpack.c.bf16 %v492, %v492
  %v525 = vpack.c.bf16 %v493, %v493
  %v526 = vpack.c.bf16 %v494, %v494
  %v527 = vpack.c.bf16 %v495, %v495
  %v528 = vpack.c.bf16 %v496, %v496
  %v529 = vpack.c.bf16 %v497, %v497
  %v530 = vpack.c.bf16 %v498, %v498
  %v531 = vpack.c.bf16 %v499, %v499
  %v532 = vpack.c.bf16 %v500, %v500
  %v533 = vpack.c.bf16 %v501, %v501
  %v534 = vpack.c.bf16 %v502, %v502
  %v535 = vpack.c.bf16 %v503, %v503
  %v536 = vpack.c.bf16 %v504, %v504
  %v537 = vpack.c.bf16 %v505, %v505
  %v538 = vpack.c.bf16 %v506, %v506
  %v539 = vpack.c.bf16 %v507, %v507
  %v540 = vpack.c.bf16 %v508, %v508
  %v541 = vpack.c.bf16 %v509, %v509
  %v542 = vpack.c.bf16 %v510, %v510
  %v543 = vpack.c.bf16 %v511, %v511
  %v544 = vpack.c.bf16 %v512, %v512
  %v545 = vpack.c.bf16 %v513, %v513
  %v546 = vpack.c.bf16 %v514, %v514
  %v547 = vpack.c.bf16 %v515, %v515
  %v548 = vpack.c.bf16 %v516, %v516
  %v549 = vpack.c.bf16 %v517, %v517
  %v550 = vpack.c.bf16 %v518, %v518
  %551 = vst [vmem:[%s3] sm:$0xf] %v519
  %552 = vst [vmem:[%s3 + $0x4] sm:$0xf] %v520
  %553 = vst [vmem:[%s3 + $0x8] sm:$0xf] %v521
  %554 = vst [vmem:[%s3 + $0xc] sm:$0xf] %v522
  %555 = vst [vmem:[%s3 + $0x10] sm:$0xf] %v523
  %556 = vst [vmem:[%s3 + $0x14] sm:$0xf] %v524
  %557 = vst [vmem:[%s3 + $0x18] sm:$0xf] %v525
  %558 = vst [vmem:[%s3 + $0x1c] sm:$0xf] %v526
  %559 = vst [vmem:[%s3 + $0x20] sm:$0xf] %v527
  %560 = vst [vmem:[%s3 + $0x24] sm:$0xf] %v528
  %561 = vst [vmem:[%s3 + $0x28] sm:$0xf] %v529
  %562 = vst [vmem:[%s3 + $0x2c] sm:$0xf] %v530
  %563 = vst [vmem:[%s3 + $0x30] sm:$0xf] %v531
  %564 = vst [vmem:[%s3 + $0x34] sm:$0xf] %v532
  %565 = vst [vmem:[%s3 + $0x38] sm:$0xf] %v533
  %566 = vst [vmem:[%s3 + $0x3c] sm:$0xf] %v534
  %567 = vst [vmem:[%s3 + $0x40] sm:$0xf] %v535
  %568 = vst [vmem:[%s3 + $0x44] sm:$0xf] %v536
  %569 = vst [vmem:[%s3 + $0x48] sm:$0xf] %v537
  %570 = vst [vmem:[%s3 + $0x4c] sm:$0xf] %v538
  %571 = vst [vmem:[%s3 + $0x50] sm:$0xf] %v539
  %572 = vst [vmem:[%s3 + $0x54] sm:$0xf] %v540
  %573 = vst [vmem:[%s3 + $0x58] sm:$0xf] %v541
  %574 = vst [vmem:[%s3 + $0x5c] sm:$0xf] %v542
  %575 = vst [vmem:[%s3 + $0x60] sm:$0xf] %v543
  %576 = vst [vmem:[%s3 + $0x64] sm:$0xf] %v544
  %577 = vst [vmem:[%s3 + $0x68] sm:$0xf] %v545
  %578 = vst [vmem:[%s3 + $0x6c] sm:$0xf] %v546
  %579 = vst [vmem:[%s3 + $0x70] sm:$0xf] %v547
  %580 = vst [vmem:[%s3 + $0x74] sm:$0xf] %v548
  %581 = vst [vmem:[%s3 + $0x78] sm:$0xf] %v549
  %582 = vst [vmem:[%s3 + $0x7c] sm:$0xf] %v550
  // Predicated region
  $region14: #{qgcn_forward.15} parent=0 // pred_check
    _
  $region15: #{qgcn_forward.15} parent=0 // pred_check_branch
    %584 = sbr.rel (0) target = $region17
  $region16: #{qgcn_forward.15} parent=0 // pred_region
    _
  $region17: #{qgcn_forward.15} parent=0 // pred_fallthru
    _
  // Predicated region
  $region18: #{qgcn_forward.15} parent=0 // pred_check
    _
  $region19: #{qgcn_forward.15} parent=0 // pred_check_branch
    %586 = sbr.rel (0) target = $region21
  $region20: #{qgcn_forward.15} parent=0 // pred_region
    _
  $region21: #{qgcn_forward.15} parent=0 // pred_fallthru
    _

// kernel: qgcn_forward.16
$region0: #{qgcn_forward.16}
  #allocation0 [shape = 'u32[]', space=smem, size = 0x4, offset = 0x4, fixed_abs, tag = 'smem constant byte address 0x4 - core index']
  #allocation1 [shape = 'u32[72,128]{1,0:T(1,128)}', space=vmem, size = 0x9000, scoped, tag = 'internal scratch']
  #allocation2 [shape = 'f32[256,128]{1,0:T(8,128)}', space=vmem, size = 0x20000, scoped, tag = 'scratch operand']
  %s0 = inlined_call_operand.vmem [shape: s8[256,256], index: 0, kind: input, shape index: {}]
  %s1 = inlined_call_operand.vmem [shape: bf16[256,128], index: 1, kind: input, shape index: {}]
  %s2 = inlined_call_operand.vmem [shape: f32[256,1], index: 2, kind: input, shape index: {}]
  %s3 = inlined_call_operand.vmem [shape: f32[256,128], index: 3, kind: output, shape index: {}]
  %s4 = sld [smem:[#allocation0]]
  $region30: #{qgcn_forward.16} parent=0
    _
  %s6 = ssub.s32 1, %s4
  %s7 = scalar_select 0, %s6, %s4
  // Predicated region
  $region2: #{qgcn_forward.16} parent=0 // pred_check
    _
  $region3: #{qgcn_forward.16} parent=0 // pred_check_branch
    %9 = sbr.rel (0) target = $region5
  $region4: #{qgcn_forward.16} parent=0 // pred_region
    _
  $region5: #{qgcn_forward.16} parent=0 // pred_fallthru
    _
  // Predicated region
  $region6: #{qgcn_forward.16} parent=0 // pred_check
    _
  $region7: #{qgcn_forward.16} parent=0 // pred_check_branch
    %11 = sbr.rel (0) target = $region9
  $region8: #{qgcn_forward.16} parent=0 // pred_region
    _
  $region9: #{qgcn_forward.16} parent=0 // pred_fallthru
    _
  // Predicated region
  $region10: #{qgcn_forward.16} parent=0 // pred_check
    _
  $region11: #{qgcn_forward.16} parent=0 // pred_check_branch
    %13 = sbr.rel (0) target = $region13
  $region12: #{qgcn_forward.16} parent=0 // pred_region
    _
  $region13: #{qgcn_forward.16} parent=0 // pred_fallthru
    _
  %p14 = scmp.eq.s32.totalorder 0, 0
  // Predicated region
  $region14: #{qgcn_forward.16} parent=0 // pred_check
    %p15 = pneg %p14
  $region15: #{qgcn_forward.16} parent=0 // pred_check_branch
    %17 = sbr.rel (%p15) target = $region17
  $region16: #{qgcn_forward.16} parent=0 // pred_region
    %18 = vst [vmem:[#allocation2] sm:$0xff] 0.0
    %19 = vst [vmem:[#allocation2 + $0x8] sm:$0xff] 0.0
    %20 = vst [vmem:[#allocation2 + $0x10] sm:$0xff] 0.0
    %21 = vst [vmem:[#allocation2 + $0x18] sm:$0xff] 0.0
    %22 = vst [vmem:[#allocation2 + $0x20] sm:$0xff] 0.0
    %23 = vst [vmem:[#allocation2 + $0x28] sm:$0xff] 0.0
    %24 = vst [vmem:[#allocation2 + $0x30] sm:$0xff] 0.0
    %25 = vst [vmem:[#allocation2 + $0x38] sm:$0xff] 0.0
    %26 = vst [vmem:[#allocation2 + $0x40] sm:$0xff] 0.0
    %27 = vst [vmem:[#allocation2 + $0x48] sm:$0xff] 0.0
    %28 = vst [vmem:[#allocation2 + $0x50] sm:$0xff] 0.0
    %29 = vst [vmem:[#allocation2 + $0x58] sm:$0xff] 0.0
    %30 = vst [vmem:[#allocation2 + $0x60] sm:$0xff] 0.0
    %31 = vst [vmem:[#allocation2 + $0x68] sm:$0xff] 0.0
    %32 = vst [vmem:[#allocation2 + $0x70] sm:$0xff] 0.0
    %33 = vst [vmem:[#allocation2 + $0x78] sm:$0xff] 0.0
    %34 = vst [vmem:[#allocation2 + $0x80] sm:$0xff] 0.0
    %35 = vst [vmem:[#allocation2 + $0x88] sm:$0xff] 0.0
    %36 = vst [vmem:[#allocation2 + $0x90] sm:$0xff] 0.0
    %37 = vst [vmem:[#allocation2 + $0x98] sm:$0xff] 0.0
    %38 = vst [vmem:[#allocation2 + $0xa0] sm:$0xff] 0.0
    %39 = vst [vmem:[#allocation2 + $0xa8] sm:$0xff] 0.0
    %40 = vst [vmem:[#allocation2 + $0xb0] sm:$0xff] 0.0
    %41 = vst [vmem:[#allocation2 + $0xb8] sm:$0xff] 0.0
    %42 = vst [vmem:[#allocation2 + $0xc0] sm:$0xff] 0.0
    %43 = vst [vmem:[#allocation2 + $0xc8] sm:$0xff] 0.0
    %44 = vst [vmem:[#allocation2 + $0xd0] sm:$0xff] 0.0
    %45 = vst [vmem:[#allocation2 + $0xd8] sm:$0xff] 0.0
    %46 = vst [vmem:[#allocation2 + $0xe0] sm:$0xff] 0.0
    %47 = vst [vmem:[#allocation2 + $0xe8] sm:$0xff] 0.0
    %48 = vst [vmem:[#allocation2 + $0xf0] sm:$0xff] 0.0
    %49 = vst [vmem:[#allocation2 + $0xf8] sm:$0xff] 0.0
  $region17: #{qgcn_forward.16} parent=0 // pred_fallthru
    _
  %v50 = vld [vmem:[%s0] sm:$0xff]
  %v51 = vld [vmem:[%s0 + $0x8] sm:$0xff]
  %v52 = vld [vmem:[%s0 + $0x10] sm:$0xff]
  %v53 = vld [vmem:[%s0 + $0x18] sm:$0xff]
  %v54 = vld [vmem:[%s0 + $0x20] sm:$0xff]
  %v55 = vld [vmem:[%s0 + $0x28] sm:$0xff]
  %v56 = vld [vmem:[%s0 + $0x30] sm:$0xff]
  %v57 = vld [vmem:[%s0 + $0x38] sm:$0xff]
  %v58 = vld [vmem:[%s0 + $0x40] sm:$0xff]
  %v59 = vld [vmem:[%s0 + $0x48] sm:$0xff]
  %v60 = vld [vmem:[%s0 + $0x50] sm:$0xff]
  %v61 = vld [vmem:[%s0 + $0x58] sm:$0xff]
  %v62 = vld [vmem:[%s0 + $0x60] sm:$0xff]
  %v63 = vld [vmem:[%s0 + $0x68] sm:$0xff]
  %v64 = vld [vmem:[%s0 + $0x70] sm:$0xff]
  %v65 = vld [vmem:[%s0 + $0x78] sm:$0xff]
  %v66 = vunpack.c.0.s8 %v50
  %v67 = vunpack.c.0.s8 %v51
  %v68 = vunpack.c.1.s8 %v50
  %v69 = vunpack.c.1.s8 %v51
  %v70 = vunpack.c.2.s8 %v50
  %v71 = vunpack.c.2.s8 %v51
  %v72 = vunpack.c.3.s8 %v50
  %v73 = vunpack.c.3.s8 %v51
  %v74 = vunpack.c.0.s8 %v52
  %v75 = vunpack.c.0.s8 %v53
  %v76 = vunpack.c.1.s8 %v52
  %v77 = vunpack.c.1.s8 %v53
  %v78 = vunpack.c.2.s8 %v52
  %v79 = vunpack.c.2.s8 %v53
  %v80 = vunpack.c.3.s8 %v52
  %v81 = vunpack.c.3.s8 %v53
  %v82 = vunpack.c.0.s8 %v54
  %v83 = vunpack.c.0.s8 %v55
  %v84 = vunpack.c.1.s8 %v54
  %v85 = vunpack.c.1.s8 %v55
  %v86 = vunpack.c.2.s8 %v54
  %v87 = vunpack.c.2.s8 %v55
  %v88 = vunpack.c.3.s8 %v54
  %v89 = vunpack.c.3.s8 %v55
  %v90 = vunpack.c.0.s8 %v56
  %v91 = vunpack.c.0.s8 %v57
  %v92 = vunpack.c.1.s8 %v56
  %v93 = vunpack.c.1.s8 %v57
  %v94 = vunpack.c.2.s8 %v56
  %v95 = vunpack.c.2.s8 %v57
  %v96 = vunpack.c.3.s8 %v56
  %v97 = vunpack.c.3.s8 %v57
  %v98 = vunpack.c.0.s8 %v58
  %v99 = vunpack.c.0.s8 %v59
  %v100 = vunpack.c.1.s8 %v58
  %v101 = vunpack.c.1.s8 %v59
  %v102 = vunpack.c.2.s8 %v58
  %v103 = vunpack.c.2.s8 %v59
  %v104 = vunpack.c.3.s8 %v58
  %v105 = vunpack.c.3.s8 %v59
  %v106 = vunpack.c.0.s8 %v60
  %v107 = vunpack.c.0.s8 %v61
  %v108 = vunpack.c.1.s8 %v60
  %v109 = vunpack.c.1.s8 %v61
  %v110 = vunpack.c.2.s8 %v60
  %v111 = vunpack.c.2.s8 %v61
  %v112 = vunpack.c.3.s8 %v60
  %v113 = vunpack.c.3.s8 %v61
  %v114 = vunpack.c.0.s8 %v62
  %v115 = vunpack.c.0.s8 %v63
  %v116 = vunpack.c.1.s8 %v62
  %v117 = vunpack.c.1.s8 %v63
  %v118 = vunpack.c.2.s8 %v62
  %v119 = vunpack.c.2.s8 %v63
  %v120 = vunpack.c.3.s8 %v62
  %v121 = vunpack.c.3.s8 %v63
  %v122 = vunpack.c.0.s8 %v64
  %v123 = vunpack.c.0.s8 %v65
  %v124 = vunpack.c.1.s8 %v64
  %v125 = vunpack.c.1.s8 %v65
  %v126 = vunpack.c.2.s8 %v64
  %v127 = vunpack.c.2.s8 %v65
  %v128 = vunpack.c.3.s8 %v64
  %v129 = vunpack.c.3.s8 %v65
  %v130 = vcvt.s32.f32 %v66
  %v131 = vcvt.s32.f32 %v67
  %v132 = vcvt.s32.f32 %v68
  %v133 = vcvt.s32.f32 %v69
  %v134 = vcvt.s32.f32 %v70
  %v135 = vcvt.s32.f32 %v71
  %v136 = vcvt.s32.f32 %v72
  %v137 = vcvt.s32.f32 %v73
  %v138 = vcvt.s32.f32 %v74
  %v139 = vcvt.s32.f32 %v75
  %v140 = vcvt.s32.f32 %v76
  %v141 = vcvt.s32.f32 %v77
  %v142 = vcvt.s32.f32 %v78
  %v143 = vcvt.s32.f32 %v79
  %v144 = vcvt.s32.f32 %v80
  %v145 = vcvt.s32.f32 %v81
  %v146 = vcvt.s32.f32 %v82
  %v147 = vcvt.s32.f32 %v83
  %v148 = vcvt.s32.f32 %v84
  %v149 = vcvt.s32.f32 %v85
  %v150 = vcvt.s32.f32 %v86
  %v151 = vcvt.s32.f32 %v87
  %v152 = vcvt.s32.f32 %v88
  %v153 = vcvt.s32.f32 %v89
  %v154 = vcvt.s32.f32 %v90
  %v155 = vcvt.s32.f32 %v91
  %v156 = vcvt.s32.f32 %v92
  %v157 = vcvt.s32.f32 %v93
  %v158 = vcvt.s32.f32 %v94
  %v159 = vcvt.s32.f32 %v95
  %v160 = vcvt.s32.f32 %v96
  %v161 = vcvt.s32.f32 %v97
  %v162 = vcvt.s32.f32 %v98
  %v163 = vcvt.s32.f32 %v99
  %v164 = vcvt.s32.f32 %v100
  %v165 = vcvt.s32.f32 %v101
  %v166 = vcvt.s32.f32 %v102
  %v167 = vcvt.s32.f32 %v103
  %v168 = vcvt.s32.f32 %v104
  %v169 = vcvt.s32.f32 %v105
  %v170 = vcvt.s32.f32 %v106
  %v171 = vcvt.s32.f32 %v107
  %v172 = vcvt.s32.f32 %v108
  %v173 = vcvt.s32.f32 %v109
  %v174 = vcvt.s32.f32 %v110
  %v175 = vcvt.s32.f32 %v111
  %v176 = vcvt.s32.f32 %v112
  %v177 = vcvt.s32.f32 %v113
  %v178 = vcvt.s32.f32 %v114
  %v179 = vcvt.s32.f32 %v115
  %v180 = vcvt.s32.f32 %v116
  %v181 = vcvt.s32.f32 %v117
  %v182 = vcvt.s32.f32 %v118
  %v183 = vcvt.s32.f32 %v119
  %v184 = vcvt.s32.f32 %v120
  %v185 = vcvt.s32.f32 %v121
  %v186 = vcvt.s32.f32 %v122
  %v187 = vcvt.s32.f32 %v123
  %v188 = vcvt.s32.f32 %v124
  %v189 = vcvt.s32.f32 %v125
  %v190 = vcvt.s32.f32 %v126
  %v191 = vcvt.s32.f32 %v127
  %v192 = vcvt.s32.f32 %v128
  %v193 = vcvt.s32.f32 %v129
  %v194 = vpack.c.bf16 %v132, %v130
  %v195 = vpack.c.bf16 %v133, %v131
  %v196 = vpack.c.bf16 %v136, %v134
  %v197 = vpack.c.bf16 %v137, %v135
  %v198 = vpack.c.bf16 %v140, %v138
  %v199 = vpack.c.bf16 %v141, %v139
  %v200 = vpack.c.bf16 %v144, %v142
  %v201 = vpack.c.bf16 %v145, %v143
  %v202 = vpack.c.bf16 %v148, %v146
  %v203 = vpack.c.bf16 %v149, %v147
  %v204 = vpack.c.bf16 %v152, %v150
  %v205 = vpack.c.bf16 %v153, %v151
  %v206 = vpack.c.bf16 %v156, %v154
  %v207 = vpack.c.bf16 %v157, %v155
  %v208 = vpack.c.bf16 %v160, %v158
  %v209 = vpack.c.bf16 %v161, %v159
  %v210 = vpack.c.bf16 %v164, %v162
  %v211 = vpack.c.bf16 %v165, %v163
  %v212 = vpack.c.bf16 %v168, %v166
  %v213 = vpack.c.bf16 %v169, %v167
  %v214 = vpack.c.bf16 %v172, %v170
  %v215 = vpack.c.bf16 %v173, %v171
  %v216 = vpack.c.bf16 %v176, %v174
  %v217 = vpack.c.bf16 %v177, %v175
  %v218 = vpack.c.bf16 %v180, %v178
  %v219 = vpack.c.bf16 %v181, %v179
  %v220 = vpack.c.bf16 %v184, %v182
  %v221 = vpack.c.bf16 %v185, %v183
  %v222 = vpack.c.bf16 %v188, %v186
  %v223 = vpack.c.bf16 %v189, %v187
  %v224 = vpack.c.bf16 %v192, %v190
  %v225 = vpack.c.bf16 %v193, %v191
  %v226 = vld [vmem:[%s1] sm:$0xf]
  %v227 = vld [vmem:[%s1 + $0x4] sm:$0xf]
  %v228 = vld [vmem:[%s1 + $0x8] sm:$0xf]
  %v229 = vld [vmem:[%s1 + $0xc] sm:$0xf]
  %v230 = vld [vmem:[%s1 + $0x10] sm:$0xf]
  %v231 = vld [vmem:[%s1 + $0x14] sm:$0xf]
  %v232 = vld [vmem:[%s1 + $0x18] sm:$0xf]
  %v233 = vld [vmem:[%s1 + $0x1c] sm:$0xf]
  %v234 = vld [vmem:[%s1 + $0x20] sm:$0xf]
  %v235 = vld [vmem:[%s1 + $0x24] sm:$0xf]
  %v236 = vld [vmem:[%s1 + $0x28] sm:$0xf]
  %v237 = vld [vmem:[%s1 + $0x2c] sm:$0xf]
  %v238 = vld [vmem:[%s1 + $0x30] sm:$0xf]
  %v239 = vld [vmem:[%s1 + $0x34] sm:$0xf]
  %v240 = vld [vmem:[%s1 + $0x38] sm:$0xf]
  %v241 = vld [vmem:[%s1 + $0x3c] sm:$0xf]
  %v242 = vld [vmem:[%s1 + $0x40] sm:$0xf]
  %v243 = vld [vmem:[%s1 + $0x44] sm:$0xf]
  %v244 = vld [vmem:[%s1 + $0x48] sm:$0xf]
  %v245 = vld [vmem:[%s1 + $0x4c] sm:$0xf]
  %v246 = vld [vmem:[%s1 + $0x50] sm:$0xf]
  %v247 = vld [vmem:[%s1 + $0x54] sm:$0xf]
  %v248 = vld [vmem:[%s1 + $0x58] sm:$0xf]
  %v249 = vld [vmem:[%s1 + $0x5c] sm:$0xf]
  %v250 = vld [vmem:[%s1 + $0x60] sm:$0xf]
  %v251 = vld [vmem:[%s1 + $0x64] sm:$0xf]
  %v252 = vld [vmem:[%s1 + $0x68] sm:$0xf]
  %v253 = vld [vmem:[%s1 + $0x6c] sm:$0xf]
  %v254 = vld [vmem:[%s1 + $0x70] sm:$0xf]
  %v255 = vld [vmem:[%s1 + $0x74] sm:$0xf]
  %v256 = vld [vmem:[%s1 + $0x78] sm:$0xf]
  %v257 = vld [vmem:[%s1 + $0x7c] sm:$0xf]
  %v258 = vld [vmem:[#allocation2] sm:$0xff]
  %v259 = vld [vmem:[#allocation2 + $0x8] sm:$0xff]
  %v260 = vld [vmem:[#allocation2 + $0x10] sm:$0xff]
  %v261 = vld [vmem:[#allocation2 + $0x18] sm:$0xff]
  %v262 = vld [vmem:[#allocation2 + $0x20] sm:$0xff]
  %v263 = vld [vmem:[#allocation2 + $0x28] sm:$0xff]
  %v264 = vld [vmem:[#allocation2 + $0x30] sm:$0xff]
  %v265 = vld [vmem:[#allocation2 + $0x38] sm:$0xff]
  %v266 = vld [vmem:[#allocation2 + $0x40] sm:$0xff]
  %v267 = vld [vmem:[#allocation2 + $0x48] sm:$0xff]
  %v268 = vld [vmem:[#allocation2 + $0x50] sm:$0xff]
  %v269 = vld [vmem:[#allocation2 + $0x58] sm:$0xff]
  %v270 = vld [vmem:[#allocation2 + $0x60] sm:$0xff]
  %v271 = vld [vmem:[#allocation2 + $0x68] sm:$0xff]
  %v272 = vld [vmem:[#allocation2 + $0x70] sm:$0xff]
  %v273 = vld [vmem:[#allocation2 + $0x78] sm:$0xff]
  %v274 = vld [vmem:[#allocation2 + $0x80] sm:$0xff]
  %v275 = vld [vmem:[#allocation2 + $0x88] sm:$0xff]
  %v276 = vld [vmem:[#allocation2 + $0x90] sm:$0xff]
  %v277 = vld [vmem:[#allocation2 + $0x98] sm:$0xff]
  %v278 = vld [vmem:[#allocation2 + $0xa0] sm:$0xff]
  %v279 = vld [vmem:[#allocation2 + $0xa8] sm:$0xff]
  %v280 = vld [vmem:[#allocation2 + $0xb0] sm:$0xff]
  %v281 = vld [vmem:[#allocation2 + $0xb8] sm:$0xff]
  %v282 = vld [vmem:[#allocation2 + $0xc0] sm:$0xff]
  %v283 = vld [vmem:[#allocation2 + $0xc8] sm:$0xff]
  %v284 = vld [vmem:[#allocation2 + $0xd0] sm:$0xff]
  %v285 = vld [vmem:[#allocation2 + $0xd8] sm:$0xff]
  %v286 = vld [vmem:[#allocation2 + $0xe0] sm:$0xff]
  %v287 = vld [vmem:[#allocation2 + $0xe8] sm:$0xff]
  %v288 = vld [vmem:[#allocation2 + $0xf0] sm:$0xff]
  %v289 = vld [vmem:[#allocation2 + $0xf8] sm:$0xff]
  %v322 = vunpack.c.l.b16 %v226
  %v323 = vunpack.c.l.b16 %v227
  %v324 = vunpack.c.l.b16 %v228
  %v325 = vunpack.c.l.b16 %v229
  %v326 = vunpack.c.l.b16 %v230
  %v327 = vunpack.c.l.b16 %v231
  %v328 = vunpack.c.l.b16 %v232
  %v329 = vunpack.c.l.b16 %v233
  %v330 = vunpack.c.l.b16 %v234
  %v331 = vunpack.c.l.b16 %v235
  %v332 = vunpack.c.l.b16 %v236
  %v333 = vunpack.c.l.b16 %v237
  %v334 = vunpack.c.l.b16 %v238
  %v335 = vunpack.c.l.b16 %v239
  %v336 = vunpack.c.l.b16 %v240
  %v337 = vunpack.c.l.b16 %v241
  %v338 = vunpack.c.l.b16 %v242
  %v339 = vunpack.c.l.b16 %v243
  %v340 = vunpack.c.l.b16 %v244
  %v341 = vunpack.c.l.b16 %v245
  %v342 = vunpack.c.l.b16 %v246
  %v343 = vunpack.c.l.b16 %v247
  %v344 = vunpack.c.l.b16 %v248
  %v345 = vunpack.c.l.b16 %v249
  %v346 = vunpack.c.l.b16 %v250
  %v347 = vunpack.c.l.b16 %v251
  %v348 = vunpack.c.l.b16 %v252
  %v349 = vunpack.c.l.b16 %v253
  %v350 = vunpack.c.l.b16 %v254
  %v351 = vunpack.c.l.b16 %v255
  %v352 = vunpack.c.l.b16 %v256
  %v353 = vunpack.c.l.b16 %v257
  %v354 = vpack.c.b16 %v323, %v322
  %v355 = vpack.c.b16 %v325, %v324
  %v356 = vpack.c.b16 %v327, %v326
  %v357 = vpack.c.b16 %v329, %v328
  %v358 = vpack.c.b16 %v331, %v330
  %v359 = vpack.c.b16 %v333, %v332
  %v360 = vpack.c.b16 %v335, %v334
  %v361 = vpack.c.b16 %v337, %v336
  %v362 = vpack.c.b16 %v339, %v338
  %v363 = vpack.c.b16 %v341, %v340
  %v364 = vpack.c.b16 %v343, %v342
  %v365 = vpack.c.b16 %v345, %v344
  %v366 = vpack.c.b16 %v347, %v346
  %v367 = vpack.c.b16 %v349, %v348
  %v368 = vpack.c.b16 %v351, %v350
  %v369 = vpack.c.b16 %v353, %v352
  %386 = vmatpush.bf16.msra.mxu0 %v361
  %387 = vmatpush.bf16.msra.mxu0 %v360
  %388 = vmatpush.bf16.msra.mxu0 %v359
  %389 = vmatpush.bf16.msra.mxu0 %v358
  %390 = vmatpush.bf16.msra.mxu0 %v357
  %391 = vmatpush.bf16.msra.mxu0 %v356
  %392 = vmatpush.bf16.msra.mxu0 %v355
  %393 = vmatpush.bf16.msra.mxu0 %v354
  %394 = vmatmul.bf16.gmra.mxu0 %v194
  %v395 = vpop.f32.mrf.mxu0
  %v396 = vadd.f32 0.0, %v395
  %v397 = vpop.f32.mrf.mxu0
  %v398 = vadd.f32 0.0, %v397
  %399 = vmatmul.bf16.gmra.mxu0 %v196
  %v400 = vpop.f32.mrf.mxu0
  %v401 = vadd.f32 0.0, %v400
  %v402 = vpop.f32.mrf.mxu0
  %v403 = vadd.f32 0.0, %v402
  %404 = vmatmul.bf16.gmra.mxu0 %v198
  %v405 = vpop.f32.mrf.mxu0
  %v406 = vadd.f32 0.0, %v405
  %v407 = vpop.f32.mrf.mxu0
  %v408 = vadd.f32 0.0, %v407
  %409 = vmatmul.bf16.gmra.mxu0 %v200
  %v410 = vpop.f32.mrf.mxu0
  %v411 = vadd.f32 0.0, %v410
  %v412 = vpop.f32.mrf.mxu0
  %v413 = vadd.f32 0.0, %v412
  %414 = vmatmul.bf16.gmra.mxu0 %v202
  %v415 = vpop.f32.mrf.mxu0
  %v416 = vadd.f32 0.0, %v415
  %v417 = vpop.f32.mrf.mxu0
  %v418 = vadd.f32 0.0, %v417
  %419 = vmatmul.bf16.gmra.mxu0 %v204
  %v420 = vpop.f32.mrf.mxu0
  %v421 = vadd.f32 0.0, %v420
  %v422 = vpop.f32.mrf.mxu0
  %v423 = vadd.f32 0.0, %v422
  %424 = vmatmul.bf16.gmra.mxu0 %v206
  %v425 = vpop.f32.mrf.mxu0
  %v426 = vadd.f32 0.0, %v425
  %v427 = vpop.f32.mrf.mxu0
  %v428 = vadd.f32 0.0, %v427
  %429 = vmatmul.bf16.gmra.mxu0 %v208
  %v430 = vpop.f32.mrf.mxu0
  %v431 = vadd.f32 0.0, %v430
  %v432 = vpop.f32.mrf.mxu0
  %v433 = vadd.f32 0.0, %v432
  %434 = vmatmul.bf16.gmra.mxu0 %v210
  %v435 = vpop.f32.mrf.mxu0
  %v436 = vadd.f32 0.0, %v435
  %v437 = vpop.f32.mrf.mxu0
  %v438 = vadd.f32 0.0, %v437
  %439 = vmatmul.bf16.gmra.mxu0 %v212
  %v440 = vpop.f32.mrf.mxu0
  %v441 = vadd.f32 0.0, %v440
  %v442 = vpop.f32.mrf.mxu0
  %v443 = vadd.f32 0.0, %v442
  %444 = vmatmul.bf16.gmra.mxu0 %v214
  %v445 = vpop.f32.mrf.mxu0
  %v446 = vadd.f32 0.0, %v445
  %v447 = vpop.f32.mrf.mxu0
  %v448 = vadd.f32 0.0, %v447
  %449 = vmatmul.bf16.gmra.mxu0 %v216
  %v450 = vpop.f32.mrf.mxu0
  %v451 = vadd.f32 0.0, %v450
  %v452 = vpop.f32.mrf.mxu0
  %v453 = vadd.f32 0.0, %v452
  %454 = vmatmul.bf16.gmra.mxu0 %v218
  %v455 = vpop.f32.mrf.mxu0
  %v456 = vadd.f32 0.0, %v455
  %v457 = vpop.f32.mrf.mxu0
  %v458 = vadd.f32 0.0, %v457
  %459 = vmatmul.bf16.gmra.mxu0 %v220
  %v460 = vpop.f32.mrf.mxu0
  %v461 = vadd.f32 0.0, %v460
  %v462 = vpop.f32.mrf.mxu0
  %v463 = vadd.f32 0.0, %v462
  %464 = vmatmul.bf16.gmra.mxu0 %v222
  %v465 = vpop.f32.mrf.mxu0
  %v466 = vadd.f32 0.0, %v465
  %v467 = vpop.f32.mrf.mxu0
  %v468 = vadd.f32 0.0, %v467
  %469 = vmatmul.bf16.gmra.mxu0 %v224
  %v470 = vpop.f32.mrf.mxu0
  %v471 = vadd.f32 0.0, %v470
  %v472 = vpop.f32.mrf.mxu0
  %v473 = vadd.f32 0.0, %v472
  %474 = vdwg.mxu0
  %475 = vmatpush.bf16.msra.mxu0 %v369
  %476 = vmatpush.bf16.msra.mxu0 %v368
  %477 = vmatpush.bf16.msra.mxu0 %v367
  %478 = vmatpush.bf16.msra.mxu0 %v366
  %479 = vmatpush.bf16.msra.mxu0 %v365
  %480 = vmatpush.bf16.msra.mxu0 %v364
  %481 = vmatpush.bf16.msra.mxu0 %v363
  %482 = vmatpush.bf16.msra.mxu0 %v362
  %483 = vmatmul.bf16.gmra.mxu0 %v195
  %v484 = vpop.f32.mrf.mxu0
  %v485 = vadd.f32 %v396, %v484
  %v486 = vpop.f32.mrf.mxu0
  %v487 = vadd.f32 %v398, %v486
  %488 = vmatmul.bf16.gmra.mxu0 %v197
  %v489 = vpop.f32.mrf.mxu0
  %v490 = vadd.f32 %v401, %v489
  %v491 = vpop.f32.mrf.mxu0
  %v492 = vadd.f32 %v403, %v491
  %493 = vmatmul.bf16.gmra.mxu0 %v199
  %v494 = vpop.f32.mrf.mxu0
  %v495 = vadd.f32 %v406, %v494
  %v496 = vpop.f32.mrf.mxu0
  %v497 = vadd.f32 %v408, %v496
  %498 = vmatmul.bf16.gmra.mxu0 %v201
  %v499 = vpop.f32.mrf.mxu0
  %v500 = vadd.f32 %v411, %v499
  %v501 = vpop.f32.mrf.mxu0
  %v502 = vadd.f32 %v413, %v501
  %503 = vmatmul.bf16.gmra.mxu0 %v203
  %v504 = vpop.f32.mrf.mxu0
  %v505 = vadd.f32 %v416, %v504
  %v506 = vpop.f32.mrf.mxu0
  %v507 = vadd.f32 %v418, %v506
  %508 = vmatmul.bf16.gmra.mxu0 %v205
  %v509 = vpop.f32.mrf.mxu0
  %v510 = vadd.f32 %v421, %v509
  %v511 = vpop.f32.mrf.mxu0
  %v512 = vadd.f32 %v423, %v511
  %513 = vmatmul.bf16.gmra.mxu0 %v207
  %v514 = vpop.f32.mrf.mxu0
  %v515 = vadd.f32 %v426, %v514
  %v516 = vpop.f32.mrf.mxu0
  %v517 = vadd.f32 %v428, %v516
  %518 = vmatmul.bf16.gmra.mxu0 %v209
  %v519 = vpop.f32.mrf.mxu0
  %v520 = vadd.f32 %v431, %v519
  %v521 = vpop.f32.mrf.mxu0
  %v522 = vadd.f32 %v433, %v521
  %523 = vmatmul.bf16.gmra.mxu0 %v211
  %v524 = vpop.f32.mrf.mxu0
  %v525 = vadd.f32 %v436, %v524
  %v526 = vpop.f32.mrf.mxu0
  %v527 = vadd.f32 %v438, %v526
  %528 = vmatmul.bf16.gmra.mxu0 %v213
  %v529 = vpop.f32.mrf.mxu0
  %v530 = vadd.f32 %v441, %v529
  %v531 = vpop.f32.mrf.mxu0
  %v532 = vadd.f32 %v443, %v531
  %533 = vmatmul.bf16.gmra.mxu0 %v215
  %v534 = vpop.f32.mrf.mxu0
  %v535 = vadd.f32 %v446, %v534
  %v536 = vpop.f32.mrf.mxu0
  %v537 = vadd.f32 %v448, %v536
  %538 = vmatmul.bf16.gmra.mxu0 %v217
  %v539 = vpop.f32.mrf.mxu0
  %v540 = vadd.f32 %v451, %v539
  %v541 = vpop.f32.mrf.mxu0
  %v542 = vadd.f32 %v453, %v541
  %543 = vmatmul.bf16.gmra.mxu0 %v219
  %v544 = vpop.f32.mrf.mxu0
  %v545 = vadd.f32 %v456, %v544
  %v546 = vpop.f32.mrf.mxu0
  %v547 = vadd.f32 %v458, %v546
  %548 = vmatmul.bf16.gmra.mxu0 %v221
  %v549 = vpop.f32.mrf.mxu0
  %v550 = vadd.f32 %v461, %v549
  %v551 = vpop.f32.mrf.mxu0
  %v552 = vadd.f32 %v463, %v551
  %553 = vmatmul.bf16.gmra.mxu0 %v223
  %v554 = vpop.f32.mrf.mxu0
  %v555 = vadd.f32 %v466, %v554
  %v556 = vpop.f32.mrf.mxu0
  %v557 = vadd.f32 %v468, %v556
  %558 = vmatmul.bf16.gmra.mxu0 %v225
  %v559 = vpop.f32.mrf.mxu0
  %v560 = vadd.f32 %v471, %v559
  %v561 = vpop.f32.mrf.mxu0
  %v562 = vadd.f32 %v473, %v561
  %563 = vdwg.mxu0
  %v564 = vadd.f32 %v258, %v485
  %v565 = vadd.f32 %v259, %v487
  %v566 = vadd.f32 %v260, %v490
  %v567 = vadd.f32 %v261, %v492
  %v568 = vadd.f32 %v262, %v495
  %v569 = vadd.f32 %v263, %v497
  %v570 = vadd.f32 %v264, %v500
  %v571 = vadd.f32 %v265, %v502
  %v572 = vadd.f32 %v266, %v505
  %v573 = vadd.f32 %v267, %v507
  %v574 = vadd.f32 %v268, %v510
  %v575 = vadd.f32 %v269, %v512
  %v576 = vadd.f32 %v270, %v515
  %v577 = vadd.f32 %v271, %v517
  %v578 = vadd.f32 %v272, %v520
  %v579 = vadd.f32 %v273, %v522
  %v580 = vadd.f32 %v274, %v525
  %v581 = vadd.f32 %v275, %v527
  %v582 = vadd.f32 %v276, %v530
  %v583 = vadd.f32 %v277, %v532
  %v584 = vadd.f32 %v278, %v535
  %v585 = vadd.f32 %v279, %v537
  %v586 = vadd.f32 %v280, %v540
  %v587 = vadd.f32 %v281, %v542
  %v588 = vadd.f32 %v282, %v545
  %v589 = vadd.f32 %v283, %v547
  %v590 = vadd.f32 %v284, %v550
  %v591 = vadd.f32 %v285, %v552
  %v592 = vadd.f32 %v286, %v555
  %v593 = vadd.f32 %v287, %v557
  %v594 = vadd.f32 %v288, %v560
  %v595 = vadd.f32 %v289, %v562
  %596 = vst [vmem:[#allocation2] sm:$0xff] %v564
  %597 = vst [vmem:[#allocation2 + $0x8] sm:$0xff] %v565
  %598 = vst [vmem:[#allocation2 + $0x10] sm:$0xff] %v566
  %599 = vst [vmem:[#allocation2 + $0x18] sm:$0xff] %v567
  %600 = vst [vmem:[#allocation2 + $0x20] sm:$0xff] %v568
  %601 = vst [vmem:[#allocation2 + $0x28] sm:$0xff] %v569
  %602 = vst [vmem:[#allocation2 + $0x30] sm:$0xff] %v570
  %603 = vst [vmem:[#allocation2 + $0x38] sm:$0xff] %v571
  %604 = vst [vmem:[#allocation2 + $0x40] sm:$0xff] %v572
  %605 = vst [vmem:[#allocation2 + $0x48] sm:$0xff] %v573
  %606 = vst [vmem:[#allocation2 + $0x50] sm:$0xff] %v574
  %607 = vst [vmem:[#allocation2 + $0x58] sm:$0xff] %v575
  %608 = vst [vmem:[#allocation2 + $0x60] sm:$0xff] %v576
  %609 = vst [vmem:[#allocation2 + $0x68] sm:$0xff] %v577
  %610 = vst [vmem:[#allocation2 + $0x70] sm:$0xff] %v578
  %611 = vst [vmem:[#allocation2 + $0x78] sm:$0xff] %v579
  %612 = vst [vmem:[#allocation2 + $0x80] sm:$0xff] %v580
  %613 = vst [vmem:[#allocation2 + $0x88] sm:$0xff] %v581
  %614 = vst [vmem:[#allocation2 + $0x90] sm:$0xff] %v582
  %615 = vst [vmem:[#allocation2 + $0x98] sm:$0xff] %v583
  %616 = vst [vmem:[#allocation2 + $0xa0] sm:$0xff] %v584
  %617 = vst [vmem:[#allocation2 + $0xa8] sm:$0xff] %v585
  %618 = vst [vmem:[#allocation2 + $0xb0] sm:$0xff] %v586
  %619 = vst [vmem:[#allocation2 + $0xb8] sm:$0xff] %v587
  %620 = vst [vmem:[#allocation2 + $0xc0] sm:$0xff] %v588
  %621 = vst [vmem:[#allocation2 + $0xc8] sm:$0xff] %v589
  %622 = vst [vmem:[#allocation2 + $0xd0] sm:$0xff] %v590
  %623 = vst [vmem:[#allocation2 + $0xd8] sm:$0xff] %v591
  %624 = vst [vmem:[#allocation2 + $0xe0] sm:$0xff] %v592
  %625 = vst [vmem:[#allocation2 + $0xe8] sm:$0xff] %v593
  %626 = vst [vmem:[#allocation2 + $0xf0] sm:$0xff] %v594
  %627 = vst [vmem:[#allocation2 + $0xf8] sm:$0xff] %v595
  // Predicated region
  $region18: #{qgcn_forward.16} parent=0 // pred_check
    %p628 = pneg %p14
  $region19: #{qgcn_forward.16} parent=0 // pred_check_branch
    %630 = sbr.rel (%p628) target = $region21
  $region20: #{qgcn_forward.16} parent=0 // pred_region
    %v631 = vld [vmem:[#allocation2] sm:$0xff]
    %v632 = vld [vmem:[#allocation2 + $0x8] sm:$0xff]
    %v633 = vld [vmem:[#allocation2 + $0x10] sm:$0xff]
    %v634 = vld [vmem:[#allocation2 + $0x18] sm:$0xff]
    %v635 = vld [vmem:[#allocation2 + $0x20] sm:$0xff]
    %v636 = vld [vmem:[#allocation2 + $0x28] sm:$0xff]
    %v637 = vld [vmem:[#allocation2 + $0x30] sm:$0xff]
    %v638 = vld [vmem:[#allocation2 + $0x38] sm:$0xff]
    %v639 = vld [vmem:[#allocation2 + $0x40] sm:$0xff]
    %v640 = vld [vmem:[#allocation2 + $0x48] sm:$0xff]
    %v641 = vld [vmem:[#allocation2 + $0x50] sm:$0xff]
    %v642 = vld [vmem:[#allocation2 + $0x58] sm:$0xff]
    %v643 = vld [vmem:[#allocation2 + $0x60] sm:$0xff]
    %v644 = vld [vmem:[#allocation2 + $0x68] sm:$0xff]
    %v645 = vld [vmem:[#allocation2 + $0x70] sm:$0xff]
    %v646 = vld [vmem:[#allocation2 + $0x78] sm:$0xff]
    %v647 = vld [vmem:[#allocation2 + $0x80] sm:$0xff]
    %v648 = vld [vmem:[#allocation2 + $0x88] sm:$0xff]
    %v649 = vld [vmem:[#allocation2 + $0x90] sm:$0xff]
    %v650 = vld [vmem:[#allocation2 + $0x98] sm:$0xff]
    %v651 = vld [vmem:[#allocation2 + $0xa0] sm:$0xff]
    %v652 = vld [vmem:[#allocation2 + $0xa8] sm:$0xff]
    %v653 = vld [vmem:[#allocation2 + $0xb0] sm:$0xff]
    %v654 = vld [vmem:[#allocation2 + $0xb8] sm:$0xff]
    %v655 = vld [vmem:[#allocation2 + $0xc0] sm:$0xff]
    %v656 = vld [vmem:[#allocation2 + $0xc8] sm:$0xff]
    %v657 = vld [vmem:[#allocation2 + $0xd0] sm:$0xff]
    %v658 = vld [vmem:[#allocation2 + $0xd8] sm:$0xff]
    %v659 = vld [vmem:[#allocation2 + $0xe0] sm:$0xff]
    %v660 = vld [vmem:[#allocation2 + $0xe8] sm:$0xff]
    %v661 = vld [vmem:[#allocation2 + $0xf0] sm:$0xff]
    %v662 = vld [vmem:[#allocation2 + $0xf8] sm:$0xff]
    %v663 = vld [vmem:[%s2] sm:$0xff]
    %v664 = vld [vmem:[%s2 + $0x8] sm:$0xff]
    %v665 = vld [vmem:[%s2 + $0x10] sm:$0xff]
    %v666 = vld [vmem:[%s2 + $0x18] sm:$0xff]
    %v667 = vld [vmem:[%s2 + $0x20] sm:$0xff]
    %v668 = vld [vmem:[%s2 + $0x28] sm:$0xff]
    %v669 = vld [vmem:[%s2 + $0x30] sm:$0xff]
    %v670 = vld [vmem:[%s2 + $0x38] sm:$0xff]
    %v671 = vld [vmem:[%s2 + $0x40] sm:$0xff]
    %v672 = vld [vmem:[%s2 + $0x48] sm:$0xff]
    %v673 = vld [vmem:[%s2 + $0x50] sm:$0xff]
    %v674 = vld [vmem:[%s2 + $0x58] sm:$0xff]
    %v675 = vld [vmem:[%s2 + $0x60] sm:$0xff]
    %v676 = vld [vmem:[%s2 + $0x68] sm:$0xff]
    %v677 = vld [vmem:[%s2 + $0x70] sm:$0xff]
    %v678 = vld [vmem:[%s2 + $0x78] sm:$0xff]
    %v679 = vld [vmem:[%s2 + $0x80] sm:$0xff]
    %v680 = vld [vmem:[%s2 + $0x88] sm:$0xff]
    %v681 = vld [vmem:[%s2 + $0x90] sm:$0xff]
    %v682 = vld [vmem:[%s2 + $0x98] sm:$0xff]
    %v683 = vld [vmem:[%s2 + $0xa0] sm:$0xff]
    %v684 = vld [vmem:[%s2 + $0xa8] sm:$0xff]
    %v685 = vld [vmem:[%s2 + $0xb0] sm:$0xff]
    %v686 = vld [vmem:[%s2 + $0xb8] sm:$0xff]
    %v687 = vld [vmem:[%s2 + $0xc0] sm:$0xff]
    %v688 = vld [vmem:[%s2 + $0xc8] sm:$0xff]
    %v689 = vld [vmem:[%s2 + $0xd0] sm:$0xff]
    %v690 = vld [vmem:[%s2 + $0xd8] sm:$0xff]
    %v691 = vld [vmem:[%s2 + $0xe0] sm:$0xff]
    %v692 = vld [vmem:[%s2 + $0xe8] sm:$0xff]
    %v693 = vld [vmem:[%s2 + $0xf0] sm:$0xff]
    %v694 = vld [vmem:[%s2 + $0xf8] sm:$0xff]
    %696 = vset.pattern.permute.xlu0 0
    %697 = vperm.xlu0 %696, %v663
    %v698 = vpop.permute.xlu0 %697
    %701 = vset.pattern.permute.xlu0 0
    %702 = vperm.xlu0 %701, %v664
    %v703 = vpop.permute.xlu0 %702
    %706 = vset.pattern.permute.xlu0 0
    %707 = vperm.xlu0 %706, %v665
    %v708 = vpop.permute.xlu0 %707
    %711 = vset.pattern.permute.xlu0 0
    %712 = vperm.xlu0 %711, %v666
    %v713 = vpop.permute.xlu0 %712
    %716 = vset.pattern.permute.xlu0 0
    %717 = vperm.xlu0 %716, %v667
    %v718 = vpop.permute.xlu0 %717
    %721 = vset.pattern.permute.xlu0 0
    %722 = vperm.xlu0 %721, %v668
    %v723 = vpop.permute.xlu0 %722
    %726 = vset.pattern.permute.xlu0 0
    %727 = vperm.xlu0 %726, %v669
    %v728 = vpop.permute.xlu0 %727
    %731 = vset.pattern.permute.xlu0 0
    %732 = vperm.xlu0 %731, %v670
    %v733 = vpop.permute.xlu0 %732
    %736 = vset.pattern.permute.xlu0 0
    %737 = vperm.xlu0 %736, %v671
    %v738 = vpop.permute.xlu0 %737
    %741 = vset.pattern.permute.xlu0 0
    %742 = vperm.xlu0 %741, %v672
    %v743 = vpop.permute.xlu0 %742
    %746 = vset.pattern.permute.xlu0 0
    %747 = vperm.xlu0 %746, %v673
    %v748 = vpop.permute.xlu0 %747
    %751 = vset.pattern.permute.xlu0 0
    %752 = vperm.xlu0 %751, %v674
    %v753 = vpop.permute.xlu0 %752
    %756 = vset.pattern.permute.xlu0 0
    %757 = vperm.xlu0 %756, %v675
    %v758 = vpop.permute.xlu0 %757
    %761 = vset.pattern.permute.xlu0 0
    %762 = vperm.xlu0 %761, %v676
    %v763 = vpop.permute.xlu0 %762
    %766 = vset.pattern.permute.xlu0 0
    %767 = vperm.xlu0 %766, %v677
    %v768 = vpop.permute.xlu0 %767
    %771 = vset.pattern.permute.xlu0 0
    %772 = vperm.xlu0 %771, %v678
    %v773 = vpop.permute.xlu0 %772
    %776 = vset.pattern.permute.xlu0 0
    %777 = vperm.xlu0 %776, %v679
    %v778 = vpop.permute.xlu0 %777
    %781 = vset.pattern.permute.xlu0 0
    %782 = vperm.xlu0 %781, %v680
    %v783 = vpop.permute.xlu0 %782
    %786 = vset.pattern.permute.xlu0 0
    %787 = vperm.xlu0 %786, %v681
    %v788 = vpop.permute.xlu0 %787
    %791 = vset.pattern.permute.xlu0 0
    %792 = vperm.xlu0 %791, %v682
    %v793 = vpop.permute.xlu0 %792
    %796 = vset.pattern.permute.xlu0 0
    %797 = vperm.xlu0 %796, %v683
    %v798 = vpop.permute.xlu0 %797
    %801 = vset.pattern.permute.xlu0 0
    %802 = vperm.xlu0 %801, %v684
    %v803 = vpop.permute.xlu0 %802
    %806 = vset.pattern.permute.xlu0 0
    %807 = vperm.xlu0 %806, %v685
    %v808 = vpop.permute.xlu0 %807
    %811 = vset.pattern.permute.xlu0 0
    %812 = vperm.xlu0 %811, %v686
    %v813 = vpop.permute.xlu0 %812
    %816 = vset.pattern.permute.xlu0 0
    %817 = vperm.xlu0 %816, %v687
    %v818 = vpop.permute.xlu0 %817
    %821 = vset.pattern.permute.xlu0 0
    %822 = vperm.xlu0 %821, %v688
    %v823 = vpop.permute.xlu0 %822
    %826 = vset.pattern.permute.xlu0 0
    %827 = vperm.xlu0 %826, %v689
    %v828 = vpop.permute.xlu0 %827
    %831 = vset.pattern.permute.xlu0 0
    %832 = vperm.xlu0 %831, %v690
    %v833 = vpop.permute.xlu0 %832
    %836 = vset.pattern.permute.xlu0 0
    %837 = vperm.xlu0 %836, %v691
    %v838 = vpop.permute.xlu0 %837
    %841 = vset.pattern.permute.xlu0 0
    %842 = vperm.xlu0 %841, %v692
    %v843 = vpop.permute.xlu0 %842
    %846 = vset.pattern.permute.xlu0 0
    %847 = vperm.xlu0 %846, %v693
    %v848 = vpop.permute.xlu0 %847
    %851 = vset.pattern.permute.xlu0 0
    %852 = vperm.xlu0 %851, %v694
    %v853 = vpop.permute.xlu0 %852
    %v855 = vmul.f32 %v631, %v698
    %v856 = vmul.f32 %v632, %v703
    %v857 = vmul.f32 %v633, %v708
    %v858 = vmul.f32 %v634, %v713
    %v859 = vmul.f32 %v635, %v718
    %v860 = vmul.f32 %v636, %v723
    %v861 = vmul.f32 %v637, %v728
    %v862 = vmul.f32 %v638, %v733
    %v863 = vmul.f32 %v639, %v738
    %v864 = vmul.f32 %v640, %v743
    %v865 = vmul.f32 %v641, %v748
    %v866 = vmul.f32 %v642, %v753
    %v867 = vmul.f32 %v643, %v758
    %v868 = vmul.f32 %v644, %v763
    %v869 = vmul.f32 %v645, %v768
    %v870 = vmul.f32 %v646, %v773
    %v871 = vmul.f32 %v647, %v778
    %v872 = vmul.f32 %v648, %v783
    %v873 = vmul.f32 %v649, %v788
    %v874 = vmul.f32 %v650, %v793
    %v875 = vmul.f32 %v651, %v798
    %v876 = vmul.f32 %v652, %v803
    %v877 = vmul.f32 %v653, %v808
    %v878 = vmul.f32 %v654, %v813
    %v879 = vmul.f32 %v655, %v818
    %v880 = vmul.f32 %v656, %v823
    %v881 = vmul.f32 %v657, %v828
    %v882 = vmul.f32 %v658, %v833
    %v883 = vmul.f32 %v659, %v838
    %v884 = vmul.f32 %v660, %v843
    %v885 = vmul.f32 %v661, %v848
    %v886 = vmul.f32 %v662, %v853
    %887 = vst [vmem:[%s3] sm:$0xff] %v855
    %888 = vst [vmem:[%s3 + $0x8] sm:$0xff] %v856
    %889 = vst [vmem:[%s3 + $0x10] sm:$0xff] %v857
    %890 = vst [vmem:[%s3 + $0x18] sm:$0xff] %v858
    %891 = vst [vmem:[%s3 + $0x20] sm:$0xff] %v859
    %892 = vst [vmem:[%s3 + $0x28] sm:$0xff] %v860
    %893 = vst [vmem:[%s3 + $0x30] sm:$0xff] %v861
    %894 = vst [vmem:[%s3 + $0x38] sm:$0xff] %v862
    %895 = vst [vmem:[%s3 + $0x40] sm:$0xff] %v863
    %896 = vst [vmem:[%s3 + $0x48] sm:$0xff] %v864
    %897 = vst [vmem:[%s3 + $0x50] sm:$0xff] %v865
    %898 = vst [vmem:[%s3 + $0x58] sm:$0xff] %v866
    %899 = vst [vmem:[%s3 + $0x60] sm:$0xff] %v867
    %900 = vst [vmem:[%s3 + $0x68] sm:$0xff] %v868
    %901 = vst [vmem:[%s3 + $0x70] sm:$0xff] %v869
    %902 = vst [vmem:[%s3 + $0x78] sm:$0xff] %v870
    %903 = vst [vmem:[%s3 + $0x80] sm:$0xff] %v871
    %904 = vst [vmem:[%s3 + $0x88] sm:$0xff] %v872
    %905 = vst [vmem:[%s3 + $0x90] sm:$0xff] %v873
    %906 = vst [vmem:[%s3 + $0x98] sm:$0xff] %v874
    %907 = vst [vmem:[%s3 + $0xa0] sm:$0xff] %v875
    %908 = vst [vmem:[%s3 + $0xa8] sm:$0xff] %v876
    %909 = vst [vmem:[%s3 + $0xb0] sm:$0xff] %v877
    %910 = vst [vmem:[%s3 + $0xb8] sm:$0xff] %v878
    %911 = vst [vmem:[%s3 + $0xc0] sm:$0xff] %v879
    %912 = vst [vmem:[%s3 + $0xc8] sm:$0xff] %v880
    %913 = vst [vmem:[%s3 + $0xd0] sm:$0xff] %v881
    %914 = vst [vmem:[%s3 + $0xd8] sm:$0xff] %v882
    %915 = vst [vmem:[%s3 + $0xe0] sm:$0xff] %v883
    %916 = vst [vmem:[%s3 + $0xe8] sm:$0xff] %v884
    %917 = vst [vmem:[%s3 + $0xf0] sm:$0xff] %v885
    %918 = vst [vmem:[%s3 + $0xf8] sm:$0xff] %v886
  $region21: #{qgcn_forward.16} parent=0 // pred_fallthru
    _
  // Predicated region
  $region22: #{qgcn_forward.16} parent=0 // pred_check
    _
  $region23: #{qgcn_forward.16} parent=0 // pred_check_branch
    %920 = sbr.rel (0) target = $region25
  $region24: #{qgcn_forward.16} parent=0 // pred_region
    _
  $region25: #{qgcn_forward.16} parent=0 // pred_fallthru
    _
  // Predicated region
  $region26: #{qgcn_forward.16} parent=0 // pred_check
    _
  $region27: #{qgcn_forward.16} parent=0 // pred_check_branch
    %922 = sbr.rel (0) target = $region29
  $region28: #{qgcn_forward.16} parent=0 // pred_region
    _
  $region29: #{qgcn_forward.16} parent=0 // pred_fallthru
    _

// kernel: qgcn_forward.17
$region0: #{qgcn_forward.17}
  #allocation0 [shape = 'u32[]', space=smem, size = 0x4, offset = 0x4, fixed_abs, tag = 'smem constant byte address 0x4 - core index']
  #allocation1 [shape = 'u32[72,128]{1,0:T(1,128)}', space=vmem, size = 0x9000, scoped, tag = 'internal scratch']
  %s0 = inlined_call_operand.vmem [shape: bf16[256,128], index: 0, kind: input, shape index: {}]
  %s1 = inlined_call_operand.vmem [shape: bf16[128,128], index: 1, kind: input, shape index: {}]
  %s2 = inlined_call_operand.vmem [shape: f32[1,128], index: 2, kind: input, shape index: {}]
  %s3 = inlined_call_operand.vmem [shape: f32[256,128], index: 3, kind: input, shape index: {}]
  %s4 = inlined_call_operand.vmem [shape: f32[256,128], index: 4, kind: output, shape index: {}]
  %s5 = sld [smem:[#allocation0]]
  $region26: #{qgcn_forward.17} parent=0
    _
  %s7 = ssub.s32 1, %s5
  %s8 = scalar_select 0, %s7, %s5
  // Predicated region
  $region2: #{qgcn_forward.17} parent=0 // pred_check
    _
  $region3: #{qgcn_forward.17} parent=0 // pred_check_branch
    %10 = sbr.rel (0) target = $region5
  $region4: #{qgcn_forward.17} parent=0 // pred_region
    _
  $region5: #{qgcn_forward.17} parent=0 // pred_fallthru
    _
  // Predicated region
  $region6: #{qgcn_forward.17} parent=0 // pred_check
    _
  $region7: #{qgcn_forward.17} parent=0 // pred_check_branch
    %12 = sbr.rel (0) target = $region9
  $region8: #{qgcn_forward.17} parent=0 // pred_region
    _
  $region9: #{qgcn_forward.17} parent=0 // pred_fallthru
    _
  // Predicated region
  $region10: #{qgcn_forward.17} parent=0 // pred_check
    _
  $region11: #{qgcn_forward.17} parent=0 // pred_check_branch
    %14 = sbr.rel (0) target = $region13
  $region12: #{qgcn_forward.17} parent=0 // pred_region
    _
  $region13: #{qgcn_forward.17} parent=0 // pred_fallthru
    _
  // Predicated region
  $region14: #{qgcn_forward.17} parent=0 // pred_check
    _
  $region15: #{qgcn_forward.17} parent=0 // pred_check_branch
    %16 = sbr.rel (0) target = $region17
  $region16: #{qgcn_forward.17} parent=0 // pred_region
    _
  $region17: #{qgcn_forward.17} parent=0 // pred_fallthru
    _
  %v17 = vld [vmem:[%s0] sm:$0xf]
  %v18 = vld [vmem:[%s0 + $0x4] sm:$0xf]
  %v19 = vld [vmem:[%s0 + $0x8] sm:$0xf]
  %v20 = vld [vmem:[%s0 + $0xc] sm:$0xf]
  %v21 = vld [vmem:[%s0 + $0x10] sm:$0xf]
  %v22 = vld [vmem:[%s0 + $0x14] sm:$0xf]
  %v23 = vld [vmem:[%s0 + $0x18] sm:$0xf]
  %v24 = vld [vmem:[%s0 + $0x1c] sm:$0xf]
  %v25 = vld [vmem:[%s0 + $0x20] sm:$0xf]
  %v26 = vld [vmem:[%s0 + $0x24] sm:$0xf]
  %v27 = vld [vmem:[%s0 + $0x28] sm:$0xf]
  %v28 = vld [vmem:[%s0 + $0x2c] sm:$0xf]
  %v29 = vld [vmem:[%s0 + $0x30] sm:$0xf]
  %v30 = vld [vmem:[%s0 + $0x34] sm:$0xf]
  %v31 = vld [vmem:[%s0 + $0x38] sm:$0xf]
  %v32 = vld [vmem:[%s0 + $0x3c] sm:$0xf]
  %v33 = vld [vmem:[%s0 + $0x40] sm:$0xf]
  %v34 = vld [vmem:[%s0 + $0x44] sm:$0xf]
  %v35 = vld [vmem:[%s0 + $0x48] sm:$0xf]
  %v36 = vld [vmem:[%s0 + $0x4c] sm:$0xf]
  %v37 = vld [vmem:[%s0 + $0x50] sm:$0xf]
  %v38 = vld [vmem:[%s0 + $0x54] sm:$0xf]
  %v39 = vld [vmem:[%s0 + $0x58] sm:$0xf]
  %v40 = vld [vmem:[%s0 + $0x5c] sm:$0xf]
  %v41 = vld [vmem:[%s0 + $0x60] sm:$0xf]
  %v42 = vld [vmem:[%s0 + $0x64] sm:$0xf]
  %v43 = vld [vmem:[%s0 + $0x68] sm:$0xf]
  %v44 = vld [vmem:[%s0 + $0x6c] sm:$0xf]
  %v45 = vld [vmem:[%s0 + $0x70] sm:$0xf]
  %v46 = vld [vmem:[%s0 + $0x74] sm:$0xf]
  %v47 = vld [vmem:[%s0 + $0x78] sm:$0xf]
  %v48 = vld [vmem:[%s0 + $0x7c] sm:$0xf]
  %v49 = vld [vmem:[%s1] sm:$0xf]
  %v50 = vld [vmem:[%s1 + $0x4] sm:$0xf]
  %v51 = vld [vmem:[%s1 + $0x8] sm:$0xf]
  %v52 = vld [vmem:[%s1 + $0xc] sm:$0xf]
  %v53 = vld [vmem:[%s1 + $0x10] sm:$0xf]
  %v54 = vld [vmem:[%s1 + $0x14] sm:$0xf]
  %v55 = vld [vmem:[%s1 + $0x18] sm:$0xf]
  %v56 = vld [vmem:[%s1 + $0x1c] sm:$0xf]
  %v57 = vld [vmem:[%s1 + $0x20] sm:$0xf]
  %v58 = vld [vmem:[%s1 + $0x24] sm:$0xf]
  %v59 = vld [vmem:[%s1 + $0x28] sm:$0xf]
  %v60 = vld [vmem:[%s1 + $0x2c] sm:$0xf]
  %v61 = vld [vmem:[%s1 + $0x30] sm:$0xf]
  %v62 = vld [vmem:[%s1 + $0x34] sm:$0xf]
  %v63 = vld [vmem:[%s1 + $0x38] sm:$0xf]
  %v64 = vld [vmem:[%s1 + $0x3c] sm:$0xf]
  %v65 = vld [vmem:[%s2] sm:$0x1]
  %v67 = vperm.slane %v65, 0
  %v101 = vunpack.c.l.b16 %v17
  %v102 = vunpack.c.l.b16 %v18
  %v103 = vunpack.c.l.b16 %v19
  %v104 = vunpack.c.l.b16 %v20
  %v105 = vunpack.c.l.b16 %v21
  %v106 = vunpack.c.l.b16 %v22
  %v107 = vunpack.c.l.b16 %v23
  %v108 = vunpack.c.l.b16 %v24
  %v109 = vunpack.c.l.b16 %v25
  %v110 = vunpack.c.l.b16 %v26
  %v111 = vunpack.c.l.b16 %v27
  %v112 = vunpack.c.l.b16 %v28
  %v113 = vunpack.c.l.b16 %v29
  %v114 = vunpack.c.l.b16 %v30
  %v115 = vunpack.c.l.b16 %v31
  %v116 = vunpack.c.l.b16 %v32
  %v117 = vunpack.c.l.b16 %v33
  %v118 = vunpack.c.l.b16 %v34
  %v119 = vunpack.c.l.b16 %v35
  %v120 = vunpack.c.l.b16 %v36
  %v121 = vunpack.c.l.b16 %v37
  %v122 = vunpack.c.l.b16 %v38
  %v123 = vunpack.c.l.b16 %v39
  %v124 = vunpack.c.l.b16 %v40
  %v125 = vunpack.c.l.b16 %v41
  %v126 = vunpack.c.l.b16 %v42
  %v127 = vunpack.c.l.b16 %v43
  %v128 = vunpack.c.l.b16 %v44
  %v129 = vunpack.c.l.b16 %v45
  %v130 = vunpack.c.l.b16 %v46
  %v131 = vunpack.c.l.b16 %v47
  %v132 = vunpack.c.l.b16 %v48
  %v133 = vpack.c.b16 %v102, %v101
  %v134 = vpack.c.b16 %v104, %v103
  %v135 = vpack.c.b16 %v106, %v105
  %v136 = vpack.c.b16 %v108, %v107
  %v137 = vpack.c.b16 %v110, %v109
  %v138 = vpack.c.b16 %v112, %v111
  %v139 = vpack.c.b16 %v114, %v113
  %v140 = vpack.c.b16 %v116, %v115
  %v141 = vpack.c.b16 %v118, %v117
  %v142 = vpack.c.b16 %v120, %v119
  %v143 = vpack.c.b16 %v122, %v121
  %v144 = vpack.c.b16 %v124, %v123
  %v145 = vpack.c.b16 %v126, %v125
  %v146 = vpack.c.b16 %v128, %v127
  %v147 = vpack.c.b16 %v130, %v129
  %v148 = vpack.c.b16 %v132, %v131
  %v181 = vunpack.c.l.b16 %v49
  %v182 = vunpack.c.l.b16 %v50
  %v183 = vunpack.c.l.b16 %v51
  %v184 = vunpack.c.l.b16 %v52
  %v185 = vunpack.c.l.b16 %v53
  %v186 = vunpack.c.l.b16 %v54
  %v187 = vunpack.c.l.b16 %v55
  %v188 = vunpack.c.l.b16 %v56
  %v189 = vunpack.c.l.b16 %v57
  %v190 = vunpack.c.l.b16 %v58
  %v191 = vunpack.c.l.b16 %v59
  %v192 = vunpack.c.l.b16 %v60
  %v193 = vunpack.c.l.b16 %v61
  %v194 = vunpack.c.l.b16 %v62
  %v195 = vunpack.c.l.b16 %v63
  %v196 = vunpack.c.l.b16 %v64
  %v197 = vpack.c.b16 %v182, %v181
  %v198 = vpack.c.b16 %v184, %v183
  %v199 = vpack.c.b16 %v186, %v185
  %v200 = vpack.c.b16 %v188, %v187
  %v201 = vpack.c.b16 %v190, %v189
  %v202 = vpack.c.b16 %v192, %v191
  %v203 = vpack.c.b16 %v194, %v193
  %v204 = vpack.c.b16 %v196, %v195
  %213 = vmatpush.bf16.msra.mxu0 %v204
  %214 = vmatpush.bf16.msra.mxu0 %v203
  %215 = vmatpush.bf16.msra.mxu0 %v202
  %216 = vmatpush.bf16.msra.mxu0 %v201
  %217 = vmatpush.bf16.msra.mxu0 %v200
  %218 = vmatpush.bf16.msra.mxu0 %v199
  %219 = vmatpush.bf16.msra.mxu0 %v198
  %220 = vmatpush.bf16.msra.mxu0 %v197
  %221 = vmatmul.bf16.gmra.mxu0 %v133
  %v222 = vpop.f32.mrf.mxu0
  %v223 = vadd.f32 %v67, %v222
  %v224 = vpop.f32.mrf.mxu0
  %v225 = vadd.f32 %v67, %v224
  %226 = vmatmul.bf16.gmra.mxu0 %v134
  %v227 = vpop.f32.mrf.mxu0
  %v228 = vadd.f32 %v67, %v227
  %v229 = vpop.f32.mrf.mxu0
  %v230 = vadd.f32 %v67, %v229
  %231 = vmatmul.bf16.gmra.mxu0 %v135
  %v232 = vpop.f32.mrf.mxu0
  %v233 = vadd.f32 %v67, %v232
  %v234 = vpop.f32.mrf.mxu0
  %v235 = vadd.f32 %v67, %v234
  %236 = vmatmul.bf16.gmra.mxu0 %v136
  %v237 = vpop.f32.mrf.mxu0
  %v238 = vadd.f32 %v67, %v237
  %v239 = vpop.f32.mrf.mxu0
  %v240 = vadd.f32 %v67, %v239
  %241 = vmatmul.bf16.gmra.mxu0 %v137
  %v242 = vpop.f32.mrf.mxu0
  %v243 = vadd.f32 %v67, %v242
  %v244 = vpop.f32.mrf.mxu0
  %v245 = vadd.f32 %v67, %v244
  %246 = vmatmul.bf16.gmra.mxu0 %v138
  %v247 = vpop.f32.mrf.mxu0
  %v248 = vadd.f32 %v67, %v247
  %v249 = vpop.f32.mrf.mxu0
  %v250 = vadd.f32 %v67, %v249
  %251 = vmatmul.bf16.gmra.mxu0 %v139
  %v252 = vpop.f32.mrf.mxu0
  %v253 = vadd.f32 %v67, %v252
  %v254 = vpop.f32.mrf.mxu0
  %v255 = vadd.f32 %v67, %v254
  %256 = vmatmul.bf16.gmra.mxu0 %v140
  %v257 = vpop.f32.mrf.mxu0
  %v258 = vadd.f32 %v67, %v257
  %v259 = vpop.f32.mrf.mxu0
  %v260 = vadd.f32 %v67, %v259
  %261 = vmatmul.bf16.gmra.mxu0 %v141
  %v262 = vpop.f32.mrf.mxu0
  %v263 = vadd.f32 %v67, %v262
  %v264 = vpop.f32.mrf.mxu0
  %v265 = vadd.f32 %v67, %v264
  %266 = vmatmul.bf16.gmra.mxu0 %v142
  %v267 = vpop.f32.mrf.mxu0
  %v268 = vadd.f32 %v67, %v267
  %v269 = vpop.f32.mrf.mxu0
  %v270 = vadd.f32 %v67, %v269
  %271 = vmatmul.bf16.gmra.mxu0 %v143
  %v272 = vpop.f32.mrf.mxu0
  %v273 = vadd.f32 %v67, %v272
  %v274 = vpop.f32.mrf.mxu0
  %v275 = vadd.f32 %v67, %v274
  %276 = vmatmul.bf16.gmra.mxu0 %v144
  %v277 = vpop.f32.mrf.mxu0
  %v278 = vadd.f32 %v67, %v277
  %v279 = vpop.f32.mrf.mxu0
  %v280 = vadd.f32 %v67, %v279
  %281 = vmatmul.bf16.gmra.mxu0 %v145
  %v282 = vpop.f32.mrf.mxu0
  %v283 = vadd.f32 %v67, %v282
  %v284 = vpop.f32.mrf.mxu0
  %v285 = vadd.f32 %v67, %v284
  %286 = vmatmul.bf16.gmra.mxu0 %v146
  %v287 = vpop.f32.mrf.mxu0
  %v288 = vadd.f32 %v67, %v287
  %v289 = vpop.f32.mrf.mxu0
  %v290 = vadd.f32 %v67, %v289
  %291 = vmatmul.bf16.gmra.mxu0 %v147
  %v292 = vpop.f32.mrf.mxu0
  %v293 = vadd.f32 %v67, %v292
  %v294 = vpop.f32.mrf.mxu0
  %v295 = vadd.f32 %v67, %v294
  %296 = vmatmul.bf16.gmra.mxu0 %v148
  %v297 = vpop.f32.mrf.mxu0
  %v298 = vadd.f32 %v67, %v297
  %v299 = vpop.f32.mrf.mxu0
  %v300 = vadd.f32 %v67, %v299
  %301 = vdwg.mxu0
  %v302 = vld [vmem:[%s3] sm:$0xff]
  %v303 = vld [vmem:[%s3 + $0x8] sm:$0xff]
  %v304 = vld [vmem:[%s3 + $0x10] sm:$0xff]
  %v305 = vld [vmem:[%s3 + $0x18] sm:$0xff]
  %v306 = vld [vmem:[%s3 + $0x20] sm:$0xff]
  %v307 = vld [vmem:[%s3 + $0x28] sm:$0xff]
  %v308 = vld [vmem:[%s3 + $0x30] sm:$0xff]
  %v309 = vld [vmem:[%s3 + $0x38] sm:$0xff]
  %v310 = vld [vmem:[%s3 + $0x40] sm:$0xff]
  %v311 = vld [vmem:[%s3 + $0x48] sm:$0xff]
  %v312 = vld [vmem:[%s3 + $0x50] sm:$0xff]
  %v313 = vld [vmem:[%s3 + $0x58] sm:$0xff]
  %v314 = vld [vmem:[%s3 + $0x60] sm:$0xff]
  %v315 = vld [vmem:[%s3 + $0x68] sm:$0xff]
  %v316 = vld [vmem:[%s3 + $0x70] sm:$0xff]
  %v317 = vld [vmem:[%s3 + $0x78] sm:$0xff]
  %v318 = vld [vmem:[%s3 + $0x80] sm:$0xff]
  %v319 = vld [vmem:[%s3 + $0x88] sm:$0xff]
  %v320 = vld [vmem:[%s3 + $0x90] sm:$0xff]
  %v321 = vld [vmem:[%s3 + $0x98] sm:$0xff]
  %v322 = vld [vmem:[%s3 + $0xa0] sm:$0xff]
  %v323 = vld [vmem:[%s3 + $0xa8] sm:$0xff]
  %v324 = vld [vmem:[%s3 + $0xb0] sm:$0xff]
  %v325 = vld [vmem:[%s3 + $0xb8] sm:$0xff]
  %v326 = vld [vmem:[%s3 + $0xc0] sm:$0xff]
  %v327 = vld [vmem:[%s3 + $0xc8] sm:$0xff]
  %v328 = vld [vmem:[%s3 + $0xd0] sm:$0xff]
  %v329 = vld [vmem:[%s3 + $0xd8] sm:$0xff]
  %v330 = vld [vmem:[%s3 + $0xe0] sm:$0xff]
  %v331 = vld [vmem:[%s3 + $0xe8] sm:$0xff]
  %v332 = vld [vmem:[%s3 + $0xf0] sm:$0xff]
  %v333 = vld [vmem:[%s3 + $0xf8] sm:$0xff]
  %v334 = vadd.f32 %v223, %v302
  %v335 = vadd.f32 %v225, %v303
  %v336 = vadd.f32 %v228, %v304
  %v337 = vadd.f32 %v230, %v305
  %v338 = vadd.f32 %v233, %v306
  %v339 = vadd.f32 %v235, %v307
  %v340 = vadd.f32 %v238, %v308
  %v341 = vadd.f32 %v240, %v309
  %v342 = vadd.f32 %v243, %v310
  %v343 = vadd.f32 %v245, %v311
  %v344 = vadd.f32 %v248, %v312
  %v345 = vadd.f32 %v250, %v313
  %v346 = vadd.f32 %v253, %v314
  %v347 = vadd.f32 %v255, %v315
  %v348 = vadd.f32 %v258, %v316
  %v349 = vadd.f32 %v260, %v317
  %v350 = vadd.f32 %v263, %v318
  %v351 = vadd.f32 %v265, %v319
  %v352 = vadd.f32 %v268, %v320
  %v353 = vadd.f32 %v270, %v321
  %v354 = vadd.f32 %v273, %v322
  %v355 = vadd.f32 %v275, %v323
  %v356 = vadd.f32 %v278, %v324
  %v357 = vadd.f32 %v280, %v325
  %v358 = vadd.f32 %v283, %v326
  %v359 = vadd.f32 %v285, %v327
  %v360 = vadd.f32 %v288, %v328
  %v361 = vadd.f32 %v290, %v329
  %v362 = vadd.f32 %v293, %v330
  %v363 = vadd.f32 %v295, %v331
  %v364 = vadd.f32 %v298, %v332
  %v365 = vadd.f32 %v300, %v333
  %366 = vst [vmem:[%s4] sm:$0xff] %v334
  %367 = vst [vmem:[%s4 + $0x8] sm:$0xff] %v335
  %368 = vst [vmem:[%s4 + $0x10] sm:$0xff] %v336
  %369 = vst [vmem:[%s4 + $0x18] sm:$0xff] %v337
  %370 = vst [vmem:[%s4 + $0x20] sm:$0xff] %v338
  %371 = vst [vmem:[%s4 + $0x28] sm:$0xff] %v339
  %372 = vst [vmem:[%s4 + $0x30] sm:$0xff] %v340
  %373 = vst [vmem:[%s4 + $0x38] sm:$0xff] %v341
  %374 = vst [vmem:[%s4 + $0x40] sm:$0xff] %v342
  %375 = vst [vmem:[%s4 + $0x48] sm:$0xff] %v343
  %376 = vst [vmem:[%s4 + $0x50] sm:$0xff] %v344
  %377 = vst [vmem:[%s4 + $0x58] sm:$0xff] %v345
  %378 = vst [vmem:[%s4 + $0x60] sm:$0xff] %v346
  %379 = vst [vmem:[%s4 + $0x68] sm:$0xff] %v347
  %380 = vst [vmem:[%s4 + $0x70] sm:$0xff] %v348
  %381 = vst [vmem:[%s4 + $0x78] sm:$0xff] %v349
  %382 = vst [vmem:[%s4 + $0x80] sm:$0xff] %v350
  %383 = vst [vmem:[%s4 + $0x88] sm:$0xff] %v351
  %384 = vst [vmem:[%s4 + $0x90] sm:$0xff] %v352
  %385 = vst [vmem:[%s4 + $0x98] sm:$0xff] %v353
  %386 = vst [vmem:[%s4 + $0xa0] sm:$0xff] %v354
  %387 = vst [vmem:[%s4 + $0xa8] sm:$0xff] %v355
  %388 = vst [vmem:[%s4 + $0xb0] sm:$0xff] %v356
  %389 = vst [vmem:[%s4 + $0xb8] sm:$0xff] %v357
  %390 = vst [vmem:[%s4 + $0xc0] sm:$0xff] %v358
  %391 = vst [vmem:[%s4 + $0xc8] sm:$0xff] %v359
  %392 = vst [vmem:[%s4 + $0xd0] sm:$0xff] %v360
  %393 = vst [vmem:[%s4 + $0xd8] sm:$0xff] %v361
  %394 = vst [vmem:[%s4 + $0xe0] sm:$0xff] %v362
  %395 = vst [vmem:[%s4 + $0xe8] sm:$0xff] %v363
  %396 = vst [vmem:[%s4 + $0xf0] sm:$0xff] %v364
  %397 = vst [vmem:[%s4 + $0xf8] sm:$0xff] %v365
  // Predicated region
  $region18: #{qgcn_forward.17} parent=0 // pred_check
    _
  $region19: #{qgcn_forward.17} parent=0 // pred_check_branch
    %399 = sbr.rel (0) target = $region21
  $region20: #{qgcn_forward.17} parent=0 // pred_region
    _
  $region21: #{qgcn_forward.17} parent=0 // pred_fallthru
    _
  // Predicated region
  $region22: #{qgcn_forward.17} parent=0 // pred_check
    _
  $region23: #{qgcn_forward.17} parent=0 // pred_check_branch
    %401 = sbr.rel (0) target = $region25
  $region24: #{qgcn_forward.17} parent=0 // pred_region
    _
  $region25: #{qgcn_forward.17} parent=0 // pred_fallthru
    _

</llo_original>
